<compile_context>
chip_gen: v6e
topology: v6e:2x2x1
jax: 0.10.0
libtpu: 0.0.40
codegen_flags: <defaults>
</compile_context>

<pallas_src>
import functools

import jax
import jax.numpy as jnp
from jax import lax
from jax.experimental import pallas as pl
from jax.experimental.pallas import tpu as pltpu

BN_EPS = 1e-5
VMEM_LIMIT_BYTES = 48 * 1024 * 1024  # fits v5e/v6e (128 MiB) and v7x (64 MiB) with headroom


def _cp(*semantics):
    return pltpu.CompilerParams(dimension_semantics=semantics,
                                vmem_limit_bytes=VMEM_LIMIT_BYTES)


def _row_tile(total, target):
    """Largest divisor of `total` that is <= target and sublane-friendly."""
    t = min(total, max(int(target), 1))
    for cand in range(t, 0, -1):
        if total % cand == 0 and (cand % 8 == 0 or cand == total):
            return cand
    return total


# ---------------- K1: 1x1 conv(s) (Cin -> P [, Cin -> 4P]) + BN partials ----------------
def _make_k1_kernel(downsampling):
    def kernel(x_ref, w1_ref, *rest):
        if downsampling:
            wd_ref, y1_ref, s1_ref, q1_ref, xd_ref, sd_ref, qd_ref = rest
        else:
            y1_ref, s1_ref, q1_ref = rest
        x = x_ref[...]                                                   # (TM, Cin) bf16
        y1 = jnp.dot(x, w1_ref[...], preferred_element_type=jnp.float32)
        y1_ref[...] = y1.astype(jnp.bfloat16)
        s1_ref[0] = jnp.sum(y1, axis=0, keepdims=True)
        q1_ref[0] = jnp.sum(y1 * y1, axis=0, keepdims=True)
        if downsampling:
            xd = jnp.dot(x, wd_ref[...], preferred_element_type=jnp.float32)
            xd_ref[...] = xd.astype(jnp.bfloat16)
            sd_ref[0] = jnp.sum(xd, axis=0, keepdims=True)
            qd_ref[0] = jnp.sum(xd * xd, axis=0, keepdims=True)
    return kernel


# ---------------- K2: 3x3 conv (stride 1, pad 1) per image + BN partials ----------------
def _make_k2_kernel(H, W, P):
    HW = H * W

    def kernel(y1p_ref, w2_ref, y2_ref, s2_ref, q2_ref):
        yp = y1p_ref[0]                                                  # (H+2, W+2, P) bf16
        acc = None
        for ki in range(3):
            for kj in range(3):
                patch = yp[ki:ki + H, kj:kj + W, :].reshape(HW, P)
                part = jnp.dot(patch, w2_ref[ki * 3 + kj],
                               preferred_element_type=jnp.float32)
                acc = part if acc is None else acc + part                # first tap inits acc
        y2_ref[0] = acc.astype(jnp.bfloat16)
        s2_ref[0] = jnp.sum(acc, axis=0, keepdims=True)
        q2_ref[0] = jnp.sum(acc * acc, axis=0, keepdims=True)
    return kernel


# ---------------- K3: BN2 affine + ReLU + 1x1 conv (P -> 4P) + BN3/SE partials ----------
def _k3_kernel(y2_ref, sc2_ref, sh2_ref, w3_ref, y3_ref, s3_ref, q3_ref):
    y2 = y2_ref[0].astype(jnp.float32)                                   # (THW, P)
    y2 = jnp.maximum(y2 * sc2_ref[...] + sh2_ref[...], 0.0)
    y3 = jnp.dot(y2.astype(jnp.bfloat16), w3_ref[...],
                 preferred_element_type=jnp.float32)                     # (THW, C4)
    y3_ref[0] = y3.astype(jnp.bfloat16)
    s3_ref[0] = jnp.sum(y3, axis=0, keepdims=True)
    q3_ref[0] = jnp.sum(y3 * y3, axis=0, keepdims=True)


# ---------------- K4: BN3 affine, SE gating, residual add, final ReLU -------------------
def _k4_kernel(y3_ref, res_ref, gate_ref, sc3_ref, sh3_ref, scd_ref, shd_ref, out_ref):
    y3 = y3_ref[0].astype(jnp.float32) * sc3_ref[...] + sh3_ref[...]     # BN3 affine
    gated = y3 * gate_ref[0]                                             # SE channel scaling
    res = res_ref[0].astype(jnp.float32) * scd_ref[...] + shd_ref[...]   # identity: *1 + 0
    out_ref[0] = jnp.maximum(gated + res, 0.0)


# ---------------- BN statistics finalization (tiny, wrapper-side) -----------------------
def _finalize_bn(sum_parts, sq_parts, count, gamma, beta):
    c = sum_parts.shape[-1]
    s = jnp.sum(sum_parts.reshape(-1, c), axis=0)
    q = jnp.sum(sq_parts.reshape(-1, c), axis=0)
    mean = s / count
    var = jnp.maximum(q / count - mean * mean, 0.0)
    scale = gamma.reshape(-1) * lax.rsqrt(var + BN_EPS)
    shift = beta.reshape(-1) - mean * scale
    return scale.reshape(1, -1), shift.reshape(1, -1)


def bottleneck_se(x_nchw, params, *, stride=1, downsampling=False, expansion=4,
                  row_tile=512):
    # TODO(synk): stride > 1 (strided 3x3 conv + strided downsample conv) not implemented.
    assert stride == 1
    N, Cin, H, W = x_nchw.shape
    P = params["w1"].shape[1]
    C4 = P * expansion
    HW = H * W
    M = N * HW
    if not downsampling:
        assert Cin == C4, "identity residual requires in_places == places * expansion"
    assert C4 // 16 >= 1, "SE squeeze dim must be >= 1"

    f32, bf16 = jnp.float32, jnp.bfloat16
    x_nhwc = jnp.transpose(x_nchw.astype(f32), (0, 2, 3, 1))
    x2 = x_nhwc.reshape(M, Cin).astype(bf16)

    tm = _row_tile(M, row_tile)
    thw = _row_tile(HW, row_tile)
    n_m = M // tm
    n_hw = HW // thw

    # ---- K1 -----------------------------------------------------------------------
    k1_in = [x2, params["w1"].astype(bf16)]
    k1_ispecs = [pl.BlockSpec((tm, Cin), lambda i: (i, 0)),
                 pl.BlockSpec((Cin, P), lambda i: (0, 0))]
    k1_oshape = [jax.ShapeDtypeStruct((M, P), bf16),
                 jax.ShapeDtypeStruct((n_m, 1, P), f32),
                 jax.ShapeDtypeStruct((n_m, 1, P), f32)]
    k1_ospecs = [pl.BlockSpec((tm, P), lambda i: (i, 0)),
                 pl.BlockSpec((1, 1, P), lambda i: (i, 0, 0)),
                 pl.BlockSpec((1, 1, P), lambda i: (i, 0, 0))]
    if downsampling:
        k1_in.append(params["wd"].astype(bf16))
        k1_ispecs.append(pl.BlockSpec((Cin, C4), lambda i: (0, 0)))
        k1_oshape += [jax.ShapeDtypeStruct((M, C4), bf16),
                      jax.ShapeDtypeStruct((n_m, 1, C4), f32),
                      jax.ShapeDtypeStruct((n_m, 1, C4), f32)]
        k1_ospecs += [pl.BlockSpec((tm, C4), lambda i: (i, 0)),
                      pl.BlockSpec((1, 1, C4), lambda i: (i, 0, 0)),
                      pl.BlockSpec((1, 1, C4), lambda i: (i, 0, 0))]

    k1_out = pl.pallas_call(
        _make_k1_kernel(downsampling),
        grid=(n_m,),
        out_shape=tuple(k1_oshape),
        in_specs=k1_ispecs,
        out_specs=tuple(k1_ospecs),
        compiler_params=_cp("parallel"),
    )(*k1_in)
    if downsampling:
        y1_raw, s1, q1, xd_raw, sd, qd = k1_out
    else:
        y1_raw, s1, q1 = k1_out

    # ---- glue: BN1 affine + ReLU fused with the 3x3 zero padding (single XLA pass) --
    sc1, sh1 = _finalize_bn(s1, q1, M, params["g1"], params["b1"])
    y1 = jnp.maximum(y1_raw.astype(f32) * sc1 + sh1, 0.0).astype(bf16)
    y1p = jnp.pad(y1.reshape(N, H, W, P), ((0, 0), (1, 1), (1, 1), (0, 0)))

    # ---- K2 -----------------------------------------------------------------------
    # TODO(synk): add an H-tiling grid axis with halo handling for very large H*W.
    y2_raw, s2p, q2p = pl.pallas_call(
        _make_k2_kernel(H, W, P),
        grid=(N,),
        out_shape=(jax.ShapeDtypeStruct((N, HW, P), bf16),
                   jax.ShapeDtypeStruct((N, 1, P), f32),
                   jax.ShapeDtypeStruct((N, 1, P), f32)),
        in_specs=[pl.BlockSpec((1, H + 2, W + 2, P), lambda n: (n, 0, 0, 0)),
                  pl.BlockSpec((9, P, P), lambda n: (0, 0, 0))],
        out_specs=(pl.BlockSpec((1, HW, P), lambda n: (n, 0, 0)),
                   pl.BlockSpec((1, 1, P), lambda n: (n, 0, 0)),
                   pl.BlockSpec((1, 1, P), lambda n: (n, 0, 0))),
        compiler_params=_cp("parallel"),
    )(y1p, params["w2"].astype(bf16))

    # ---- K3 -----------------------------------------------------------------------
    sc2, sh2 = _finalize_bn(s2p, q2p, M, params["g2"], params["b2"])
    y3_raw, s3p, q3p = pl.pallas_call(
        _k3_kernel,
        grid=(N, n_hw),
        out_shape=(jax.ShapeDtypeStruct((N, HW, C4), bf16),
                   jax.ShapeDtypeStruct((N * n_hw, 1, C4), f32),
                   jax.ShapeDtypeStruct((N * n_hw, 1, C4), f32)),
        in_specs=[pl.BlockSpec((1, thw, P), lambda n, t: (n, t, 0)),
                  pl.BlockSpec((1, P), lambda n, t: (0, 0)),
                  pl.BlockSpec((1, P), lambda n, t: (0, 0)),
                  pl.BlockSpec((P, C4), lambda n, t: (0, 0))],
        out_specs=(pl.BlockSpec((1, thw, C4), lambda n, t: (n, t, 0)),
                   pl.BlockSpec((1, 1, C4), lambda n, t: (n * n_hw + t, 0, 0)),
                   pl.BlockSpec((1, 1, C4), lambda n, t: (n * n_hw + t, 0, 0))),
        compiler_params=_cp("parallel", "parallel"),
    )(y2_raw, sc2, sh2, params["w3"].astype(bf16))

    # ---- glue: finalize BN3; SE squeeze-excite on the tiny (N, C4) pooled tensor ----
    sc3, sh3 = _finalize_bn(s3p, q3p, M, params["g3"], params["b3"])
    pooled_raw = jnp.sum(s3p.reshape(N, n_hw, C4), axis=1) / HW      # (N, C4), raw sums
    pooled = pooled_raw * sc3 + sh3                                   # BN3 commutes with mean
    se_h = jax.nn.relu(pooled @ params["sw1"] + params["sb1"])
    se_gate = jax.nn.sigmoid(se_h @ params["sw2"] + params["sb2"])    # (N, C4)
    se_gate = se_gate.reshape(N, 1, C4).astype(f32)

    # ---- residual branch ------------------------------------------------------------
    if downsampling:
        scd, shd = _finalize_bn(sd, qd, M, params["gd"], params["bd"])
        res = xd_raw.reshape(N, HW, C4)
    else:
        scd = jnp.ones((1, C4), f32)
        shd = jnp.zeros((1, C4), f32)
        res = x2.reshape(N, HW, Cin)

    # ---- K4 -----------------------------------------------------------------------
    out = pl.pallas_call(
        _k4_kernel,
        grid=(N, n_hw),
        out_shape=jax.ShapeDtypeStruct((N, HW, C4), f32),
        in_specs=[pl.BlockSpec((1, thw, C4), lambda n, t: (n, t, 0)),
                  pl.BlockSpec((1, thw, C4), lambda n, t: (n, t, 0)),
                  pl.BlockSpec((1, 1, C4), lambda n, t: (n, 0, 0)),
                  pl.BlockSpec((1, C4), lambda n, t: (0, 0)),
                  pl.BlockSpec((1, C4), lambda n, t: (0, 0)),
                  pl.BlockSpec((1, C4), lambda n, t: (0, 0)),
                  pl.BlockSpec((1, C4), lambda n, t: (0, 0))],
        out_specs=pl.BlockSpec((1, thw, C4), lambda n, t: (n, t, 0)),
        compiler_params=_cp("parallel", "parallel"),
    )(y3_raw, res, se_gate, sc3, sh3, scd, shd)

    return jnp.transpose(out.reshape(N, H, W, C4), (0, 3, 1, 2))       # NHWC -> NCHW


# ---------------- pure-JAX f32 reference for correctness check --------------------------
def bottleneck_se_reference(x_nchw, params, *, downsampling=False, expansion=4):
    x = jnp.transpose(x_nchw.astype(jnp.float32), (0, 2, 3, 1))
    P = params["w1"].shape[1]

    def bn(y, gamma, beta):
        mean = jnp.mean(y, axis=(0, 1, 2), keepdims=True)
        var = jnp.mean((y - mean) ** 2, axis=(0, 1, 2), keepdims=True)
        return (y - mean) * lax.rsqrt(var + BN_EPS) * gamma.reshape(1, 1, 1, -1) \
               + beta.reshape(1, 1, 1, -1)

    def conv1x1(y, w):
        return jnp.einsum("nhwc,co->nhwo", y, w, precision=lax.Precision.HIGHEST)

    y1 = jax.nn.relu(bn(conv1x1(x, params["w1"]), params["g1"], params["b1"]))
    w2_hwio = params["w2"].reshape(3, 3, P, P)
    y2 = lax.conv_general_dilated(y1, w2_hwio, (1, 1), "SAME",
                                  dimension_numbers=("NHWC", "HWIO", "NHWC"),
                                  precision=lax.Precision.HIGHEST)
    y2 = jax.nn.relu(bn(y2, params["g2"], params["b2"]))
    y3 = bn(conv1x1(y2, params["w3"]), params["g3"], params["b3"])

    pooled = jnp.mean(y3, axis=(1, 2))
    s1 = jax.nn.relu(jnp.dot(pooled, params["sw1"],
                             precision=lax.Precision.HIGHEST) + params["sb1"])
    s2 = jax.nn.sigmoid(jnp.dot(s1, params["sw2"],
                                precision=lax.Precision.HIGHEST) + params["sb2"])
    out = y3 * s2[:, None, None, :]

    if downsampling:
        residual = bn(conv1x1(x, params["wd"]), params["gd"], params["bd"])
    else:
        residual = x
    out = jax.nn.relu(out + residual)
    return jnp.transpose(out, (0, 3, 1, 2))


if __name__ == "__main__":
    def run_case(downsampling, in_places, places, expansion, N, H, W, key):
        C4 = places * expansion
        Cs = C4 // 16
        ks = jax.random.split(key, 20)
        rn = lambda k, shape, scale: scale * jax.random.normal(k, shape, dtype=jnp.float32)
        params = {
            # conv weights stored in GEMM form: (Cin, Cout); 3x3 as (9, Cin, Cout)
            "w1": rn(ks[0], (in_places, places), 1.0 / jnp.sqrt(in_places)),
            "g1": 1.0 + rn(ks[1], (1, places), 0.1),
            "b1": rn(ks[2], (1, places), 0.1),
            "w2": rn(ks[3], (9, places, places), 1.0 / jnp.sqrt(9.0 * places)),
            "g2": 1.0 + rn(ks[4], (1, places), 0.1),
            "b2": rn(ks[5], (1, places), 0.1),
            "w3": rn(ks[6], (places, C4), 1.0 / jnp.sqrt(places)),
            "g3": 1.0 + rn(ks[7], (1, C4), 0.1),
            "b3": rn(ks[8], (1, C4), 0.1),
            "sw1": rn(ks[9], (C4, Cs), 1.0 / jnp.sqrt(C4)),
            "sb1": rn(ks[10], (1, Cs), 0.1),
            "sw2": rn(ks[11], (Cs, C4), 1.0 / jnp.sqrt(Cs)),
            "sb2": rn(ks[12], (1, C4), 0.1),
        }
        if downsampling:
            params["wd"] = rn(ks[14], (in_places, C4), 1.0 / jnp.sqrt(in_places))
            params["gd"] = 1.0 + rn(ks[15], (1, C4), 0.1)
            params["bd"] = rn(ks[16], (1, C4), 0.1)

        x = rn(ks[13], (N, in_places, H, W), 1.0)                  # NCHW like PyTorch

        fn = jax.jit(functools.partial(bottleneck_se, stride=1,
                                       downsampling=downsampling,
                                       expansion=expansion,
                                       row_tile=128))              # small tile -> multi-tile grid in test
        out = jax.block_until_ready(fn(x, params))
        ref = bottleneck_se_reference(x, params, downsampling=downsampling,
                                      expansion=expansion)
        assert out.shape == (N, C4, H, W), out.shape
        max_err = float(jnp.max(jnp.abs(out - ref)))
        # bf16 MXU feeds vs f32-HIGHEST reference: widened tolerance.
        assert jnp.allclose(out, ref, atol=7e-2, rtol=7e-2), \
            f"downsampling={downsampling}: max abs err {max_err}"

    key = jax.random.PRNGKey(0)
    k_a, k_b = jax.random.split(key)
    # identity residual path (in_places == places*expansion)
    run_case(False, 128, 32, 4, 2, 16, 16, k_a)
    # projection (downsampling) residual path
    run_case(True, 64, 32, 4, 2, 16, 16, k_b)
    print("KERNEL_OK")
</pallas_src>

<mosaic_0001>
module attributes {stable_mosaic.version = 11 : i64} {
  func.func @kernel(%arg0: i32, %arg1: memref<128x128xbf16, #tpu.memory_space<vmem>>, %arg2: memref<128x32xbf16, #tpu.memory_space<vmem>>, %arg3: memref<128x32xbf16, #tpu.memory_space<vmem>>, %arg4: memref<1x1x32xf32, #tpu.memory_space<vmem>>, %arg5: memref<1x1x32xf32, #tpu.memory_space<vmem>>) attributes {dimension_semantics = [#tpu.dimension_semantics<parallel>], iteration_bounds = array<i64: 4>, scalar_prefetch = 0 : i64, scratch_operands = 0 : i64, tpu.core_type = #tpu.core_type<tc>, window_params = [{transform_indices = @transform_0, window_bounds = array<i64: 128, 128>}, {pipeline_mode = #tpu.pipeline_mode<synchronous>, transform_indices = @transform_1, window_bounds = array<i64: 128, 32>}, {transform_indices = @transform_2, window_bounds = array<i64: 128, 32>}, {transform_indices = @transform_3, window_bounds = array<i64: 1, 1, 32>}, {transform_indices = @transform_4, window_bounds = array<i64: 1, 1, 32>}]} {
    %c0 = arith.constant 0 : index
    %c0_0 = arith.constant 0 : index
    %0 = vector.load %arg1[%c0, %c0_0] : memref<128x128xbf16, #tpu.memory_space<vmem>>, vector<128x128xbf16>
    %c0_1 = arith.constant 0 : index
    %c0_2 = arith.constant 0 : index
    %1 = vector.load %arg2[%c0_1, %c0_2] : memref<128x32xbf16, #tpu.memory_space<vmem>>, vector<128x32xbf16>
    %cst = arith.constant dense<0.000000e+00> : vector<128x32xf32>
    %2 = tpu.matmul %0, %1, %cst {dimension_numbers = #tpu.dot_dimension_numbers<[1], [0], [0], [1], [0, 0, 1, 1], [], []>} : vector<128x128xbf16>, vector<128x32xbf16>, vector<128x32xf32> -> vector<128x32xf32>
    %3 = arith.truncf %2 : vector<128x32xf32> to vector<128x32xbf16>
    %c0_3 = arith.constant 0 : index
    %c0_4 = arith.constant 0 : index
    %4 = vector.load %arg3[%c0_3, %c0_4] : memref<128x32xbf16, #tpu.memory_space<vmem>>, vector<128x32xbf16>
    tpu.vector_store %arg3[%c0_3, %c0_4], %3 {strides = array<i32>} : memref<128x32xbf16, #tpu.memory_space<vmem>>, vector<128x32xbf16>,
    %cst_5 = arith.constant dense<0.000000e+00> : vector<32xf32>
    %5 = vector.multi_reduction <add>, %2, %cst_5 [0] : vector<128x32xf32> to vector<32xf32>
    %6 = vector.shape_cast %5 : vector<32xf32> to vector<1x32xf32>
    %c0_6 = arith.constant 0 : index
    %c0_7 = arith.constant 0 : index
    %c0_8 = arith.constant 0 : index
    %7 = vector.load %arg4[%c0_6, %c0_7, %c0_8] : memref<1x1x32xf32, #tpu.memory_space<vmem>>, vector<1x1x32xf32>
    %8 = vector.shape_cast %7 : vector<1x1x32xf32> to vector<1x32xf32>
    %9 = vector.shape_cast %6 : vector<1x32xf32> to vector<1x1x32xf32>
    tpu.vector_store %arg4[%c0_6, %c0_7, %c0_8], %9 {strides = array<i32>} : memref<1x1x32xf32, #tpu.memory_space<vmem>>, vector<1x1x32xf32>,
    %10 = arith.mulf %2, %2 : vector<128x32xf32>
    %cst_9 = arith.constant dense<0.000000e+00> : vector<32xf32>
    %11 = vector.multi_reduction <add>, %10, %cst_9 [0] : vector<128x32xf32> to vector<32xf32>
    %12 = vector.shape_cast %11 : vector<32xf32> to vector<1x32xf32>
    %c0_10 = arith.constant 0 : index
    %c0_11 = arith.constant 0 : index
    %c0_12 = arith.constant 0 : index
    %13 = vector.load %arg5[%c0_10, %c0_11, %c0_12] : memref<1x1x32xf32, #tpu.memory_space<vmem>>, vector<1x1x32xf32>
    %14 = vector.shape_cast %13 : vector<1x1x32xf32> to vector<1x32xf32>
    %15 = vector.shape_cast %12 : vector<1x32xf32> to vector<1x1x32xf32>
    tpu.vector_store %arg5[%c0_10, %c0_11, %c0_12], %15 {strides = array<i32>} : memref<1x1x32xf32, #tpu.memory_space<vmem>>, vector<1x1x32xf32>,
    return
  }
  func.func @transform_0(%arg0: i32) -> (i32, i32) {
    %c0_i32 = arith.constant 0 : i32
    %c0_i32_0 = arith.constant 0 : i32
    return %arg0, %c0_i32 : i32, i32
  }
  func.func @transform_1(%arg0: i32) -> (i32, i32) {
    %c0_i32 = arith.constant 0 : i32
    %c0_i32_0 = arith.constant 0 : i32
    %c0_i32_1 = arith.constant 0 : i32
    return %c0_i32, %c0_i32_0 : i32, i32
  }
  func.func @transform_2(%arg0: i32) -> (i32, i32) {
    %c0_i32 = arith.constant 0 : i32
    %c0_i32_0 = arith.constant 0 : i32
    return %arg0, %c0_i32 : i32, i32
  }
  func.func @transform_3(%arg0: i32) -> (i32, i32, i32) {
    %c0_i32 = arith.constant 0 : i32
    %c0_i32_0 = arith.constant 0 : i32
    %c0_i32_1 = arith.constant 0 : i32
    return %arg0, %c0_i32, %c0_i32_0 : i32, i32, i32
  }
  func.func @transform_4(%arg0: i32) -> (i32, i32, i32) {
    %c0_i32 = arith.constant 0 : i32
    %c0_i32_0 = arith.constant 0 : i32
    %c0_i32_1 = arith.constant 0 : i32
    return %arg0, %c0_i32, %c0_i32_0 : i32, i32, i32
  }
}

module attributes {stable_mosaic.version = 11 : i64} {
  func.func @kernel(%arg0: i32, %arg1: memref<1x18x18x32xbf16, #tpu.memory_space<vmem>>, %arg2: memref<9x32x32xbf16, #tpu.memory_space<vmem>>, %arg3: memref<1x256x32xbf16, #tpu.memory_space<vmem>>, %arg4: memref<1x1x32xf32, #tpu.memory_space<vmem>>, %arg5: memref<1x1x32xf32, #tpu.memory_space<vmem>>) attributes {dimension_semantics = [#tpu.dimension_semantics<parallel>], iteration_bounds = array<i64: 2>, scalar_prefetch = 0 : i64, scratch_operands = 0 : i64, tpu.core_type = #tpu.core_type<tc>, window_params = [{transform_indices = @transform_0, window_bounds = array<i64: 1, 18, 18, 32>}, {pipeline_mode = #tpu.pipeline_mode<synchronous>, transform_indices = @transform_1, window_bounds = array<i64: 9, 32, 32>}, {transform_indices = @transform_2, window_bounds = array<i64: 1, 256, 32>}, {transform_indices = @transform_3, window_bounds = array<i64: 1, 1, 32>}, {transform_indices = @transform_4, window_bounds = array<i64: 1, 1, 32>}]} {
    %c0 = arith.constant 0 : index
    %c0_0 = arith.constant 0 : index
    %c0_1 = arith.constant 0 : index
    %c0_2 = arith.constant 0 : index
    %0 = vector.load %arg1[%c0, %c0_0, %c0_1, %c0_2] : memref<1x18x18x32xbf16, #tpu.memory_space<vmem>>, vector<1x18x18x32xbf16>
    %1 = vector.shape_cast %0 : vector<1x18x18x32xbf16> to vector<18x18x32xbf16>
    %2 = vector.extract_strided_slice %1 {offsets = [0, 0, 0], sizes = [16, 16, 32], strides = [1, 1, 1]} : vector<18x18x32xbf16> to vector<16x16x32xbf16>
    %3 = vector.shape_cast %2 : vector<16x16x32xbf16> to vector<256x32xbf16>
    %c0_3 = arith.constant 0 : index
    %c0_4 = arith.constant 0 : index
    %c0_5 = arith.constant 0 : index
    %4 = vector.load %arg2[%c0_3, %c0_4, %c0_5] : memref<9x32x32xbf16, #tpu.memory_space<vmem>>, vector<1x32x32xbf16>
    %5 = vector.shape_cast %4 : vector<1x32x32xbf16> to vector<32x32xbf16>
    %cst = arith.constant dense<0.000000e+00> : vector<256x32xf32>
    %6 = tpu.matmul %3, %5, %cst {dimension_numbers = #tpu.dot_dimension_numbers<[1], [0], [0], [1], [0, 0, 1, 1], [], []>} : vector<256x32xbf16>, vector<32x32xbf16>, vector<256x32xf32> -> vector<256x32xf32>
    %7 = vector.extract_strided_slice %1 {offsets = [0, 1, 0], sizes = [16, 16, 32], strides = [1, 1, 1]} : vector<18x18x32xbf16> to vector<16x16x32xbf16>
    %8 = vector.shape_cast %7 : vector<16x16x32xbf16> to vector<256x32xbf16>
    %c1 = arith.constant 1 : index
    %c0_6 = arith.constant 0 : index
    %c0_7 = arith.constant 0 : index
    %9 = vector.load %arg2[%c1, %c0_6, %c0_7] : memref<9x32x32xbf16, #tpu.memory_space<vmem>>, vector<1x32x32xbf16>
    %10 = vector.shape_cast %9 : vector<1x32x32xbf16> to vector<32x32xbf16>
    %cst_8 = arith.constant dense<0.000000e+00> : vector<256x32xf32>
    %11 = tpu.matmul %8, %10, %cst_8 {dimension_numbers = #tpu.dot_dimension_numbers<[1], [0], [0], [1], [0, 0, 1, 1], [], []>} : vector<256x32xbf16>, vector<32x32xbf16>, vector<256x32xf32> -> vector<256x32xf32>
    %12 = arith.addf %6, %11 : vector<256x32xf32>
    %13 = vector.extract_strided_slice %1 {offsets = [0, 2, 0], sizes = [16, 16, 32], strides = [1, 1, 1]} : vector<18x18x32xbf16> to vector<16x16x32xbf16>
    %14 = vector.shape_cast %13 : vector<16x16x32xbf16> to vector<256x32xbf16>
    %c2 = arith.constant 2 : index
    %c0_9 = arith.constant 0 : index
    %c0_10 = arith.constant 0 : index
    %15 = vector.load %arg2[%c2, %c0_9, %c0_10] : memref<9x32x32xbf16, #tpu.memory_space<vmem>>, vector<1x32x32xbf16>
    %16 = vector.shape_cast %15 : vector<1x32x32xbf16> to vector<32x32xbf16>
    %cst_11 = arith.constant dense<0.000000e+00> : vector<256x32xf32>
    %17 = tpu.matmul %14, %16, %cst_11 {dimension_numbers = #tpu.dot_dimension_numbers<[1], [0], [0], [1], [0, 0, 1, 1], [], []>} : vector<256x32xbf16>, vector<32x32xbf16>, vector<256x32xf32> -> vector<256x32xf32>
    %18 = arith.addf %12, %17 : vector<256x32xf32>
    %19 = vector.extract_strided_slice %1 {offsets = [1, 0, 0], sizes = [16, 16, 32], strides = [1, 1, 1]} : vector<18x18x32xbf16> to vector<16x16x32xbf16>
    %20 = vector.shape_cast %19 : vector<16x16x32xbf16> to vector<256x32xbf16>
    %c3 = arith.constant 3 : index
    %c0_12 = arith.constant 0 : index
    %c0_13 = arith.constant 0 : index
    %21 = vector.load %arg2[%c3, %c0_12, %c0_13] : memref<9x32x32xbf16, #tpu.memory_space<vmem>>, vector<1x32x32xbf16>
    %22 = vector.shape_cast %21 : vector<1x32x32xbf16> to vector<32x32xbf16>
    %cst_14 = arith.constant dense<0.000000e+00> : vector<256x32xf32>
    %23 = tpu.matmul %20, %22, %cst_14 {dimension_numbers = #tpu.dot_dimension_numbers<[1], [0], [0], [1], [0, 0, 1, 1], [], []>} : vector<256x32xbf16>, vector<32x32xbf16>, vector<256x32xf32> -> vector<256x32xf32>
    %24 = arith.addf %18, %23 : vector<256x32xf32>
    %25 = vector.extract_strided_slice %1 {offsets = [1, 1, 0], sizes = [16, 16, 32], strides = [1, 1, 1]} : vector<18x18x32xbf16> to vector<16x16x32xbf16>
    %26 = vector.shape_cast %25 : vector<16x16x32xbf16> to vector<256x32xbf16>
    %c4 = arith.constant 4 : index
    %c0_15 = arith.constant 0 : index
    %c0_16 = arith.constant 0 : index
    %27 = vector.load %arg2[%c4, %c0_15, %c0_16] : memref<9x32x32xbf16, #tpu.memory_space<vmem>>, vector<1x32x32xbf16>
    %28 = vector.shape_cast %27 : vector<1x32x32xbf16> to vector<32x32xbf16>
    %cst_17 = arith.constant dense<0.000000e+00> : vector<256x32xf32>
    %29 = tpu.matmul %26, %28, %cst_17 {dimension_numbers = #tpu.dot_dimension_numbers<[1], [0], [0], [1], [0, 0, 1, 1], [], []>} : vector<256x32xbf16>, vector<32x32xbf16>, vector<256x32xf32> -> vector<256x32xf32>
    %30 = arith.addf %24, %29 : vector<256x32xf32>
    %31 = vector.extract_strided_slice %1 {offsets = [1, 2, 0], sizes = [16, 16, 32], strides = [1, 1, 1]} : vector<18x18x32xbf16> to vector<16x16x32xbf16>
    %32 = vector.shape_cast %31 : vector<16x16x32xbf16> to vector<256x32xbf16>
    %c5 = arith.constant 5 : index
    %c0_18 = arith.constant 0 : index
    %c0_19 = arith.constant 0 : index
    %33 = vector.load %arg2[%c5, %c0_18, %c0_19] : memref<9x32x32xbf16, #tpu.memory_space<vmem>>, vector<1x32x32xbf16>
    %34 = vector.shape_cast %33 : vector<1x32x32xbf16> to vector<32x32xbf16>
    %cst_20 = arith.constant dense<0.000000e+00> : vector<256x32xf32>
    %35 = tpu.matmul %32, %34, %cst_20 {dimension_numbers = #tpu.dot_dimension_numbers<[1], [0], [0], [1], [0, 0, 1, 1], [], []>} : vector<256x32xbf16>, vector<32x32xbf16>, vector<256x32xf32> -> vector<256x32xf32>
    %36 = arith.addf %30, %35 : vector<256x32xf32>
    %37 = vector.extract_strided_slice %1 {offsets = [2, 0, 0], sizes = [16, 16, 32], strides = [1, 1, 1]} : vector<18x18x32xbf16> to vector<16x16x32xbf16>
    %38 = vector.shape_cast %37 : vector<16x16x32xbf16> to vector<256x32xbf16>
    %c6 = arith.constant 6 : index
    %c0_21 = arith.constant 0 : index
    %c0_22 = arith.constant 0 : index
    %39 = vector.load %arg2[%c6, %c0_21, %c0_22] : memref<9x32x32xbf16, #tpu.memory_space<vmem>>, vector<1x32x32xbf16>
    %40 = vector.shape_cast %39 : vector<1x32x32xbf16> to vector<32x32xbf16>
    %cst_23 = arith.constant dense<0.000000e+00> : vector<256x32xf32>
    %41 = tpu.matmul %38, %40, %cst_23 {dimension_numbers = #tpu.dot_dimension_numbers<[1], [0], [0], [1], [0, 0, 1, 1], [], []>} : vector<256x32xbf16>, vector<32x32xbf16>, vector<256x32xf32> -> vector<256x32xf32>
    %42 = arith.addf %36, %41 : vector<256x32xf32>
    %43 = vector.extract_strided_slice %1 {offsets = [2, 1, 0], sizes = [16, 16, 32], strides = [1, 1, 1]} : vector<18x18x32xbf16> to vector<16x16x32xbf16>
    %44 = vector.shape_cast %43 : vector<16x16x32xbf16> to vector<256x32xbf16>
    %c7 = arith.constant 7 : index
    %c0_24 = arith.constant 0 : index
    %c0_25 = arith.constant 0 : index
    %45 = vector.load %arg2[%c7, %c0_24, %c0_25] : memref<9x32x32xbf16, #tpu.memory_space<vmem>>, vector<1x32x32xbf16>
    %46 = vector.shape_cast %45 : vector<1x32x32xbf16> to vector<32x32xbf16>
    %cst_26 = arith.constant dense<0.000000e+00> : vector<256x32xf32>
    %47 = tpu.matmul %44, %46, %cst_26 {dimension_numbers = #tpu.dot_dimension_numbers<[1], [0], [0], [1], [0, 0, 1, 1], [], []>} : vector<256x32xbf16>, vector<32x32xbf16>, vector<256x32xf32> -> vector<256x32xf32>
    %48 = arith.addf %42, %47 : vector<256x32xf32>
    %49 = vector.extract_strided_slice %1 {offsets = [2, 2, 0], sizes = [16, 16, 32], strides = [1, 1, 1]} : vector<18x18x32xbf16> to vector<16x16x32xbf16>
    %50 = vector.shape_cast %49 : vector<16x16x32xbf16> to vector<256x32xbf16>
    %c8 = arith.constant 8 : index
    %c0_27 = arith.constant 0 : index
    %c0_28 = arith.constant 0 : index
    %51 = vector.load %arg2[%c8, %c0_27, %c0_28] : memref<9x32x32xbf16, #tpu.memory_space<vmem>>, vector<1x32x32xbf16>
    %52 = vector.shape_cast %51 : vector<1x32x32xbf16> to vector<32x32xbf16>
    %cst_29 = arith.constant dense<0.000000e+00> : vector<256x32xf32>
    %53 = tpu.matmul %50, %52, %cst_29 {dimension_numbers = #tpu.dot_dimension_numbers<[1], [0], [0], [1], [0, 0, 1, 1], [], []>} : vector<256x32xbf16>, vector<32x32xbf16>, vector<256x32xf32> -> vector<256x32xf32>
    %54 = arith.addf %48, %53 : vector<256x32xf32>
    %55 = arith.truncf %54 : vector<256x32xf32> to vector<256x32xbf16>
    %c0_30 = arith.constant 0 : index
    %c0_31 = arith.constant 0 : index
    %c0_32 = arith.constant 0 : index
    %56 = vector.load %arg3[%c0_30, %c0_31, %c0_32] : memref<1x256x32xbf16, #tpu.memory_space<vmem>>, vector<1x256x32xbf16>
    %57 = vector.shape_cast %56 : vector<1x256x32xbf16> to vector<256x32xbf16>
    %58 = vector.shape_cast %55 : vector<256x32xbf16> to vector<1x256x32xbf16>
    tpu.vector_store %arg3[%c0_30, %c0_31, %c0_32], %58 {strides = array<i32>} : memref<1x256x32xbf16, #tpu.memory_space<vmem>>, vector<1x256x32xbf16>,
    %cst_33 = arith.constant dense<0.000000e+00> : vector<32xf32>
    %59 = vector.multi_reduction <add>, %54, %cst_33 [0] : vector<256x32xf32> to vector<32xf32>
    %60 = vector.shape_cast %59 : vector<32xf32> to vector<1x32xf32>
    %c0_34 = arith.constant 0 : index
    %c0_35 = arith.constant 0 : index
    %c0_36 = arith.constant 0 : index
    %61 = vector.load %arg4[%c0_34, %c0_35, %c0_36] : memref<1x1x32xf32, #tpu.memory_space<vmem>>, vector<1x1x32xf32>
    %62 = vector.shape_cast %61 : vector<1x1x32xf32> to vector<1x32xf32>
    %63 = vector.shape_cast %60 : vector<1x32xf32> to vector<1x1x32xf32>
    tpu.vector_store %arg4[%c0_34, %c0_35, %c0_36], %63 {strides = array<i32>} : memref<1x1x32xf32, #tpu.memory_space<vmem>>, vector<1x1x32xf32>,
    %64 = arith.mulf %54, %54 : vector<256x32xf32>
    %cst_37 = arith.constant dense<0.000000e+00> : vector<32xf32>
    %65 = vector.multi_reduction <add>, %64, %cst_37 [0] : vector<256x32xf32> to vector<32xf32>
    %66 = vector.shape_cast %65 : vector<32xf32> to vector<1x32xf32>
    %c0_38 = arith.constant 0 : index
    %c0_39 = arith.constant 0 : index
    %c0_40 = arith.constant 0 : index
    %67 = vector.load %arg5[%c0_38, %c0_39, %c0_40] : memref<1x1x32xf32, #tpu.memory_space<vmem>>, vector<1x1x32xf32>
    %68 = vector.shape_cast %67 : vector<1x1x32xf32> to vector<1x32xf32>
    %69 = vector.shape_cast %66 : vector<1x32xf32> to vector<1x1x32xf32>
    tpu.vector_store %arg5[%c0_38, %c0_39, %c0_40], %69 {strides = array<i32>} : memref<1x1x32xf32, #tpu.memory_space<vmem>>, vector<1x1x32xf32>,
    return
  }
  func.func @transform_0(%arg0: i32) -> (i32, i32, i32, i32) {
    %c0_i32 = arith.constant 0 : i32
    %c0_i32_0 = arith.constant 0 : i32
    %c0_i32_1 = arith.constant 0 : i32
    %c0_i32_2 = arith.constant 0 : i32
    return %arg0, %c0_i32, %c0_i32_0, %c0_i32_1 : i32, i32, i32, i32
  }
  func.func @transform_1(%arg0: i32) -> (i32, i32, i32) {
    %c0_i32 = arith.constant 0 : i32
    %c0_i32_0 = arith.constant 0 : i32
    %c0_i32_1 = arith.constant 0 : i32
    %c0_i32_2 = arith.constant 0 : i32
    return %c0_i32, %c0_i32_0, %c0_i32_1 : i32, i32, i32
  }
  func.func @transform_2(%arg0: i32) -> (i32, i32, i32) {
    %c0_i32 = arith.constant 0 : i32
    %c0_i32_0 = arith.constant 0 : i32
    %c0_i32_1 = arith.constant 0 : i32
    return %arg0, %c0_i32, %c0_i32_0 : i32, i32, i32
  }
  func.func @transform_3(%arg0: i32) -> (i32, i32, i32) {
    %c0_i32 = arith.constant 0 : i32
    %c0_i32_0 = arith.constant 0 : i32
    %c0_i32_1 = arith.constant 0 : i32
    return %arg0, %c0_i32, %c0_i32_0 : i32, i32, i32
  }
  func.func @transform_4(%arg0: i32) -> (i32, i32, i32) {
    %c0_i32 = arith.constant 0 : i32
    %c0_i32_0 = arith.constant 0 : i32
    %c0_i32_1 = arith.constant 0 : i32
    return %arg0, %c0_i32, %c0_i32_0 : i32, i32, i32
  }
}

module attributes {stable_mosaic.version = 11 : i64} {
  func.func @_k3_kernel(%arg0: i32, %arg1: i32, %arg2: memref<1x128x32xbf16, #tpu.memory_space<vmem>>, %arg3: memref<1x32xf32, #tpu.memory_space<vmem>>, %arg4: memref<1x32xf32, #tpu.memory_space<vmem>>, %arg5: memref<32x128xbf16, #tpu.memory_space<vmem>>, %arg6: memref<1x128x128xbf16, #tpu.memory_space<vmem>>, %arg7: memref<1x1x128xf32, #tpu.memory_space<vmem>>, %arg8: memref<1x1x128xf32, #tpu.memory_space<vmem>>) attributes {dimension_semantics = [#tpu.dimension_semantics<parallel>, #tpu.dimension_semantics<parallel>], iteration_bounds = array<i64: 2, 2>, scalar_prefetch = 0 : i64, scratch_operands = 0 : i64, tpu.core_type = #tpu.core_type<tc>, window_params = [{transform_indices = @transform_0, window_bounds = array<i64: 1, 128, 32>}, {pipeline_mode = #tpu.pipeline_mode<synchronous>, transform_indices = @transform_1, window_bounds = array<i64: 1, 32>}, {pipeline_mode = #tpu.pipeline_mode<synchronous>, transform_indices = @transform_2, window_bounds = array<i64: 1, 32>}, {pipeline_mode = #tpu.pipeline_mode<synchronous>, transform_indices = @transform_3, window_bounds = array<i64: 32, 128>}, {transform_indices = @transform_4, window_bounds = array<i64: 1, 128, 128>}, {transform_indices = @transform_5, window_bounds = array<i64: 1, 1, 128>}, {transform_indices = @transform_6, window_bounds = array<i64: 1, 1, 128>}]} {
    %c0 = arith.constant 0 : index
    %c0_0 = arith.constant 0 : index
    %c0_1 = arith.constant 0 : index
    %0 = vector.load %arg2[%c0, %c0_0, %c0_1] : memref<1x128x32xbf16, #tpu.memory_space<vmem>>, vector<1x128x32xbf16>
    %1 = vector.shape_cast %0 : vector<1x128x32xbf16> to vector<128x32xbf16>
    %2 = arith.extf %1 : vector<128x32xbf16> to vector<128x32xf32>
    %c0_2 = arith.constant 0 : index
    %c0_3 = arith.constant 0 : index
    %3 = vector.load %arg3[%c0_2, %c0_3] : memref<1x32xf32, #tpu.memory_space<vmem>>, vector<1x32xf32>
    %4 = vector.broadcast %3 : vector<1x32xf32> to vector<128x32xf32>
    %5 = arith.mulf %2, %4 : vector<128x32xf32>
    %c0_4 = arith.constant 0 : index
    %c0_5 = arith.constant 0 : index
    %6 = vector.load %arg4[%c0_4, %c0_5] : memref<1x32xf32, #tpu.memory_space<vmem>>, vector<1x32xf32>
    %7 = vector.broadcast %6 : vector<1x32xf32> to vector<128x32xf32>
    %8 = arith.addf %5, %7 : vector<128x32xf32>
    %cst = arith.constant 0.000000e+00 : f32
    %9 = vector.broadcast %cst : f32 to vector<128x32xf32>
    %10 = arith.maximumf %8, %9 : vector<128x32xf32>
    %11 = arith.truncf %10 : vector<128x32xf32> to vector<128x32xbf16>
    %c0_6 = arith.constant 0 : index
    %c0_7 = arith.constant 0 : index
    %12 = vector.load %arg5[%c0_6, %c0_7] : memref<32x128xbf16, #tpu.memory_space<vmem>>, vector<32x128xbf16>
    %cst_8 = arith.constant dense<0.000000e+00> : vector<128x128xf32>
    %13 = tpu.matmul %11, %12, %cst_8 {dimension_numbers = #tpu.dot_dimension_numbers<[1], [0], [0], [1], [0, 0, 1, 1], [], []>} : vector<128x32xbf16>, vector<32x128xbf16>, vector<128x128xf32> -> vector<128x128xf32>
    %14 = arith.truncf %13 : vector<128x128xf32> to vector<128x128xbf16>
    %c0_9 = arith.constant 0 : index
    %c0_10 = arith.constant 0 : index
    %c0_11 = arith.constant 0 : index
    %15 = vector.load %arg6[%c0_9, %c0_10, %c0_11] : memref<1x128x128xbf16, #tpu.memory_space<vmem>>, vector<1x128x128xbf16>
    %16 = vector.shape_cast %15 : vector<1x128x128xbf16> to vector<128x128xbf16>
    %17 = vector.shape_cast %14 : vector<128x128xbf16> to vector<1x128x128xbf16>
    tpu.vector_store %arg6[%c0_9, %c0_10, %c0_11], %17 {strides = array<i32>} : memref<1x128x128xbf16, #tpu.memory_space<vmem>>, vector<1x128x128xbf16>,
    %cst_12 = arith.constant dense<0.000000e+00> : vector<128xf32>
    %18 = vector.multi_reduction <add>, %13, %cst_12 [0] : vector<128x128xf32> to vector<128xf32>
    %19 = vector.shape_cast %18 : vector<128xf32> to vector<1x128xf32>
    %c0_13 = arith.constant 0 : index
    %c0_14 = arith.constant 0 : index
    %c0_15 = arith.constant 0 : index
    %20 = vector.load %arg7[%c0_13, %c0_14, %c0_15] : memref<1x1x128xf32, #tpu.memory_space<vmem>>, vector<1x1x128xf32>
    %21 = vector.shape_cast %20 : vector<1x1x128xf32> to vector<1x128xf32>
    %22 = vector.shape_cast %19 : vector<1x128xf32> to vector<1x1x128xf32>
    tpu.vector_store %arg7[%c0_13, %c0_14, %c0_15], %22 {strides = array<i32>} : memref<1x1x128xf32, #tpu.memory_space<vmem>>, vector<1x1x128xf32>,
    %23 = arith.mulf %13, %13 : vector<128x128xf32>
    %cst_16 = arith.constant dense<0.000000e+00> : vector<128xf32>
    %24 = vector.multi_reduction <add>, %23, %cst_16 [0] : vector<128x128xf32> to vector<128xf32>
    %25 = vector.shape_cast %24 : vector<128xf32> to vector<1x128xf32>
    %c0_17 = arith.constant 0 : index
    %c0_18 = arith.constant 0 : index
    %c0_19 = arith.constant 0 : index
    %26 = vector.load %arg8[%c0_17, %c0_18, %c0_19] : memref<1x1x128xf32, #tpu.memory_space<vmem>>, vector<1x1x128xf32>
    %27 = vector.shape_cast %26 : vector<1x1x128xf32> to vector<1x128xf32>
    %28 = vector.shape_cast %25 : vector<1x128xf32> to vector<1x1x128xf32>
    tpu.vector_store %arg8[%c0_17, %c0_18, %c0_19], %28 {strides = array<i32>} : memref<1x1x128xf32, #tpu.memory_space<vmem>>, vector<1x1x128xf32>,
    return
  }
  func.func @transform_0(%arg0: i32, %arg1: i32) -> (i32, i32, i32) {
    %c0_i32 = arith.constant 0 : i32
    %c0_i32_0 = arith.constant 0 : i32
    return %arg0, %arg1, %c0_i32 : i32, i32, i32
  }
  func.func @transform_1(%arg0: i32, %arg1: i32) -> (i32, i32) {
    %c0_i32 = arith.constant 0 : i32
    %c0_i32_0 = arith.constant 0 : i32
    %c0_i32_1 = arith.constant 0 : i32
    return %c0_i32, %c0_i32_0 : i32, i32
  }
  func.func @transform_2(%arg0: i32, %arg1: i32) -> (i32, i32) {
    %c0_i32 = arith.constant 0 : i32
    %c0_i32_0 = arith.constant 0 : i32
    %c0_i32_1 = arith.constant 0 : i32
    return %c0_i32, %c0_i32_0 : i32, i32
  }
  func.func @transform_3(%arg0: i32, %arg1: i32) -> (i32, i32) {
    %c0_i32 = arith.constant 0 : i32
    %c0_i32_0 = arith.constant 0 : i32
    %c0_i32_1 = arith.constant 0 : i32
    return %c0_i32, %c0_i32_0 : i32, i32
  }
  func.func @transform_4(%arg0: i32, %arg1: i32) -> (i32, i32, i32) {
    %c0_i32 = arith.constant 0 : i32
    %c0_i32_0 = arith.constant 0 : i32
    return %arg0, %arg1, %c0_i32 : i32, i32, i32
  }
  func.func @transform_5(%arg0: i32, %arg1: i32) -> (i32, i32, i32) {
    %c2_i32 = arith.constant 2 : i32
    %0 = arith.muli %arg0, %c2_i32 : i32
    %1 = arith.addi %0, %arg1 : i32
    %c0_i32 = arith.constant 0 : i32
    %c0_i32_0 = arith.constant 0 : i32
    %c0_i32_1 = arith.constant 0 : i32
    return %1, %c0_i32, %c0_i32_0 : i32, i32, i32
  }
  func.func @transform_6(%arg0: i32, %arg1: i32) -> (i32, i32, i32) {
    %c2_i32 = arith.constant 2 : i32
    %0 = arith.muli %arg0, %c2_i32 : i32
    %1 = arith.addi %0, %arg1 : i32
    %c0_i32 = arith.constant 0 : i32
    %c0_i32_0 = arith.constant 0 : i32
    %c0_i32_1 = arith.constant 0 : i32
    return %1, %c0_i32, %c0_i32_0 : i32, i32, i32
  }
}

module attributes {stable_mosaic.version = 11 : i64} {
  func.func @_k4_kernel(%arg0: i32, %arg1: i32, %arg2: memref<1x128x128xbf16, #tpu.memory_space<vmem>>, %arg3: memref<1x128x128xbf16, #tpu.memory_space<vmem>>, %arg4: memref<1x1x128xf32, #tpu.memory_space<vmem>>, %arg5: memref<1x128xf32, #tpu.memory_space<vmem>>, %arg6: memref<1x128xf32, #tpu.memory_space<vmem>>, %arg7: memref<1x128xf32, #tpu.memory_space<vmem>>, %arg8: memref<1x128xf32, #tpu.memory_space<vmem>>, %arg9: memref<1x128x128xf32, #tpu.memory_space<vmem>>) attributes {dimension_semantics = [#tpu.dimension_semantics<parallel>, #tpu.dimension_semantics<parallel>], iteration_bounds = array<i64: 2, 2>, scalar_prefetch = 0 : i64, scratch_operands = 0 : i64, tpu.core_type = #tpu.core_type<tc>, window_params = [{transform_indices = @transform_0, window_bounds = array<i64: 1, 128, 128>}, {transform_indices = @transform_1, window_bounds = array<i64: 1, 128, 128>}, {transform_indices = @transform_2, window_bounds = array<i64: 1, 1, 128>}, {pipeline_mode = #tpu.pipeline_mode<synchronous>, transform_indices = @transform_3, window_bounds = array<i64: 1, 128>}, {pipeline_mode = #tpu.pipeline_mode<synchronous>, transform_indices = @transform_4, window_bounds = array<i64: 1, 128>}, {pipeline_mode = #tpu.pipeline_mode<synchronous>, transform_indices = @transform_5, window_bounds = array<i64: 1, 128>}, {pipeline_mode = #tpu.pipeline_mode<synchronous>, transform_indices = @transform_6, window_bounds = array<i64: 1, 128>}, {transform_indices = @transform_7, window_bounds = array<i64: 1, 128, 128>}]} {
    %c0 = arith.constant 0 : index
    %c0_0 = arith.constant 0 : index
    %c0_1 = arith.constant 0 : index
    %0 = vector.load %arg2[%c0, %c0_0, %c0_1] : memref<1x128x128xbf16, #tpu.memory_space<vmem>>, vector<1x128x128xbf16>
    %1 = vector.shape_cast %0 : vector<1x128x128xbf16> to vector<128x128xbf16>
    %2 = arith.extf %1 : vector<128x128xbf16> to vector<128x128xf32>
    %c0_2 = arith.constant 0 : index
    %c0_3 = arith.constant 0 : index
    %3 = vector.load %arg5[%c0_2, %c0_3] : memref<1x128xf32, #tpu.memory_space<vmem>>, vector<1x128xf32>
    %4 = vector.broadcast %3 : vector<1x128xf32> to vector<128x128xf32>
    %5 = arith.mulf %2, %4 : vector<128x128xf32>
    %c0_4 = arith.constant 0 : index
    %c0_5 = arith.constant 0 : index
    %6 = vector.load %arg6[%c0_4, %c0_5] : memref<1x128xf32, #tpu.memory_space<vmem>>, vector<1x128xf32>
    %7 = vector.broadcast %6 : vector<1x128xf32> to vector<128x128xf32>
    %8 = arith.addf %5, %7 : vector<128x128xf32>
    %c0_6 = arith.constant 0 : index
    %c0_7 = arith.constant 0 : index
    %c0_8 = arith.constant 0 : index
    %9 = vector.load %arg4[%c0_6, %c0_7, %c0_8] : memref<1x1x128xf32, #tpu.memory_space<vmem>>, vector<1x1x128xf32>
    %10 = vector.shape_cast %9 : vector<1x1x128xf32> to vector<1x128xf32>
    %11 = vector.broadcast %10 : vector<1x128xf32> to vector<128x128xf32>
    %12 = arith.mulf %8, %11 : vector<128x128xf32>
    %c0_9 = arith.constant 0 : index
    %c0_10 = arith.constant 0 : index
    %c0_11 = arith.constant 0 : index
    %13 = vector.load %arg3[%c0_9, %c0_10, %c0_11] : memref<1x128x128xbf16, #tpu.memory_space<vmem>>, vector<1x128x128xbf16>
    %14 = vector.shape_cast %13 : vector<1x128x128xbf16> to vector<128x128xbf16>
    %15 = arith.extf %14 : vector<128x128xbf16> to vector<128x128xf32>
    %c0_12 = arith.constant 0 : index
    %c0_13 = arith.constant 0 : index
    %16 = vector.load %arg7[%c0_12, %c0_13] : memref<1x128xf32, #tpu.memory_space<vmem>>, vector<1x128xf32>
    %17 = vector.broadcast %16 : vector<1x128xf32> to vector<128x128xf32>
    %18 = arith.mulf %15, %17 : vector<128x128xf32>
    %c0_14 = arith.constant 0 : index
    %c0_15 = arith.constant 0 : index
    %19 = vector.load %arg8[%c0_14, %c0_15] : memref<1x128xf32, #tpu.memory_space<vmem>>, vector<1x128xf32>
    %20 = vector.broadcast %19 : vector<1x128xf32> to vector<128x128xf32>
    %21 = arith.addf %18, %20 : vector<128x128xf32>
    %22 = arith.addf %12, %21 : vector<128x128xf32>
    %cst = arith.constant 0.000000e+00 : f32
    %23 = vector.broadcast %cst : f32 to vector<128x128xf32>
    %24 = arith.maximumf %22, %23 : vector<128x128xf32>
    %c0_16 = arith.constant 0 : index
    %c0_17 = arith.constant 0 : index
    %c0_18 = arith.constant 0 : index
    %25 = vector.load %arg9[%c0_16, %c0_17, %c0_18] : memref<1x128x128xf32, #tpu.memory_space<vmem>>, vector<1x128x128xf32>
    %26 = vector.shape_cast %25 : vector<1x128x128xf32> to vector<128x128xf32>
    %27 = vector.shape_cast %24 : vector<128x128xf32> to vector<1x128x128xf32>
    tpu.vector_store %arg9[%c0_16, %c0_17, %c0_18], %27 {strides = array<i32>} : memref<1x128x128xf32, #tpu.memory_space<vmem>>, vector<1x128x128xf32>,
    return
  }
  func.func @transform_0(%arg0: i32, %arg1: i32) -> (i32, i32, i32) {
    %c0_i32 = arith.constant 0 : i32
    %c0_i32_0 = arith.constant 0 : i32
    return %arg0, %arg1, %c0_i32 : i32, i32, i32
  }
  func.func @transform_1(%arg0: i32, %arg1: i32) -> (i32, i32, i32) {
    %c0_i32 = arith.constant 0 : i32
    %c0_i32_0 = arith.constant 0 : i32
    return %arg0, %arg1, %c0_i32 : i32, i32, i32
  }
  func.func @transform_2(%arg0: i32, %arg1: i32) -> (i32, i32, i32) {
    %c0_i32 = arith.constant 0 : i32
    %c0_i32_0 = arith.constant 0 : i32
    %c0_i32_1 = arith.constant 0 : i32
    return %arg0, %c0_i32, %c0_i32_0 : i32, i32, i32
  }
  func.func @transform_3(%arg0: i32, %arg1: i32) -> (i32, i32) {
    %c0_i32 = arith.constant 0 : i32
    %c0_i32_0 = arith.constant 0 : i32
    %c0_i32_1 = arith.constant 0 : i32
    return %c0_i32, %c0_i32_0 : i32, i32
  }
  func.func @transform_4(%arg0: i32, %arg1: i32) -> (i32, i32) {
    %c0_i32 = arith.constant 0 : i32
    %c0_i32_0 = arith.constant 0 : i32
    %c0_i32_1 = arith.constant 0 : i32
    return %c0_i32, %c0_i32_0 : i32, i32
  }
  func.func @transform_5(%arg0: i32, %arg1: i32) -> (i32, i32) {
    %c0_i32 = arith.constant 0 : i32
    %c0_i32_0 = arith.constant 0 : i32
    %c0_i32_1 = arith.constant 0 : i32
    return %c0_i32, %c0_i32_0 : i32, i32
  }
  func.func @transform_6(%arg0: i32, %arg1: i32) -> (i32, i32) {
    %c0_i32 = arith.constant 0 : i32
    %c0_i32_0 = arith.constant 0 : i32
    %c0_i32_1 = arith.constant 0 : i32
    return %c0_i32, %c0_i32_0 : i32, i32
  }
  func.func @transform_7(%arg0: i32, %arg1: i32) -> (i32, i32, i32) {
    %c0_i32 = arith.constant 0 : i32
    %c0_i32_0 = arith.constant 0 : i32
    return %arg0, %arg1, %c0_i32 : i32, i32, i32
  }
}

</mosaic_0001>

<llo_original>
// kernel: bottleneck_se.4
$region0: #{bottleneck_se.4}
  #allocation0 [shape = 'u32[]', space=smem, size = 0x4, offset = 0x4, fixed_abs, tag = 'smem constant byte address 0x4 - core index']
  #allocation1 [shape = 'u32[144,128]{1,0:T(1,128)}', space=vmem, size = 0x12000, scoped, tag = 'internal scratch']
  %s0 = inlined_call_operand.vmem [shape: bf16[512,128], index: 0, kind: input, shape index: {}]
  %s1 = inlined_call_operand.vmem [shape: bf16[128,32], index: 1, kind: input, shape index: {}]
  %s2 = inlined_call_operand.vmem [shape: bf16[512,32], index: 2, kind: output, shape index: {0}]
  %s3 = inlined_call_operand.vmem [shape: f32[4,1,32], index: 3, kind: output, shape index: {1}]
  %s4 = inlined_call_operand.vmem [shape: f32[4,1,32], index: 4, kind: output, shape index: {2}]
  %5 = xla_tuple %s2, %s3, %s4
  %s6 = sld [smem:[#allocation0]]
  $region57: #{bottleneck_se.4} parent=0
    _
  %s8 = ssub.s32 1, %s6
  %s9 = scalar_select 0, %s8, %s6
  loop: start=0, step=1, limit=6
  $region2: #{bottleneck_se.4} parent=0 // loop_pre_header
    _
  $region3: #{bottleneck_se.4} parent=0 // loop_header
    %s11 = sphi 0, %s15
    %p12 = scmp.ge.s32.totalorder %s11, 6
    %s21 = sphi 0, %s23
    %s24 = sphi 0, %s21
    %s25 = sphi 0, %s24
    %s41 = sphi 0, %s25
    %s45 = sphi 0, %s45
    %s47 = sphi 0, %s45
    %s48 = sphi 0, %s47
    %s62 = sphi 0, %s48
    %s68 = sphi 0, %s70
    %s71 = sphi 0, %s68
    %s72 = sphi 0, %s71
    %s88 = sphi 0, %s72
    %s94 = sphi 0, %s96
    %s97 = sphi 0, %s94
    %s98 = sphi 0, %s97
    %s114 = sphi 0, %s98
    %s120 = sphi 0, %s122
    %s123 = sphi 0, %s120
    %s124 = sphi 0, %s123
    %s140 = sphi 0, %s124
  $region4: #{bottleneck_se.4} parent=0 // loop_header_branch
    %14 = sbr.rel (%p12) target = $region8
  $region5: #{bottleneck_se.4} parent=0 // loop_body
    %s16 = ssub.s32 %s11, 1
    %s17 = ssub.s32 %s11, 2
    %s18 = sadd.s32 %s11, 1
    %s19 = ssub.s32 %s11, %s18
    %p20 = scmp.eq.s32.totalorder %s19, 0
    %s22 = sadd.s32 %s21, 1
    %s23 = scalar_select %p20, %s21, %s22
    %p26 = pneg %p20
    %p27 = scmp.eq.s32.totalorder %s11, 3
    %p28 = por %p26, %p27
    %p29 = scmp.ne.s32.totalorder %s21, %s24
    %p30 = scmp.eq.s32.totalorder %s11, 0
    %p31 = por %p29, %p30
    %p32 = scmp.ne.s32.totalorder %s21, %s24
    %p33 = scmp.eq.s32.totalorder %s16, 3
    %p34 = por %p32, %p33
    %p35 = scmp.ne.s32.totalorder %s24, %s25
    %p36 = scmp.eq.s32.totalorder %s16, 0
    %p37 = por %p35, %p36
    %p38 = scmp.ne.s32.totalorder %s24, %s25
    %p39 = scmp.eq.s32.totalorder %s17, 3
    %p40 = por %p38, %p39
    %p42 = scmp.ne.s32.totalorder %s25, %s41
    %p43 = scmp.eq.s32.totalorder %s17, 0
    %p44 = por %p42, %p43
    %s46 = sadd.s32 %s45, 1
    %p49 = scmp.eq.s32.totalorder %s11, 3
    %p50 = scmp.ne.s32.totalorder %s45, %s47
    %p51 = scmp.eq.s32.totalorder %s11, 0
    %p52 = por %p50, %p51
    %p53 = scmp.ne.s32.totalorder %s45, %s47
    %p54 = scmp.eq.s32.totalorder %s16, 3
    %p55 = por %p53, %p54
    %p56 = scmp.ne.s32.totalorder %s47, %s48
    %p57 = scmp.eq.s32.totalorder %s16, 0
    %p58 = por %p56, %p57
    %p59 = scmp.ne.s32.totalorder %s47, %s48
    %p60 = scmp.eq.s32.totalorder %s17, 3
    %p61 = por %p59, %p60
    %p63 = scmp.ne.s32.totalorder %s48, %s62
    %p64 = scmp.eq.s32.totalorder %s17, 0
    %p65 = por %p63, %p64
    %s66 = ssub.s32 %s11, %s18
    %p67 = scmp.eq.s32.totalorder %s66, 0
    %s69 = sadd.s32 %s68, 1
    %s70 = scalar_select %p67, %s68, %s69
    %p73 = pneg %p67
    %p74 = scmp.eq.s32.totalorder %s11, 3
    %p75 = por %p73, %p74
    %p76 = scmp.ne.s32.totalorder %s68, %s71
    %p77 = scmp.eq.s32.totalorder %s11, 0
    %p78 = por %p76, %p77
    %p79 = scmp.ne.s32.totalorder %s68, %s71
    %p80 = scmp.eq.s32.totalorder %s16, 3
    %p81 = por %p79, %p80
    %p82 = scmp.ne.s32.totalorder %s71, %s72
    %p83 = scmp.eq.s32.totalorder %s16, 0
    %p84 = por %p82, %p83
    %p85 = scmp.ne.s32.totalorder %s71, %s72
    %p86 = scmp.eq.s32.totalorder %s17, 3
    %p87 = por %p85, %p86
    %p89 = scmp.ne.s32.totalorder %s72, %s88
    %p90 = scmp.eq.s32.totalorder %s17, 0
    %p91 = por %p89, %p90
    %s92 = ssub.s32 %s11, %s18
    %p93 = scmp.eq.s32.totalorder %s92, 0
    %s95 = sadd.s32 %s94, 1
    %s96 = scalar_select %p93, %s94, %s95
    %p99 = pneg %p93
    %p100 = scmp.eq.s32.totalorder %s11, 3
    %p101 = por %p99, %p100
    %p102 = scmp.ne.s32.totalorder %s94, %s97
    %p103 = scmp.eq.s32.totalorder %s11, 0
    %p104 = por %p102, %p103
    %p105 = scmp.ne.s32.totalorder %s94, %s97
    %p106 = scmp.eq.s32.totalorder %s16, 3
    %p107 = por %p105, %p106
    %p108 = scmp.ne.s32.totalorder %s97, %s98
    %p109 = scmp.eq.s32.totalorder %s16, 0
    %p110 = por %p108, %p109
    %p111 = scmp.ne.s32.totalorder %s97, %s98
    %p112 = scmp.eq.s32.totalorder %s17, 3
    %p113 = por %p111, %p112
    %p115 = scmp.ne.s32.totalorder %s98, %s114
    %p116 = scmp.eq.s32.totalorder %s17, 0
    %p117 = por %p115, %p116
    %s118 = ssub.s32 %s11, %s18
    %p119 = scmp.eq.s32.totalorder %s118, 0
    %s121 = sadd.s32 %s120, 1
    %s122 = scalar_select %p119, %s120, %s121
    %p125 = pneg %p119
    %p126 = scmp.eq.s32.totalorder %s11, 3
    %p127 = por %p125, %p126
    %p128 = scmp.ne.s32.totalorder %s120, %s123
    %p129 = scmp.eq.s32.totalorder %s11, 0
    %p130 = por %p128, %p129
    %p131 = scmp.ne.s32.totalorder %s120, %s123
    %p132 = scmp.eq.s32.totalorder %s16, 3
    %p133 = por %p131, %p132
    %p134 = scmp.ne.s32.totalorder %s123, %s124
    %p135 = scmp.eq.s32.totalorder %s16, 0
    %p136 = por %p134, %p135
    %p137 = scmp.ne.s32.totalorder %s123, %s124
    %p138 = scmp.eq.s32.totalorder %s17, 3
    %p139 = por %p137, %p138
    %p141 = scmp.ne.s32.totalorder %s124, %s140
    %p142 = scmp.eq.s32.totalorder %s17, 0
    %p143 = por %p141, %p142
    %p144 = scmp.le.s32.totalorder 1, %s11
    %p145 = scmp.lt.s32.totalorder %s11, 5
    %p146 = pnand %p144, %p145
    %p147 = pneg %p146
    // Predicated region
    $region9: #{bottleneck_se.4} parent=5 // pred_check
      _
    $region10: #{bottleneck_se.4} parent=5 // pred_check_branch
      %149 = sbr.rel (%p146) target = $region12
    $region11: #{bottleneck_se.4} parent=5 // pred_region
      %s150 = ssub.s32 %s11, 1
      // Predicated region
      $region13: #{bottleneck_se.4} parent=11 // pred_check
        %p151 = pneg %p58
      $region14: #{bottleneck_se.4} parent=11 // pred_check_branch
        %153 = sbr.rel (%p151) target = $region16
      $region15: #{bottleneck_se.4} parent=11 // pred_region
        _
      $region16: #{bottleneck_se.4} parent=11 // pred_fallthru
        _
    $region12: #{bottleneck_se.4} parent=5 // pred_fallthru
      _
    %p154 = scmp.lt.s32.totalorder %s11, 4
    // Predicated region
    $region17: #{bottleneck_se.4} parent=5 // pred_check
      %p155 = pneg %p154
    $region18: #{bottleneck_se.4} parent=5 // pred_check_branch
      %157 = sbr.rel (%p155) target = $region20
    $region19: #{bottleneck_se.4} parent=5 // pred_region
      // Predicated region
      $region21: #{bottleneck_se.4} parent=19 // pred_check
        %p158 = pneg %p31
      $region22: #{bottleneck_se.4} parent=19 // pred_check_branch
        %160 = sbr.rel (%p158) target = $region24
      $region23: #{bottleneck_se.4} parent=19 // pred_region
        %s161 = smul.u32 16, %s11
        %p162 = scmp.lt.s32.totalorder %s161, 63
        %s163 = scalar_select %p162, %s161, 63
        %s164 = smul.addr %s163, 4
        %s165 = scalar_lea.vmem %s0, %s164
        %s166 = smul.u32 16, %s11
      $region24: #{bottleneck_se.4} parent=19 // pred_fallthru
        _
    $region20: #{bottleneck_se.4} parent=5 // pred_fallthru
      _
    %p167 = scmp.le.s32.totalorder 1, %s11
    %p168 = scmp.lt.s32.totalorder %s11, 5
    %p169 = pnand %p167, %p168
    %p170 = pneg %p169
    // Predicated region
    $region25: #{bottleneck_se.4} parent=5 // pred_check
      _
    $region26: #{bottleneck_se.4} parent=5 // pred_check_branch
      %172 = sbr.rel (%p169) target = $region28
    $region27: #{bottleneck_se.4} parent=5 // pred_region
      %s173 = ssub.s32 %s11, 1
      %s174 = smul.u32 16, %s16
      %p175 = scmp.lt.s32.totalorder %s174, 63
      %s176 = scalar_select %p175, %s174, 63
      %s177 = smul.addr %s176, 4
      %s178 = scalar_lea.vmem %s0, %s177
      %p179 = pneg %p37
      %p180 = pneg %p34
      %p181 = pneg %p58
      %p182 = pneg %p55
      %p183 = pneg %p84
      %p184 = pneg %p81
      %s185 = smul.u32 16, %s16
      %p186 = scmp.lt.s32.totalorder %s185, 63
      %s187 = scalar_select %p186, %s185, 63
      %s188 = smul.addr %s187, 4
      %s189 = scalar_lea.vmem %s2, %s188
      %p190 = pneg %p110
      %p191 = pneg %p107
      %p192 = scmp.lt.s32.totalorder %s16, 3
      %s193 = scalar_select %p192, %s16, 3
      %s194 = scalar_lea.vmem %s3, %s193
      %p195 = pneg %p136
      %p196 = pneg %p133
      %p197 = scmp.lt.s32.totalorder %s16, 3
      %s198 = scalar_select %p197, %s16, 3
      %s199 = scalar_lea.vmem %s4, %s198
      %s200 = smul.u32 16, %s16
      %p201 = scmp.lt.s32.totalorder %s200, 63
      %s202 = scalar_select %p201, %s200, 63
      %s203 = smul.addr %s202, 4
      %s204 = scalar_lea.vmem %s0, %s203
      %s205 = smul.u32 16, %s16
      %s206 = smul.u32 16, %s16
      %p207 = scmp.lt.s32.totalorder %s206, 63
      %s208 = scalar_select %p207, %s206, 63
      %s209 = smul.addr %s208, 4
      %s210 = scalar_lea.vmem %s2, %s209
      %s211 = smul.u32 16, %s16
      %p212 = scmp.lt.s32.totalorder %s16, 3
      %s213 = scalar_select %p212, %s16, 3
      %s214 = scalar_lea.vmem %s3, %s213
      %p215 = scmp.lt.s32.totalorder %s16, 3
      %s216 = scalar_select %p215, %s16, 3
      %s217 = scalar_lea.vmem %s4, %s216
      %v219 = vld [vmem:[%s204] sm:$0xf]
      %v220 = vld [vmem:[%s204 + $0x4] sm:$0xf]
      %v221 = vld [vmem:[%s204 + $0x8] sm:$0xf]
      %v222 = vld [vmem:[%s204 + $0xc] sm:$0xf]
      %v223 = vld [vmem:[%s204 + $0x10] sm:$0xf]
      %v224 = vld [vmem:[%s204 + $0x14] sm:$0xf]
      %v225 = vld [vmem:[%s204 + $0x18] sm:$0xf]
      %v226 = vld [vmem:[%s204 + $0x1c] sm:$0xf]
      %v227 = vld [vmem:[%s204 + $0x20] sm:$0xf]
      %v228 = vld [vmem:[%s204 + $0x24] sm:$0xf]
      %v229 = vld [vmem:[%s204 + $0x28] sm:$0xf]
      %v230 = vld [vmem:[%s204 + $0x2c] sm:$0xf]
      %v231 = vld [vmem:[%s204 + $0x30] sm:$0xf]
      %v232 = vld [vmem:[%s204 + $0x34] sm:$0xf]
      %v233 = vld [vmem:[%s204 + $0x38] sm:$0xf]
      %v234 = vld [vmem:[%s204 + $0x3c] sm:$0xf]
      %v235 = vld [vmem:[%s1] sm:$0xf]
      %v236 = vld [vmem:[%s1 + $0x4] sm:$0xf]
      %v237 = vld [vmem:[%s1 + $0x8] sm:$0xf]
      %v238 = vld [vmem:[%s1 + $0xc] sm:$0xf]
      %v239 = vld [vmem:[%s1 + $0x10] sm:$0xf]
      %v240 = vld [vmem:[%s1 + $0x14] sm:$0xf]
      %v241 = vld [vmem:[%s1 + $0x18] sm:$0xf]
      %v242 = vld [vmem:[%s1 + $0x1c] sm:$0xf]
      %v243 = vld [vmem:[%s1 + $0x20] sm:$0xf]
      %v244 = vld [vmem:[%s1 + $0x24] sm:$0xf]
      %v245 = vld [vmem:[%s1 + $0x28] sm:$0xf]
      %v246 = vld [vmem:[%s1 + $0x2c] sm:$0xf]
      %v247 = vld [vmem:[%s1 + $0x30] sm:$0xf]
      %v248 = vld [vmem:[%s1 + $0x34] sm:$0xf]
      %v249 = vld [vmem:[%s1 + $0x38] sm:$0xf]
      %v250 = vld [vmem:[%s1 + $0x3c] sm:$0xf]
      %v267 = vunpack.c.l.b16 %v219
      %v268 = vunpack.c.l.b16 %v220
      %v269 = vunpack.c.l.b16 %v221
      %v270 = vunpack.c.l.b16 %v222
      %v271 = vunpack.c.l.b16 %v223
      %v272 = vunpack.c.l.b16 %v224
      %v273 = vunpack.c.l.b16 %v225
      %v274 = vunpack.c.l.b16 %v226
      %v275 = vunpack.c.l.b16 %v227
      %v276 = vunpack.c.l.b16 %v228
      %v277 = vunpack.c.l.b16 %v229
      %v278 = vunpack.c.l.b16 %v230
      %v279 = vunpack.c.l.b16 %v231
      %v280 = vunpack.c.l.b16 %v232
      %v281 = vunpack.c.l.b16 %v233
      %v282 = vunpack.c.l.b16 %v234
      %v283 = vpack.c.b16 %v268, %v267
      %v284 = vpack.c.b16 %v270, %v269
      %v285 = vpack.c.b16 %v272, %v271
      %v286 = vpack.c.b16 %v274, %v273
      %v287 = vpack.c.b16 %v276, %v275
      %v288 = vpack.c.b16 %v278, %v277
      %v289 = vpack.c.b16 %v280, %v279
      %v290 = vpack.c.b16 %v282, %v281
      %v315 = vunpack.c.l.b16 %v235
      %v316 = vunpack.c.l.b16 %v236
      %v317 = vunpack.c.l.b16 %v237
      %v318 = vunpack.c.l.b16 %v238
      %v319 = vunpack.c.l.b16 %v239
      %v320 = vunpack.c.l.b16 %v240
      %v321 = vunpack.c.l.b16 %v241
      %v322 = vunpack.c.l.b16 %v242
      %v323 = vunpack.c.l.b16 %v243
      %v324 = vunpack.c.l.b16 %v244
      %v325 = vunpack.c.l.b16 %v245
      %v326 = vunpack.c.l.b16 %v246
      %v327 = vunpack.c.l.b16 %v247
      %v328 = vunpack.c.l.b16 %v248
      %v329 = vunpack.c.l.b16 %v249
      %v330 = vunpack.c.l.b16 %v250
      %v331 = vpack.c.b16 %v316, %v315
      %v332 = vpack.c.b16 %v318, %v317
      %v333 = vpack.c.b16 %v320, %v319
      %v334 = vpack.c.b16 %v322, %v321
      %v335 = vpack.c.b16 %v324, %v323
      %v336 = vpack.c.b16 %v326, %v325
      %v337 = vpack.c.b16 %v328, %v327
      %v338 = vpack.c.b16 %v330, %v329
      %347 = vmatprep.subr.bf16.mxu0 0
      %348 = vmatpush1.bf16.msra.mxu0 %v338
      %349 = vmatprep.subr.bf16.mxu0 0
      %350 = vmatpush1.bf16.msra.mxu0 %v337
      %351 = vmatprep.subr.bf16.mxu0 0
      %352 = vmatpush1.bf16.msra.mxu0 %v336
      %353 = vmatprep.subr.bf16.mxu0 0
      %354 = vmatpush1.bf16.msra.mxu0 %v335
      %355 = vmatprep.subr.bf16.mxu0 0
      %356 = vmatpush1.bf16.msra.mxu0 %v334
      %357 = vmatprep.subr.bf16.mxu0 0
      %358 = vmatpush1.bf16.msra.mxu0 %v333
      %359 = vmatprep.subr.bf16.mxu0 0
      %360 = vmatpush1.bf16.msra.mxu0 %v332
      %361 = vmatprep.subr.bf16.mxu0 0
      %362 = vmatpush1.bf16.msra.mxu0 %v331
      %363 = vmatprep.subr.bf16.mxu0 0
      %364 = vmatpush2.bf16.msra.mxu0 0
      %365 = vmatprep.subr.bf16.mxu0 0
      %366 = vmatpush2.bf16.msra.mxu0 0
      %367 = vmatprep.subr.bf16.mxu0 0
      %368 = vmatpush2.bf16.msra.mxu0 0
      %369 = vmatprep.subr.bf16.mxu0 0
      %370 = vmatpush2.bf16.msra.mxu0 0
      %371 = vmatprep.subr.bf16.mxu0 0
      %372 = vmatpush2.bf16.msra.mxu0 0
      %373 = vmatprep.subr.bf16.mxu0 0
      %374 = vmatpush2.bf16.msra.mxu0 0
      %375 = vmatprep.subr.bf16.mxu0 0
      %376 = vmatpush2.bf16.msra.mxu0 0
      %377 = vmatprep.subr.bf16.mxu0 0
      %378 = vmatpush2.bf16.msra.mxu0 0
      %379 = vmatprep.mubr.bf16.mxu0 0
      %380 = vmatmul.mubr.bf16.gmra.mxu0 %v283
      %v381 = vpop.f32.mrf.mxu0
      %v382 = vadd.f32 0.0, %v381
      %v383 = vpop.f32.mrf.mxu0
      %v384 = vpop.f32.mrf.mxu0
      %v385 = vadd.f32 0.0, %v384
      %v386 = vpop.f32.mrf.mxu0
      %387 = vmatprep.mubr.bf16.mxu0 0
      %388 = vmatmul.mubr.bf16.gmra.mxu0 %v284
      %v389 = vpop.f32.mrf.mxu0
      %v390 = vadd.f32 0.0, %v389
      %v391 = vpop.f32.mrf.mxu0
      %v392 = vpop.f32.mrf.mxu0
      %v393 = vadd.f32 0.0, %v392
      %v394 = vpop.f32.mrf.mxu0
      %395 = vmatprep.mubr.bf16.mxu0 0
      %396 = vmatmul.mubr.bf16.gmra.mxu0 %v285
      %v397 = vpop.f32.mrf.mxu0
      %v398 = vadd.f32 0.0, %v397
      %v399 = vpop.f32.mrf.mxu0
      %v400 = vpop.f32.mrf.mxu0
      %v401 = vadd.f32 0.0, %v400
      %v402 = vpop.f32.mrf.mxu0
      %403 = vmatprep.mubr.bf16.mxu0 0
      %404 = vmatmul.mubr.bf16.gmra.mxu0 %v286
      %v405 = vpop.f32.mrf.mxu0
      %v406 = vadd.f32 0.0, %v405
      %v407 = vpop.f32.mrf.mxu0
      %v408 = vpop.f32.mrf.mxu0
      %v409 = vadd.f32 0.0, %v408
      %v410 = vpop.f32.mrf.mxu0
      %411 = vmatprep.mubr.bf16.mxu0 0
      %412 = vmatmul.mubr.bf16.gmra.mxu0 %v287
      %v413 = vpop.f32.mrf.mxu0
      %v414 = vadd.f32 0.0, %v413
      %v415 = vpop.f32.mrf.mxu0
      %v416 = vpop.f32.mrf.mxu0
      %v417 = vadd.f32 0.0, %v416
      %v418 = vpop.f32.mrf.mxu0
      %419 = vmatprep.mubr.bf16.mxu0 0
      %420 = vmatmul.mubr.bf16.gmra.mxu0 %v288
      %v421 = vpop.f32.mrf.mxu0
      %v422 = vadd.f32 0.0, %v421
      %v423 = vpop.f32.mrf.mxu0
      %v424 = vpop.f32.mrf.mxu0
      %v425 = vadd.f32 0.0, %v424
      %v426 = vpop.f32.mrf.mxu0
      %427 = vmatprep.mubr.bf16.mxu0 0
      %428 = vmatmul.mubr.bf16.gmra.mxu0 %v289
      %v429 = vpop.f32.mrf.mxu0
      %v430 = vadd.f32 0.0, %v429
      %v431 = vpop.f32.mrf.mxu0
      %v432 = vpop.f32.mrf.mxu0
      %v433 = vadd.f32 0.0, %v432
      %v434 = vpop.f32.mrf.mxu0
      %435 = vmatprep.mubr.bf16.mxu0 0
      %436 = vmatmul.mubr.bf16.gmra.mxu0 %v290
      %v437 = vpop.f32.mrf.mxu0
      %v438 = vadd.f32 0.0, %v437
      %v439 = vpop.f32.mrf.mxu0
      %v440 = vpop.f32.mrf.mxu0
      %v441 = vadd.f32 0.0, %v440
      %v442 = vpop.f32.mrf.mxu0
      %443 = vdwg.mxu0
      %v444 = vpack.c.bf16 %v385, %v382
      %v445 = vpack.c.bf16 %v393, %v390
      %v446 = vpack.c.bf16 %v401, %v398
      %v447 = vpack.c.bf16 %v409, %v406
      %v448 = vpack.c.bf16 %v417, %v414
      %v449 = vpack.c.bf16 %v425, %v422
      %v450 = vpack.c.bf16 %v433, %v430
      %v451 = vpack.c.bf16 %v441, %v438
      %v460 = vunpack.c.l.b16 %v444
      %v461 = vunpack.c.h.b16 %v444
      %v462 = vunpack.c.l.b16 %v445
      %v463 = vunpack.c.h.b16 %v445
      %v464 = vunpack.c.l.b16 %v446
      %v465 = vunpack.c.h.b16 %v446
      %v466 = vunpack.c.l.b16 %v447
      %v467 = vunpack.c.h.b16 %v447
      %v468 = vunpack.c.l.b16 %v448
      %v469 = vunpack.c.h.b16 %v448
      %v470 = vunpack.c.l.b16 %v449
      %v471 = vunpack.c.h.b16 %v449
      %v472 = vunpack.c.l.b16 %v450
      %v473 = vunpack.c.h.b16 %v450
      %v474 = vunpack.c.l.b16 %v451
      %v475 = vunpack.c.h.b16 %v451
      %v476 = vpack.c.b16 %v460, %v460
      %v477 = vpack.c.b16 %v461, %v461
      %v478 = vpack.c.b16 %v462, %v462
      %v479 = vpack.c.b16 %v463, %v463
      %v480 = vpack.c.b16 %v464, %v464
      %v481 = vpack.c.b16 %v465, %v465
      %v482 = vpack.c.b16 %v466, %v466
      %v483 = vpack.c.b16 %v467, %v467
      %v484 = vpack.c.b16 %v468, %v468
      %v485 = vpack.c.b16 %v469, %v469
      %v486 = vpack.c.b16 %v470, %v470
      %v487 = vpack.c.b16 %v471, %v471
      %v488 = vpack.c.b16 %v472, %v472
      %v489 = vpack.c.b16 %v473, %v473
      %v490 = vpack.c.b16 %v474, %v474
      %v491 = vpack.c.b16 %v475, %v475
      %vm508 = vcmask 257024
      %509 = vst.msk [vmem:[%s210] sm:$0xf] %vm508, %v476
      %510 = vst.msk [vmem:[%s210 + $0x4] sm:$0xf] %vm508, %v477
      %511 = vst.msk [vmem:[%s210 + $0x8] sm:$0xf] %vm508, %v478
      %512 = vst.msk [vmem:[%s210 + $0xc] sm:$0xf] %vm508, %v479
      %513 = vst.msk [vmem:[%s210 + $0x10] sm:$0xf] %vm508, %v480
      %514 = vst.msk [vmem:[%s210 + $0x14] sm:$0xf] %vm508, %v481
      %515 = vst.msk [vmem:[%s210 + $0x18] sm:$0xf] %vm508, %v482
      %516 = vst.msk [vmem:[%s210 + $0x1c] sm:$0xf] %vm508, %v483
      %517 = vst.msk [vmem:[%s210 + $0x20] sm:$0xf] %vm508, %v484
      %518 = vst.msk [vmem:[%s210 + $0x24] sm:$0xf] %vm508, %v485
      %519 = vst.msk [vmem:[%s210 + $0x28] sm:$0xf] %vm508, %v486
      %520 = vst.msk [vmem:[%s210 + $0x2c] sm:$0xf] %vm508, %v487
      %521 = vst.msk [vmem:[%s210 + $0x30] sm:$0xf] %vm508, %v488
      %522 = vst.msk [vmem:[%s210 + $0x34] sm:$0xf] %vm508, %v489
      %523 = vst.msk [vmem:[%s210 + $0x38] sm:$0xf] %vm508, %v490
      %524 = vst.msk [vmem:[%s210 + $0x3c] sm:$0xf] %vm508, %v491
      %vm525 = vcmask 261120
      %v526 = vsel %vm525, %v382, 0.0
      %v527 = vsel %vm525, %v385, 0.0
      %v528 = vadd.f32 %v526, %v527
      %v529 = vsel %vm525, %v390, 0.0
      %v530 = vadd.f32 %v528, %v529
      %v531 = vsel %vm525, %v393, 0.0
      %v532 = vadd.f32 %v530, %v531
      %v533 = vsel %vm525, %v398, 0.0
      %v534 = vadd.f32 %v532, %v533
      %v535 = vsel %vm525, %v401, 0.0
      %v536 = vadd.f32 %v534, %v535
      %v537 = vsel %vm525, %v406, 0.0
      %v538 = vadd.f32 %v536, %v537
      %v539 = vsel %vm525, %v409, 0.0
      %v540 = vadd.f32 %v538, %v539
      %v541 = vsel %vm525, %v414, 0.0
      %v542 = vadd.f32 %v540, %v541
      %v543 = vsel %vm525, %v417, 0.0
      %v544 = vadd.f32 %v542, %v543
      %v545 = vsel %vm525, %v422, 0.0
      %v546 = vadd.f32 %v544, %v545
      %v547 = vsel %vm525, %v425, 0.0
      %v548 = vadd.f32 %v546, %v547
      %v549 = vsel %vm525, %v430, 0.0
      %v550 = vadd.f32 %v548, %v549
      %v551 = vsel %vm525, %v433, 0.0
      %v552 = vadd.f32 %v550, %v551
      %v553 = vsel %vm525, %v438, 0.0
      %v554 = vadd.f32 %v552, %v553
      %v555 = vsel %vm525, %v441, 0.0
      %v556 = vadd.f32 %v554, %v555
      %v557 = vrot.slane %v556, 4
      %v558 = vadd.f32 %v556, %v557
      %v559 = vrot.slane %v558, 2
      %v560 = vadd.f32 %v558, %v559
      %v561 = vrot.slane %v560, 1
      %v562 = vadd.f32 %v560, %v561
      %vm563 = vcmask 253952
      %564 = vst.msk [vmem:[%s214] sm:$0x1] %vm563, %v562
      %v565 = vmul.f32 %v382, %v382
      %v566 = vmul.f32 %v385, %v385
      %v567 = vmul.f32 %v390, %v390
      %v568 = vmul.f32 %v393, %v393
      %v569 = vmul.f32 %v398, %v398
      %v570 = vmul.f32 %v401, %v401
      %v571 = vmul.f32 %v406, %v406
      %v572 = vmul.f32 %v409, %v409
      %v573 = vmul.f32 %v414, %v414
      %v574 = vmul.f32 %v417, %v417
      %v575 = vmul.f32 %v422, %v422
      %v576 = vmul.f32 %v425, %v425
      %v577 = vmul.f32 %v430, %v430
      %v578 = vmul.f32 %v433, %v433
      %v579 = vmul.f32 %v438, %v438
      %v580 = vmul.f32 %v441, %v441
      %v581 = vsel %vm525, %v565, 0.0
      %v582 = vsel %vm525, %v566, 0.0
      %v583 = vadd.f32 %v581, %v582
      %v584 = vsel %vm525, %v567, 0.0
      %v585 = vadd.f32 %v583, %v584
      %v586 = vsel %vm525, %v568, 0.0
      %v587 = vadd.f32 %v585, %v586
      %v588 = vsel %vm525, %v569, 0.0
      %v589 = vadd.f32 %v587, %v588
      %v590 = vsel %vm525, %v570, 0.0
      %v591 = vadd.f32 %v589, %v590
      %v592 = vsel %vm525, %v571, 0.0
      %v593 = vadd.f32 %v591, %v592
      %v594 = vsel %vm525, %v572, 0.0
      %v595 = vadd.f32 %v593, %v594
      %v596 = vsel %vm525, %v573, 0.0
      %v597 = vadd.f32 %v595, %v596
      %v598 = vsel %vm525, %v574, 0.0
      %v599 = vadd.f32 %v597, %v598
      %v600 = vsel %vm525, %v575, 0.0
      %v601 = vadd.f32 %v599, %v600
      %v602 = vsel %vm525, %v576, 0.0
      %v603 = vadd.f32 %v601, %v602
      %v604 = vsel %vm525, %v577, 0.0
      %v605 = vadd.f32 %v603, %v604
      %v606 = vsel %vm525, %v578, 0.0
      %v607 = vadd.f32 %v605, %v606
      %v608 = vsel %vm525, %v579, 0.0
      %v609 = vadd.f32 %v607, %v608
      %v610 = vsel %vm525, %v580, 0.0
      %v611 = vadd.f32 %v609, %v610
      %v612 = vrot.slane %v611, 4
      %v613 = vadd.f32 %v611, %v612
      %v614 = vrot.slane %v613, 2
      %v615 = vadd.f32 %v613, %v614
      %v616 = vrot.slane %v615, 1
      %v617 = vadd.f32 %v615, %v616
      %618 = vst.msk [vmem:[%s217] sm:$0x1] %vm563, %v617
      %s619 = smul.u32 16, %s16
      %p620 = scmp.lt.s32.totalorder %s619, 63
      %s621 = scalar_select %p620, %s619, 63
      %s622 = smul.addr %s621, 4
      %s623 = scalar_lea.vmem %s2, %s622
      %p624 = scmp.lt.s32.totalorder %s16, 3
      %s625 = scalar_select %p624, %s16, 3
      %s626 = scalar_lea.vmem %s3, %s625
      %p627 = scmp.lt.s32.totalorder %s16, 3
      %s628 = scalar_select %p627, %s16, 3
      %s629 = scalar_lea.vmem %s4, %s628
      // Predicated region
      $region29: #{bottleneck_se.4} parent=27 // pred_check
        %p630 = pneg %p81
      $region30: #{bottleneck_se.4} parent=27 // pred_check_branch
        %632 = sbr.rel (%p630) target = $region32
      $region31: #{bottleneck_se.4} parent=27 // pred_region
        %s633 = smul.u32 16, %s16
      $region32: #{bottleneck_se.4} parent=27 // pred_fallthru
        _
      // Predicated region
      $region33: #{bottleneck_se.4} parent=27 // pred_check
        %p634 = pneg %p107
      $region34: #{bottleneck_se.4} parent=27 // pred_check_branch
        %636 = sbr.rel (%p634) target = $region36
      $region35: #{bottleneck_se.4} parent=27 // pred_region
        _
      $region36: #{bottleneck_se.4} parent=27 // pred_fallthru
        _
      // Predicated region
      $region37: #{bottleneck_se.4} parent=27 // pred_check
        %p637 = pneg %p133
      $region38: #{bottleneck_se.4} parent=27 // pred_check_branch
        %639 = sbr.rel (%p637) target = $region40
      $region39: #{bottleneck_se.4} parent=27 // pred_region
        _
      $region40: #{bottleneck_se.4} parent=27 // pred_fallthru
        _
    $region28: #{bottleneck_se.4} parent=5 // pred_fallthru
      _
    %p640 = scmp.le.s32.totalorder 2, %s11
    // Predicated region
    $region41: #{bottleneck_se.4} parent=5 // pred_check
      %p641 = pneg %p640
    $region42: #{bottleneck_se.4} parent=5 // pred_check_branch
      %643 = sbr.rel (%p641) target = $region44
    $region43: #{bottleneck_se.4} parent=5 // pred_region
      %s644 = ssub.s32 %s11, 2
      // Predicated region
      $region45: #{bottleneck_se.4} parent=43 // pred_check
        %p645 = pneg %p87
      $region46: #{bottleneck_se.4} parent=43 // pred_check_branch
        %647 = sbr.rel (%p645) target = $region48
      $region47: #{bottleneck_se.4} parent=43 // pred_region
        %s648 = smul.u32 16, %s17
        %p649 = scmp.lt.s32.totalorder %s648, 63
        %s650 = scalar_select %p649, %s648, 63
        %s651 = smul.addr %s650, 4
        %s652 = scalar_lea.vmem %s2, %s651
      $region48: #{bottleneck_se.4} parent=43 // pred_fallthru
        _
      // Predicated region
      $region49: #{bottleneck_se.4} parent=43 // pred_check
        %p653 = pneg %p113
      $region50: #{bottleneck_se.4} parent=43 // pred_check_branch
        %655 = sbr.rel (%p653) target = $region52
      $region51: #{bottleneck_se.4} parent=43 // pred_region
        %p656 = scmp.lt.s32.totalorder %s17, 3
        %s657 = scalar_select %p656, %s17, 3
        %s658 = scalar_lea.vmem %s3, %s657
      $region52: #{bottleneck_se.4} parent=43 // pred_fallthru
        _
      // Predicated region
      $region53: #{bottleneck_se.4} parent=43 // pred_check
        %p659 = pneg %p139
      $region54: #{bottleneck_se.4} parent=43 // pred_check_branch
        %661 = sbr.rel (%p659) target = $region56
      $region55: #{bottleneck_se.4} parent=43 // pred_region
        %p662 = scmp.lt.s32.totalorder %s17, 3
        %s663 = scalar_select %p662, %s17, 3
        %s664 = scalar_lea.vmem %s4, %s663
      $region56: #{bottleneck_se.4} parent=43 // pred_fallthru
        _
    $region44: #{bottleneck_se.4} parent=5 // pred_fallthru
      _
  $region6: #{bottleneck_se.4} parent=0 // loop_footer
    %s15 = sadd.s32 1, %s11
  $region7: #{bottleneck_se.4} parent=0 // loop_footer_branch
    %10 = sbr.rel target = $region3
  $region8: #{bottleneck_se.4} parent=0 // loop_exit
    _

// kernel: bottleneck_se.6
$region0: #{bottleneck_se.6}
  #allocation0 [shape = 'u32[]', space=smem, size = 0x4, offset = 0x4, fixed_abs, tag = 'smem constant byte address 0x4 - core index']
  #allocation1 [shape = 'u32[144,128]{1,0:T(1,128)}', space=vmem, size = 0x12000, scoped, tag = 'internal scratch']
  %s0 = inlined_call_operand.vmem [shape: bf16[2,256,32], index: 0, kind: input, shape index: {}]
  %s1 = inlined_call_operand.vmem [shape: f32[1,32], index: 1, kind: input, shape index: {}]
  %s2 = inlined_call_operand.vmem [shape: f32[1,32], index: 2, kind: input, shape index: {}]
  %s3 = inlined_call_operand.vmem [shape: bf16[32,128], index: 3, kind: input, shape index: {}]
  %s4 = inlined_call_operand.vmem [shape: bf16[2,256,128], index: 4, kind: output, shape index: {0}]
  %s5 = inlined_call_operand.vmem [shape: f32[4,1,128], index: 5, kind: output, shape index: {1}]
  %s6 = inlined_call_operand.vmem [shape: f32[4,1,128], index: 6, kind: output, shape index: {2}]
  %7 = xla_tuple %s4, %s5, %s6
  %s8 = sld [smem:[#allocation0]]
  $region65: #{bottleneck_se.6} parent=0
    _
  %s10 = ssub.s32 1, %s8
  %s11 = scalar_select 0, %s10, %s8
  loop: start=0, step=1, limit=6
  $region2: #{bottleneck_se.6} parent=0 // loop_pre_header
    _
  $region3: #{bottleneck_se.6} parent=0 // loop_header
    %s13 = sphi 0, %s17
    %p14 = scmp.ge.s32.totalorder %s13, 6
    %s20 = sphi 0, %s32
    %s21 = sphi 0, %s28
    %s22 = sphi 0, %s20
    %s23 = sphi 0, %s21
    %s24 = sphi 0, %s22
    %s25 = sphi 0, %s23
    %s37 = sphi 0, %s39
    %s40 = sphi 0, %s37
    %s41 = sphi 0, %s40
    %s57 = sphi 0, %s41
    %s61 = sphi 0, %s61
    %s63 = sphi 0, %s61
    %s64 = sphi 0, %s63
    %s78 = sphi 0, %s64
    %s82 = sphi 0, %s82
    %s84 = sphi 0, %s82
    %s85 = sphi 0, %s84
    %s99 = sphi 0, %s85
    %s103 = sphi 0, %s103
    %s105 = sphi 0, %s103
    %s106 = sphi 0, %s105
    %s120 = sphi 0, %s106
    %s128 = sphi 0, %s130
    %s131 = sphi 0, %s128
    %s132 = sphi 0, %s131
    %s148 = sphi 0, %s132
    %s158 = sphi 0, %s160
    %s161 = sphi 0, %s158
    %s162 = sphi 0, %s161
    %s178 = sphi 0, %s162
    %s188 = sphi 0, %s190
    %s191 = sphi 0, %s188
    %s192 = sphi 0, %s191
    %s208 = sphi 0, %s192
  $region4: #{bottleneck_se.6} parent=0 // loop_header_branch
    %16 = sbr.rel (%p14) target = $region8
  $region5: #{bottleneck_se.6} parent=0 // loop_body
    %s18 = ssub.s32 %s13, 1
    %s19 = ssub.s32 %s13, 2
    %s26 = sadd.s32 1, %s21
    %p27 = scmp.ge.s32.totalorder %s26, 2
    %s28 = scalar_select %p27, 0, %s26
    %s29 = sadd.s32 1, %s20
    %s30 = scalar_select %p27, %s29, %s20
    %p31 = scmp.ge.s32.totalorder %s30, 2
    %s32 = scalar_select %p31, 0, %s30
    %s33 = ssub.s32 %s20, %s32
    %s34 = ssub.s32 %s21, %s28
    %s35 = sor.u32 %s33, %s34
    %p36 = scmp.eq.s32.totalorder %s35, 0
    %s38 = sadd.s32 %s37, 1
    %s39 = scalar_select %p36, %s37, %s38
    %p42 = pneg %p36
    %p43 = scmp.eq.s32.totalorder %s13, 3
    %p44 = por %p42, %p43
    %p45 = scmp.ne.s32.totalorder %s37, %s40
    %p46 = scmp.eq.s32.totalorder %s13, 0
    %p47 = por %p45, %p46
    %p48 = scmp.ne.s32.totalorder %s37, %s40
    %p49 = scmp.eq.s32.totalorder %s18, 3
    %p50 = por %p48, %p49
    %p51 = scmp.ne.s32.totalorder %s40, %s41
    %p52 = scmp.eq.s32.totalorder %s18, 0
    %p53 = por %p51, %p52
    %p54 = scmp.ne.s32.totalorder %s40, %s41
    %p55 = scmp.eq.s32.totalorder %s19, 3
    %p56 = por %p54, %p55
    %p58 = scmp.ne.s32.totalorder %s41, %s57
    %p59 = scmp.eq.s32.totalorder %s19, 0
    %p60 = por %p58, %p59
    %s62 = sadd.s32 %s61, 1
    %p65 = scmp.eq.s32.totalorder %s13, 3
    %p66 = scmp.ne.s32.totalorder %s61, %s63
    %p67 = scmp.eq.s32.totalorder %s13, 0
    %p68 = por %p66, %p67
    %p69 = scmp.ne.s32.totalorder %s61, %s63
    %p70 = scmp.eq.s32.totalorder %s18, 3
    %p71 = por %p69, %p70
    %p72 = scmp.ne.s32.totalorder %s63, %s64
    %p73 = scmp.eq.s32.totalorder %s18, 0
    %p74 = por %p72, %p73
    %p75 = scmp.ne.s32.totalorder %s63, %s64
    %p76 = scmp.eq.s32.totalorder %s19, 3
    %p77 = por %p75, %p76
    %p79 = scmp.ne.s32.totalorder %s64, %s78
    %p80 = scmp.eq.s32.totalorder %s19, 0
    %p81 = por %p79, %p80
    %s83 = sadd.s32 %s82, 1
    %p86 = scmp.eq.s32.totalorder %s13, 3
    %p87 = scmp.ne.s32.totalorder %s82, %s84
    %p88 = scmp.eq.s32.totalorder %s13, 0
    %p89 = por %p87, %p88
    %p90 = scmp.ne.s32.totalorder %s82, %s84
    %p91 = scmp.eq.s32.totalorder %s18, 3
    %p92 = por %p90, %p91
    %p93 = scmp.ne.s32.totalorder %s84, %s85
    %p94 = scmp.eq.s32.totalorder %s18, 0
    %p95 = por %p93, %p94
    %p96 = scmp.ne.s32.totalorder %s84, %s85
    %p97 = scmp.eq.s32.totalorder %s19, 3
    %p98 = por %p96, %p97
    %p100 = scmp.ne.s32.totalorder %s85, %s99
    %p101 = scmp.eq.s32.totalorder %s19, 0
    %p102 = por %p100, %p101
    %s104 = sadd.s32 %s103, 1
    %p107 = scmp.eq.s32.totalorder %s13, 3
    %p108 = scmp.ne.s32.totalorder %s103, %s105
    %p109 = scmp.eq.s32.totalorder %s13, 0
    %p110 = por %p108, %p109
    %p111 = scmp.ne.s32.totalorder %s103, %s105
    %p112 = scmp.eq.s32.totalorder %s18, 3
    %p113 = por %p111, %p112
    %p114 = scmp.ne.s32.totalorder %s105, %s106
    %p115 = scmp.eq.s32.totalorder %s18, 0
    %p116 = por %p114, %p115
    %p117 = scmp.ne.s32.totalorder %s105, %s106
    %p118 = scmp.eq.s32.totalorder %s19, 3
    %p119 = por %p117, %p118
    %p121 = scmp.ne.s32.totalorder %s106, %s120
    %p122 = scmp.eq.s32.totalorder %s19, 0
    %p123 = por %p121, %p122
    %s124 = ssub.s32 %s20, %s32
    %s125 = ssub.s32 %s21, %s28
    %s126 = sor.u32 %s124, %s125
    %p127 = scmp.eq.s32.totalorder %s126, 0
    %s129 = sadd.s32 %s128, 1
    %s130 = scalar_select %p127, %s128, %s129
    %p133 = pneg %p127
    %p134 = scmp.eq.s32.totalorder %s13, 3
    %p135 = por %p133, %p134
    %p136 = scmp.ne.s32.totalorder %s128, %s131
    %p137 = scmp.eq.s32.totalorder %s13, 0
    %p138 = por %p136, %p137
    %p139 = scmp.ne.s32.totalorder %s128, %s131
    %p140 = scmp.eq.s32.totalorder %s18, 3
    %p141 = por %p139, %p140
    %p142 = scmp.ne.s32.totalorder %s131, %s132
    %p143 = scmp.eq.s32.totalorder %s18, 0
    %p144 = por %p142, %p143
    %p145 = scmp.ne.s32.totalorder %s131, %s132
    %p146 = scmp.eq.s32.totalorder %s19, 3
    %p147 = por %p145, %p146
    %p149 = scmp.ne.s32.totalorder %s132, %s148
    %p150 = scmp.eq.s32.totalorder %s19, 0
    %p151 = por %p149, %p150
    %s152 = smul.u32 %s20, 2
    %s153 = sadd.s32 %s152, %s21
    %s154 = smul.u32 %s32, 2
    %s155 = sadd.s32 %s154, %s28
    %s156 = ssub.s32 %s153, %s155
    %p157 = scmp.eq.s32.totalorder %s156, 0
    %s159 = sadd.s32 %s158, 1
    %s160 = scalar_select %p157, %s158, %s159
    %p163 = pneg %p157
    %p164 = scmp.eq.s32.totalorder %s13, 3
    %p165 = por %p163, %p164
    %p166 = scmp.ne.s32.totalorder %s158, %s161
    %p167 = scmp.eq.s32.totalorder %s13, 0
    %p168 = por %p166, %p167
    %p169 = scmp.ne.s32.totalorder %s158, %s161
    %p170 = scmp.eq.s32.totalorder %s18, 3
    %p171 = por %p169, %p170
    %p172 = scmp.ne.s32.totalorder %s161, %s162
    %p173 = scmp.eq.s32.totalorder %s18, 0
    %p174 = por %p172, %p173
    %p175 = scmp.ne.s32.totalorder %s161, %s162
    %p176 = scmp.eq.s32.totalorder %s19, 3
    %p177 = por %p175, %p176
    %p179 = scmp.ne.s32.totalorder %s162, %s178
    %p180 = scmp.eq.s32.totalorder %s19, 0
    %p181 = por %p179, %p180
    %s182 = smul.u32 %s20, 2
    %s183 = sadd.s32 %s182, %s21
    %s184 = smul.u32 %s32, 2
    %s185 = sadd.s32 %s184, %s28
    %s186 = ssub.s32 %s183, %s185
    %p187 = scmp.eq.s32.totalorder %s186, 0
    %s189 = sadd.s32 %s188, 1
    %s190 = scalar_select %p187, %s188, %s189
    %p193 = pneg %p187
    %p194 = scmp.eq.s32.totalorder %s13, 3
    %p195 = por %p193, %p194
    %p196 = scmp.ne.s32.totalorder %s188, %s191
    %p197 = scmp.eq.s32.totalorder %s13, 0
    %p198 = por %p196, %p197
    %p199 = scmp.ne.s32.totalorder %s188, %s191
    %p200 = scmp.eq.s32.totalorder %s18, 3
    %p201 = por %p199, %p200
    %p202 = scmp.ne.s32.totalorder %s191, %s192
    %p203 = scmp.eq.s32.totalorder %s18, 0
    %p204 = por %p202, %p203
    %p205 = scmp.ne.s32.totalorder %s191, %s192
    %p206 = scmp.eq.s32.totalorder %s19, 3
    %p207 = por %p205, %p206
    %p209 = scmp.ne.s32.totalorder %s192, %s208
    %p210 = scmp.eq.s32.totalorder %s19, 0
    %p211 = por %p209, %p210
    %p212 = scmp.le.s32.totalorder 1, %s13
    %p213 = scmp.lt.s32.totalorder %s13, 5
    %p214 = pnand %p212, %p213
    %p215 = pneg %p214
    // Predicated region
    $region9: #{bottleneck_se.6} parent=5 // pred_check
      _
    $region10: #{bottleneck_se.6} parent=5 // pred_check_branch
      %217 = sbr.rel (%p214) target = $region12
    $region11: #{bottleneck_se.6} parent=5 // pred_region
      %s218 = ssub.s32 %s13, 1
      // Predicated region
      $region13: #{bottleneck_se.6} parent=11 // pred_check
        %p219 = pneg %p74
      $region14: #{bottleneck_se.6} parent=11 // pred_check_branch
        %221 = sbr.rel (%p219) target = $region16
      $region15: #{bottleneck_se.6} parent=11 // pred_region
        _
      $region16: #{bottleneck_se.6} parent=11 // pred_fallthru
        _
      // Predicated region
      $region17: #{bottleneck_se.6} parent=11 // pred_check
        %p222 = pneg %p95
      $region18: #{bottleneck_se.6} parent=11 // pred_check_branch
        %224 = sbr.rel (%p222) target = $region20
      $region19: #{bottleneck_se.6} parent=11 // pred_region
        _
      $region20: #{bottleneck_se.6} parent=11 // pred_fallthru
        _
      // Predicated region
      $region21: #{bottleneck_se.6} parent=11 // pred_check
        %p225 = pneg %p116
      $region22: #{bottleneck_se.6} parent=11 // pred_check_branch
        %227 = sbr.rel (%p225) target = $region24
      $region23: #{bottleneck_se.6} parent=11 // pred_region
        _
      $region24: #{bottleneck_se.6} parent=11 // pred_fallthru
        _
    $region12: #{bottleneck_se.6} parent=5 // pred_fallthru
      _
    %p228 = scmp.lt.s32.totalorder %s13, 4
    // Predicated region
    $region25: #{bottleneck_se.6} parent=5 // pred_check
      %p229 = pneg %p228
    $region26: #{bottleneck_se.6} parent=5 // pred_check_branch
      %231 = sbr.rel (%p229) target = $region28
    $region27: #{bottleneck_se.6} parent=5 // pred_region
      // Predicated region
      $region29: #{bottleneck_se.6} parent=27 // pred_check
        %p232 = pneg %p47
      $region30: #{bottleneck_se.6} parent=27 // pred_check_branch
        %234 = sbr.rel (%p232) target = $region32
      $region31: #{bottleneck_se.6} parent=27 // pred_region
        %s235 = smul.u32 16, %s21
        %p236 = scmp.lt.s32.totalorder %s20, 1
        %s237 = scalar_select %p236, %s20, 1
        %p238 = scmp.lt.s32.totalorder %s235, 31
        %s239 = scalar_select %p238, %s235, 31
        %s240 = smul.addr %s237, 32
        %s241 = sadd.s32 %s239, %s240
        %s242 = smul.addr %s241, 4
        %s243 = scalar_lea.vmem %s0, %s242
        %s244 = smul.u32 16, %s21
      $region32: #{bottleneck_se.6} parent=27 // pred_fallthru
        _
    $region28: #{bottleneck_se.6} parent=5 // pred_fallthru
      _
    %p245 = scmp.le.s32.totalorder 1, %s13
    %p246 = scmp.lt.s32.totalorder %s13, 5
    %p247 = pnand %p245, %p246
    %p248 = pneg %p247
    // Predicated region
    $region33: #{bottleneck_se.6} parent=5 // pred_check
      _
    $region34: #{bottleneck_se.6} parent=5 // pred_check_branch
      %250 = sbr.rel (%p247) target = $region36
    $region35: #{bottleneck_se.6} parent=5 // pred_region
      %s251 = ssub.s32 %s13, 1
      %s252 = smul.u32 16, %s23
      %p253 = scmp.lt.s32.totalorder %s22, 1
      %s254 = scalar_select %p253, %s22, 1
      %p255 = scmp.lt.s32.totalorder %s252, 31
      %s256 = scalar_select %p255, %s252, 31
      %s257 = smul.addr %s254, 32
      %s258 = sadd.s32 %s256, %s257
      %s259 = smul.addr %s258, 4
      %s260 = scalar_lea.vmem %s0, %s259
      %p261 = pneg %p53
      %p262 = pneg %p50
      %p263 = pneg %p74
      %p264 = pneg %p71
      %p265 = pneg %p95
      %p266 = pneg %p92
      %p267 = pneg %p116
      %p268 = pneg %p113
      %p269 = pneg %p144
      %p270 = pneg %p141
      %s271 = smul.u32 16, %s23
      %p272 = scmp.lt.s32.totalorder %s22, 1
      %s273 = scalar_select %p272, %s22, 1
      %p274 = scmp.lt.s32.totalorder %s271, 31
      %s275 = scalar_select %p274, %s271, 31
      %s276 = smul.addr %s273, 32
      %s277 = sadd.s32 %s275, %s276
      %s278 = smul.addr %s277, 4
      %s279 = scalar_lea.vmem %s4, %s278
      %p280 = pneg %p174
      %p281 = pneg %p171
      %s282 = smul.u32 %s22, 2
      %s283 = sadd.s32 %s282, %s23
      %p284 = scmp.lt.s32.totalorder %s283, 3
      %s285 = scalar_select %p284, %s283, 3
      %s286 = scalar_lea.vmem %s5, %s285
      %p287 = pneg %p204
      %p288 = pneg %p201
      %s289 = smul.u32 %s22, 2
      %s290 = sadd.s32 %s289, %s23
      %p291 = scmp.lt.s32.totalorder %s290, 3
      %s292 = scalar_select %p291, %s290, 3
      %s293 = scalar_lea.vmem %s6, %s292
      %s294 = smul.u32 16, %s23
      %p295 = scmp.lt.s32.totalorder %s22, 1
      %s296 = scalar_select %p295, %s22, 1
      %p297 = scmp.lt.s32.totalorder %s294, 31
      %s298 = scalar_select %p297, %s294, 31
      %s299 = smul.addr %s296, 32
      %s300 = sadd.s32 %s298, %s299
      %s301 = smul.addr %s300, 4
      %s302 = scalar_lea.vmem %s0, %s301
      %s303 = smul.u32 16, %s23
      %s304 = smul.u32 16, %s23
      %p305 = scmp.lt.s32.totalorder %s22, 1
      %s306 = scalar_select %p305, %s22, 1
      %p307 = scmp.lt.s32.totalorder %s304, 31
      %s308 = scalar_select %p307, %s304, 31
      %s309 = smul.addr %s306, 32
      %s310 = sadd.s32 %s308, %s309
      %s311 = smul.addr %s310, 4
      %s312 = scalar_lea.vmem %s4, %s311
      %s313 = smul.u32 16, %s23
      %s314 = smul.u32 %s22, 2
      %s315 = sadd.s32 %s314, %s23
      %p316 = scmp.lt.s32.totalorder %s315, 3
      %s317 = scalar_select %p316, %s315, 3
      %s318 = scalar_lea.vmem %s5, %s317
      %s319 = smul.u32 %s22, 2
      %s320 = sadd.s32 %s319, %s23
      %s321 = smul.u32 %s22, 2
      %s322 = sadd.s32 %s321, %s23
      %p323 = scmp.lt.s32.totalorder %s322, 3
      %s324 = scalar_select %p323, %s322, 3
      %s325 = scalar_lea.vmem %s6, %s324
      %s326 = smul.u32 %s22, 2
      %s327 = sadd.s32 %s326, %s23
      %v329 = vld [vmem:[%s302] sm:$0xf]
      %v330 = vld [vmem:[%s302 + $0x4] sm:$0xf]
      %v331 = vld [vmem:[%s302 + $0x8] sm:$0xf]
      %v332 = vld [vmem:[%s302 + $0xc] sm:$0xf]
      %v333 = vld [vmem:[%s302 + $0x10] sm:$0xf]
      %v334 = vld [vmem:[%s302 + $0x14] sm:$0xf]
      %v335 = vld [vmem:[%s302 + $0x18] sm:$0xf]
      %v336 = vld [vmem:[%s302 + $0x1c] sm:$0xf]
      %v337 = vld [vmem:[%s302 + $0x20] sm:$0xf]
      %v338 = vld [vmem:[%s302 + $0x24] sm:$0xf]
      %v339 = vld [vmem:[%s302 + $0x28] sm:$0xf]
      %v340 = vld [vmem:[%s302 + $0x2c] sm:$0xf]
      %v341 = vld [vmem:[%s302 + $0x30] sm:$0xf]
      %v342 = vld [vmem:[%s302 + $0x34] sm:$0xf]
      %v343 = vld [vmem:[%s302 + $0x38] sm:$0xf]
      %v344 = vld [vmem:[%s302 + $0x3c] sm:$0xf]
      %v345 = vunpack.c.l.bf16 %v329
      %v346 = vunpack.c.l.bf16 %v330
      %v347 = vunpack.c.l.bf16 %v331
      %v348 = vunpack.c.l.bf16 %v332
      %v349 = vunpack.c.l.bf16 %v333
      %v350 = vunpack.c.l.bf16 %v334
      %v351 = vunpack.c.l.bf16 %v335
      %v352 = vunpack.c.l.bf16 %v336
      %v353 = vunpack.c.l.bf16 %v337
      %v354 = vunpack.c.l.bf16 %v338
      %v355 = vunpack.c.l.bf16 %v339
      %v356 = vunpack.c.l.bf16 %v340
      %v357 = vunpack.c.l.bf16 %v341
      %v358 = vunpack.c.l.bf16 %v342
      %v359 = vunpack.c.l.bf16 %v343
      %v360 = vunpack.c.l.bf16 %v344
      %v361 = vld [vmem:[%s1] sm:$0x1]
      %v363 = vlaneseq
      %v364 = vshrl.u32 %v363, 7
      %v365 = vsub.s32 0, %v364
      %v366 = vrot.slane %v361, %v365
      %v368 = vmul.f32 %v345, %v366
      %v369 = vmul.f32 %v346, %v366
      %v370 = vmul.f32 %v347, %v366
      %v371 = vmul.f32 %v348, %v366
      %v372 = vmul.f32 %v349, %v366
      %v373 = vmul.f32 %v350, %v366
      %v374 = vmul.f32 %v351, %v366
      %v375 = vmul.f32 %v352, %v366
      %v376 = vmul.f32 %v353, %v366
      %v377 = vmul.f32 %v354, %v366
      %v378 = vmul.f32 %v355, %v366
      %v379 = vmul.f32 %v356, %v366
      %v380 = vmul.f32 %v357, %v366
      %v381 = vmul.f32 %v358, %v366
      %v382 = vmul.f32 %v359, %v366
      %v383 = vmul.f32 %v360, %v366
      %v384 = vld [vmem:[%s2] sm:$0x1]
      %v386 = vlaneseq
      %v387 = vshrl.u32 %v386, 7
      %v388 = vsub.s32 0, %v387
      %v389 = vrot.slane %v384, %v388
      %v391 = vadd.f32 %v368, %v389
      %v392 = vadd.f32 %v369, %v389
      %v393 = vadd.f32 %v370, %v389
      %v394 = vadd.f32 %v371, %v389
      %v395 = vadd.f32 %v372, %v389
      %v396 = vadd.f32 %v373, %v389
      %v397 = vadd.f32 %v374, %v389
      %v398 = vadd.f32 %v375, %v389
      %v399 = vadd.f32 %v376, %v389
      %v400 = vadd.f32 %v377, %v389
      %v401 = vadd.f32 %v378, %v389
      %v402 = vadd.f32 %v379, %v389
      %v403 = vadd.f32 %v380, %v389
      %v404 = vadd.f32 %v381, %v389
      %v405 = vadd.f32 %v382, %v389
      %v406 = vadd.f32 %v383, %v389
      %v407 = vmax.f32 %v391, 0.0
      %v408 = vmax.f32 %v392, 0.0
      %v409 = vmax.f32 %v393, 0.0
      %v410 = vmax.f32 %v394, 0.0
      %v411 = vmax.f32 %v395, 0.0
      %v412 = vmax.f32 %v396, 0.0
      %v413 = vmax.f32 %v397, 0.0
      %v414 = vmax.f32 %v398, 0.0
      %v415 = vmax.f32 %v399, 0.0
      %v416 = vmax.f32 %v400, 0.0
      %v417 = vmax.f32 %v401, 0.0
      %v418 = vmax.f32 %v402, 0.0
      %v419 = vmax.f32 %v403, 0.0
      %v420 = vmax.f32 %v404, 0.0
      %v421 = vmax.f32 %v405, 0.0
      %v422 = vmax.f32 %v406, 0.0
      %v423 = vpack.c.bf16 %v408, %v407
      %v424 = vpack.c.bf16 %v410, %v409
      %v425 = vpack.c.bf16 %v412, %v411
      %v426 = vpack.c.bf16 %v414, %v413
      %v427 = vpack.c.bf16 %v416, %v415
      %v428 = vpack.c.bf16 %v418, %v417
      %v429 = vpack.c.bf16 %v420, %v419
      %v430 = vpack.c.bf16 %v422, %v421
      %v431 = vld [vmem:[%s3] sm:$0xf]
      %v432 = vld [vmem:[%s3 + $0x4] sm:$0xf]
      %v433 = vld [vmem:[%s3 + $0x8] sm:$0xf]
      %v434 = vld [vmem:[%s3 + $0xc] sm:$0xf]
      %v439 = vunpack.c.l.b16 %v431
      %v440 = vunpack.c.l.b16 %v432
      %v441 = vunpack.c.l.b16 %v433
      %v442 = vunpack.c.l.b16 %v434
      %v443 = vpack.c.b16 %v440, %v439
      %v444 = vpack.c.b16 %v442, %v441
      %vm447 = vcmask 261120
      %v449 = vsel %vm447, %v423, 0
      %v452 = vsel %vm447, %v424, 0
      %v455 = vsel %vm447, %v425, 0
      %v458 = vsel %vm447, %v426, 0
      %v461 = vsel %vm447, %v427, 0
      %v464 = vsel %vm447, %v428, 0
      %v467 = vsel %vm447, %v429, 0
      %v470 = vsel %vm447, %v430, 0
      %472 = vmatprep.subr.bf16.mxu0 0
      %473 = vmatpush1.bf16.msra.mxu0 0
      %474 = vmatprep.subr.bf16.mxu0 0
      %475 = vmatpush1.bf16.msra.mxu0 0
      %476 = vmatprep.subr.bf16.mxu0 0
      %477 = vmatpush1.bf16.msra.mxu0 0
      %478 = vmatprep.subr.bf16.mxu0 0
      %479 = vmatpush1.bf16.msra.mxu0 0
      %480 = vmatprep.subr.bf16.mxu0 0
      %481 = vmatpush1.bf16.msra.mxu0 0
      %482 = vmatprep.subr.bf16.mxu0 0
      %483 = vmatpush1.bf16.msra.mxu0 0
      %484 = vmatprep.subr.bf16.mxu0 0
      %485 = vmatpush1.bf16.msra.mxu0 %v444
      %486 = vmatprep.subr.bf16.mxu0 0
      %487 = vmatpush1.bf16.msra.mxu0 %v443
      %488 = vmatprep.subr.bf16.mxu0 0
      %489 = vmatpush2.bf16.msra.mxu0 0
      %490 = vmatprep.subr.bf16.mxu0 0
      %491 = vmatpush2.bf16.msra.mxu0 0
      %492 = vmatprep.subr.bf16.mxu0 0
      %493 = vmatpush2.bf16.msra.mxu0 0
      %494 = vmatprep.subr.bf16.mxu0 0
      %495 = vmatpush2.bf16.msra.mxu0 0
      %496 = vmatprep.subr.bf16.mxu0 0
      %497 = vmatpush2.bf16.msra.mxu0 0
      %498 = vmatprep.subr.bf16.mxu0 0
      %499 = vmatpush2.bf16.msra.mxu0 0
      %500 = vmatprep.subr.bf16.mxu0 0
      %501 = vmatpush2.bf16.msra.mxu0 0
      %502 = vmatprep.subr.bf16.mxu0 0
      %503 = vmatpush2.bf16.msra.mxu0 0
      %504 = vmatprep.mubr.bf16.mxu0 0
      %505 = vmatmul.mubr.bf16.gmra.mxu0 %v449
      %v506 = vpop.f32.mrf.mxu0
      %v507 = vadd.f32 0.0, %v506
      %v508 = vpop.f32.mrf.mxu0
      %v509 = vpop.f32.mrf.mxu0
      %v510 = vadd.f32 0.0, %v509
      %v511 = vpop.f32.mrf.mxu0
      %512 = vmatprep.mubr.bf16.mxu0 0
      %513 = vmatmul.mubr.bf16.gmra.mxu0 %v452
      %v514 = vpop.f32.mrf.mxu0
      %v515 = vadd.f32 0.0, %v514
      %v516 = vpop.f32.mrf.mxu0
      %v517 = vpop.f32.mrf.mxu0
      %v518 = vadd.f32 0.0, %v517
      %v519 = vpop.f32.mrf.mxu0
      %520 = vmatprep.mubr.bf16.mxu0 0
      %521 = vmatmul.mubr.bf16.gmra.mxu0 %v455
      %v522 = vpop.f32.mrf.mxu0
      %v523 = vadd.f32 0.0, %v522
      %v524 = vpop.f32.mrf.mxu0
      %v525 = vpop.f32.mrf.mxu0
      %v526 = vadd.f32 0.0, %v525
      %v527 = vpop.f32.mrf.mxu0
      %528 = vmatprep.mubr.bf16.mxu0 0
      %529 = vmatmul.mubr.bf16.gmra.mxu0 %v458
      %v530 = vpop.f32.mrf.mxu0
      %v531 = vadd.f32 0.0, %v530
      %v532 = vpop.f32.mrf.mxu0
      %v533 = vpop.f32.mrf.mxu0
      %v534 = vadd.f32 0.0, %v533
      %v535 = vpop.f32.mrf.mxu0
      %536 = vmatprep.mubr.bf16.mxu0 0
      %537 = vmatmul.mubr.bf16.gmra.mxu0 %v461
      %v538 = vpop.f32.mrf.mxu0
      %v539 = vadd.f32 0.0, %v538
      %v540 = vpop.f32.mrf.mxu0
      %v541 = vpop.f32.mrf.mxu0
      %v542 = vadd.f32 0.0, %v541
      %v543 = vpop.f32.mrf.mxu0
      %544 = vmatprep.mubr.bf16.mxu0 0
      %545 = vmatmul.mubr.bf16.gmra.mxu0 %v464
      %v546 = vpop.f32.mrf.mxu0
      %v547 = vadd.f32 0.0, %v546
      %v548 = vpop.f32.mrf.mxu0
      %v549 = vpop.f32.mrf.mxu0
      %v550 = vadd.f32 0.0, %v549
      %v551 = vpop.f32.mrf.mxu0
      %552 = vmatprep.mubr.bf16.mxu0 0
      %553 = vmatmul.mubr.bf16.gmra.mxu0 %v467
      %v554 = vpop.f32.mrf.mxu0
      %v555 = vadd.f32 0.0, %v554
      %v556 = vpop.f32.mrf.mxu0
      %v557 = vpop.f32.mrf.mxu0
      %v558 = vadd.f32 0.0, %v557
      %v559 = vpop.f32.mrf.mxu0
      %560 = vmatprep.mubr.bf16.mxu0 0
      %561 = vmatmul.mubr.bf16.gmra.mxu0 %v470
      %v562 = vpop.f32.mrf.mxu0
      %v563 = vadd.f32 0.0, %v562
      %v564 = vpop.f32.mrf.mxu0
      %v565 = vpop.f32.mrf.mxu0
      %v566 = vadd.f32 0.0, %v565
      %v567 = vpop.f32.mrf.mxu0
      %568 = vdwg.mxu0
      %v569 = vpack.c.bf16 %v510, %v507
      %v570 = vpack.c.bf16 %v518, %v515
      %v571 = vpack.c.bf16 %v526, %v523
      %v572 = vpack.c.bf16 %v534, %v531
      %v573 = vpack.c.bf16 %v542, %v539
      %v574 = vpack.c.bf16 %v550, %v547
      %v575 = vpack.c.bf16 %v558, %v555
      %v576 = vpack.c.bf16 %v566, %v563
      %v585 = vunpack.c.l.b16 %v569
      %v586 = vunpack.c.h.b16 %v569
      %v587 = vunpack.c.l.b16 %v570
      %v588 = vunpack.c.h.b16 %v570
      %v589 = vunpack.c.l.b16 %v571
      %v590 = vunpack.c.h.b16 %v571
      %v591 = vunpack.c.l.b16 %v572
      %v592 = vunpack.c.h.b16 %v572
      %v593 = vunpack.c.l.b16 %v573
      %v594 = vunpack.c.h.b16 %v573
      %v595 = vunpack.c.l.b16 %v574
      %v596 = vunpack.c.h.b16 %v574
      %v597 = vunpack.c.l.b16 %v575
      %v598 = vunpack.c.h.b16 %v575
      %v599 = vunpack.c.l.b16 %v576
      %v600 = vunpack.c.h.b16 %v576
      %v601 = vpack.c.b16 %v585, %v585
      %v602 = vpack.c.b16 %v586, %v586
      %v603 = vpack.c.b16 %v587, %v587
      %v604 = vpack.c.b16 %v588, %v588
      %v605 = vpack.c.b16 %v589, %v589
      %v606 = vpack.c.b16 %v590, %v590
      %v607 = vpack.c.b16 %v591, %v591
      %v608 = vpack.c.b16 %v592, %v592
      %v609 = vpack.c.b16 %v593, %v593
      %v610 = vpack.c.b16 %v594, %v594
      %v611 = vpack.c.b16 %v595, %v595
      %v612 = vpack.c.b16 %v596, %v596
      %v613 = vpack.c.b16 %v597, %v597
      %v614 = vpack.c.b16 %v598, %v598
      %v615 = vpack.c.b16 %v599, %v599
      %v616 = vpack.c.b16 %v600, %v600
      %633 = vst [vmem:[%s312] sm:$0xf] %v601
      %634 = vst [vmem:[%s312 + $0x4] sm:$0xf] %v602
      %635 = vst [vmem:[%s312 + $0x8] sm:$0xf] %v603
      %636 = vst [vmem:[%s312 + $0xc] sm:$0xf] %v604
      %637 = vst [vmem:[%s312 + $0x10] sm:$0xf] %v605
      %638 = vst [vmem:[%s312 + $0x14] sm:$0xf] %v606
      %639 = vst [vmem:[%s312 + $0x18] sm:$0xf] %v607
      %640 = vst [vmem:[%s312 + $0x1c] sm:$0xf] %v608
      %641 = vst [vmem:[%s312 + $0x20] sm:$0xf] %v609
      %642 = vst [vmem:[%s312 + $0x24] sm:$0xf] %v610
      %643 = vst [vmem:[%s312 + $0x28] sm:$0xf] %v611
      %644 = vst [vmem:[%s312 + $0x2c] sm:$0xf] %v612
      %645 = vst [vmem:[%s312 + $0x30] sm:$0xf] %v613
      %646 = vst [vmem:[%s312 + $0x34] sm:$0xf] %v614
      %647 = vst [vmem:[%s312 + $0x38] sm:$0xf] %v615
      %648 = vst [vmem:[%s312 + $0x3c] sm:$0xf] %v616
      %v649 = vadd.f32 %v507, %v510
      %v650 = vadd.f32 %v649, %v515
      %v651 = vadd.f32 %v650, %v518
      %v652 = vadd.f32 %v651, %v523
      %v653 = vadd.f32 %v652, %v526
      %v654 = vadd.f32 %v653, %v531
      %v655 = vadd.f32 %v654, %v534
      %v656 = vadd.f32 %v655, %v539
      %v657 = vadd.f32 %v656, %v542
      %v658 = vadd.f32 %v657, %v547
      %v659 = vadd.f32 %v658, %v550
      %v660 = vadd.f32 %v659, %v555
      %v661 = vadd.f32 %v660, %v558
      %v662 = vadd.f32 %v661, %v563
      %v663 = vadd.f32 %v662, %v566
      %v664 = vrot.slane %v663, 4
      %v665 = vadd.f32 %v663, %v664
      %v666 = vrot.slane %v665, 2
      %v667 = vadd.f32 %v665, %v666
      %v668 = vrot.slane %v667, 1
      %v669 = vadd.f32 %v667, %v668
      %670 = vst [vmem:[%s318] sm:$0x1] %v669
      %v671 = vmul.f32 %v507, %v507
      %v672 = vmul.f32 %v510, %v510
      %v673 = vmul.f32 %v515, %v515
      %v674 = vmul.f32 %v518, %v518
      %v675 = vmul.f32 %v523, %v523
      %v676 = vmul.f32 %v526, %v526
      %v677 = vmul.f32 %v531, %v531
      %v678 = vmul.f32 %v534, %v534
      %v679 = vmul.f32 %v539, %v539
      %v680 = vmul.f32 %v542, %v542
      %v681 = vmul.f32 %v547, %v547
      %v682 = vmul.f32 %v550, %v550
      %v683 = vmul.f32 %v555, %v555
      %v684 = vmul.f32 %v558, %v558
      %v685 = vmul.f32 %v563, %v563
      %v686 = vmul.f32 %v566, %v566
      %v687 = vadd.f32 %v671, %v672
      %v688 = vadd.f32 %v687, %v673
      %v689 = vadd.f32 %v688, %v674
      %v690 = vadd.f32 %v689, %v675
      %v691 = vadd.f32 %v690, %v676
      %v692 = vadd.f32 %v691, %v677
      %v693 = vadd.f32 %v692, %v678
      %v694 = vadd.f32 %v693, %v679
      %v695 = vadd.f32 %v694, %v680
      %v696 = vadd.f32 %v695, %v681
      %v697 = vadd.f32 %v696, %v682
      %v698 = vadd.f32 %v697, %v683
      %v699 = vadd.f32 %v698, %v684
      %v700 = vadd.f32 %v699, %v685
      %v701 = vadd.f32 %v700, %v686
      %v702 = vrot.slane %v701, 4
      %v703 = vadd.f32 %v701, %v702
      %v704 = vrot.slane %v703, 2
      %v705 = vadd.f32 %v703, %v704
      %v706 = vrot.slane %v705, 1
      %v707 = vadd.f32 %v705, %v706
      %708 = vst [vmem:[%s325] sm:$0x1] %v707
      %s709 = smul.u32 16, %s23
      %p710 = scmp.lt.s32.totalorder %s22, 1
      %s711 = scalar_select %p710, %s22, 1
      %p712 = scmp.lt.s32.totalorder %s709, 31
      %s713 = scalar_select %p712, %s709, 31
      %s714 = smul.addr %s711, 32
      %s715 = sadd.s32 %s713, %s714
      %s716 = smul.addr %s715, 4
      %s717 = scalar_lea.vmem %s4, %s716
      %s718 = smul.u32 %s22, 2
      %s719 = sadd.s32 %s718, %s23
      %p720 = scmp.lt.s32.totalorder %s719, 3
      %s721 = scalar_select %p720, %s719, 3
      %s722 = scalar_lea.vmem %s5, %s721
      %s723 = smul.u32 %s22, 2
      %s724 = sadd.s32 %s723, %s23
      %p725 = scmp.lt.s32.totalorder %s724, 3
      %s726 = scalar_select %p725, %s724, 3
      %s727 = scalar_lea.vmem %s6, %s726
      // Predicated region
      $region37: #{bottleneck_se.6} parent=35 // pred_check
        %p728 = pneg %p141
      $region38: #{bottleneck_se.6} parent=35 // pred_check_branch
        %730 = sbr.rel (%p728) target = $region40
      $region39: #{bottleneck_se.6} parent=35 // pred_region
        %s731 = smul.u32 16, %s23
      $region40: #{bottleneck_se.6} parent=35 // pred_fallthru
        _
      // Predicated region
      $region41: #{bottleneck_se.6} parent=35 // pred_check
        %p732 = pneg %p171
      $region42: #{bottleneck_se.6} parent=35 // pred_check_branch
        %734 = sbr.rel (%p732) target = $region44
      $region43: #{bottleneck_se.6} parent=35 // pred_region
        %s735 = smul.u32 %s22, 2
        %s736 = sadd.s32 %s735, %s23
      $region44: #{bottleneck_se.6} parent=35 // pred_fallthru
        _
      // Predicated region
      $region45: #{bottleneck_se.6} parent=35 // pred_check
        %p737 = pneg %p201
      $region46: #{bottleneck_se.6} parent=35 // pred_check_branch
        %739 = sbr.rel (%p737) target = $region48
      $region47: #{bottleneck_se.6} parent=35 // pred_region
        %s740 = smul.u32 %s22, 2
        %s741 = sadd.s32 %s740, %s23
      $region48: #{bottleneck_se.6} parent=35 // pred_fallthru
        _
    $region36: #{bottleneck_se.6} parent=5 // pred_fallthru
      _
    %p742 = scmp.le.s32.totalorder 2, %s13
    // Predicated region
    $region49: #{bottleneck_se.6} parent=5 // pred_check
      %p743 = pneg %p742
    $region50: #{bottleneck_se.6} parent=5 // pred_check_branch
      %745 = sbr.rel (%p743) target = $region52
    $region51: #{bottleneck_se.6} parent=5 // pred_region
      %s746 = ssub.s32 %s13, 2
      // Predicated region
      $region53: #{bottleneck_se.6} parent=51 // pred_check
        %p747 = pneg %p147
      $region54: #{bottleneck_se.6} parent=51 // pred_check_branch
        %749 = sbr.rel (%p747) target = $region56
      $region55: #{bottleneck_se.6} parent=51 // pred_region
        %s750 = smul.u32 16, %s25
        %p751 = scmp.lt.s32.totalorder %s24, 1
        %s752 = scalar_select %p751, %s24, 1
        %p753 = scmp.lt.s32.totalorder %s750, 31
        %s754 = scalar_select %p753, %s750, 31
        %s755 = smul.addr %s752, 32
        %s756 = sadd.s32 %s754, %s755
        %s757 = smul.addr %s756, 4
        %s758 = scalar_lea.vmem %s4, %s757
      $region56: #{bottleneck_se.6} parent=51 // pred_fallthru
        _
      // Predicated region
      $region57: #{bottleneck_se.6} parent=51 // pred_check
        %p759 = pneg %p177
      $region58: #{bottleneck_se.6} parent=51 // pred_check_branch
        %761 = sbr.rel (%p759) target = $region60
      $region59: #{bottleneck_se.6} parent=51 // pred_region
        %s762 = smul.u32 %s24, 2
        %s763 = sadd.s32 %s762, %s25
        %p764 = scmp.lt.s32.totalorder %s763, 3
        %s765 = scalar_select %p764, %s763, 3
        %s766 = scalar_lea.vmem %s5, %s765
      $region60: #{bottleneck_se.6} parent=51 // pred_fallthru
        _
      // Predicated region
      $region61: #{bottleneck_se.6} parent=51 // pred_check
        %p767 = pneg %p207
      $region62: #{bottleneck_se.6} parent=51 // pred_check_branch
        %769 = sbr.rel (%p767) target = $region64
      $region63: #{bottleneck_se.6} parent=51 // pred_region
        %s770 = smul.u32 %s24, 2
        %s771 = sadd.s32 %s770, %s25
        %p772 = scmp.lt.s32.totalorder %s771, 3
        %s773 = scalar_select %p772, %s771, 3
        %s774 = scalar_lea.vmem %s6, %s773
      $region64: #{bottleneck_se.6} parent=51 // pred_fallthru
        _
    $region52: #{bottleneck_se.6} parent=5 // pred_fallthru
      _
  $region6: #{bottleneck_se.6} parent=0 // loop_footer
    %s17 = sadd.s32 1, %s13
  $region7: #{bottleneck_se.6} parent=0 // loop_footer_branch
    %12 = sbr.rel target = $region3
  $region8: #{bottleneck_se.6} parent=0 // loop_exit
    _

// kernel: bottleneck_se.7
$region0: #{bottleneck_se.7}
  #allocation0 [shape = 'u32[]', space=smem, size = 0x4, offset = 0x4, fixed_abs, tag = 'smem constant byte address 0x4 - core index']
  #allocation1 [shape = 'u32[144,128]{1,0:T(1,128)}', space=vmem, size = 0x12000, scoped, tag = 'internal scratch']
  %s0 = inlined_call_operand.vmem [shape: bf16[2,256,128], index: 0, kind: input, shape index: {}]
  %s1 = inlined_call_operand.vmem [shape: bf16[2,256,128], index: 1, kind: input, shape index: {}]
  %s2 = inlined_call_operand.vmem [shape: f32[2,1,128], index: 2, kind: input, shape index: {}]
  %s3 = inlined_call_operand.vmem [shape: f32[1,128], index: 3, kind: input, shape index: {}]
  %s4 = inlined_call_operand.vmem [shape: f32[1,128], index: 4, kind: input, shape index: {}]
  %s5 = inlined_call_operand.vmem [shape: f32[1,128], index: 5, kind: input, shape index: {}]
  %s6 = inlined_call_operand.vmem [shape: f32[1,128], index: 6, kind: input, shape index: {}]
  %s7 = inlined_call_operand.hbm [shape: f32[2,256,128], index: 7, kind: output, shape index: {}]
  %s8 = sld [smem:[#allocation0]]
  $region61: #{bottleneck_se.7} parent=0
    _
  %s10 = ssub.s32 1, %s8
  %s11 = scalar_select 0, %s10, %s8
  $region1: #{bottleneck_se.7} parent=0
    #allocation2 [shape = 'u8[131072]{0}', space=vmem, size = 0x20000, scoped, tag = 'output window, operand 0']
    #allocation3 [shape = 's32[2]{0}', space=sflag, size = 0x8, scoped, tag = 'scoped memory for bottleneck_se.7']
    %12 = vsyncpa [#allocation3], 0
    %s13 = scalar_lea.sflag [#allocation3], 1
    %14 = vsyncpa %s13, 0
    loop: start=0, step=1, limit=6
    $region2: #{bottleneck_se.7} parent=1 // loop_pre_header
      _
    $region3: #{bottleneck_se.7} parent=1 // loop_header
      %s16 = sphi 0, %s20
      %p17 = scmp.ge.s32.totalorder %s16, 6
      %s23 = sphi 0, %s35
      %s24 = sphi 0, %s31
      %s25 = sphi 0, %s23
      %s26 = sphi 0, %s24
      %s27 = sphi 0, %s25
      %s28 = sphi 0, %s26
      %s40 = sphi 0, %s42
      %s43 = sphi 0, %s40
      %s44 = sphi 0, %s43
      %s60 = sphi 0, %s44
      %s68 = sphi 0, %s70
      %s71 = sphi 0, %s68
      %s72 = sphi 0, %s71
      %s88 = sphi 0, %s72
      %s94 = sphi 0, %s96
      %s97 = sphi 0, %s94
      %s98 = sphi 0, %s97
      %s114 = sphi 0, %s98
      %s118 = sphi 0, %s118
      %s120 = sphi 0, %s118
      %s121 = sphi 0, %s120
      %s135 = sphi 0, %s121
      %s139 = sphi 0, %s139
      %s141 = sphi 0, %s139
      %s142 = sphi 0, %s141
      %s156 = sphi 0, %s142
      %s160 = sphi 0, %s160
      %s162 = sphi 0, %s160
      %s163 = sphi 0, %s162
      %s177 = sphi 0, %s163
      %s181 = sphi 0, %s181
      %s183 = sphi 0, %s181
      %s184 = sphi 0, %s183
      %s198 = sphi 0, %s184
      %s206 = sphi 0, %s208
      %s209 = sphi 0, %s206
      %s210 = sphi 0, %s209
      %s226 = sphi 0, %s210
    $region4: #{bottleneck_se.7} parent=1 // loop_header_branch
      %19 = sbr.rel (%p17) target = $region8
    $region5: #{bottleneck_se.7} parent=1 // loop_body
      %s21 = ssub.s32 %s16, 1
      %s22 = ssub.s32 %s16, 2
      %s29 = sadd.s32 1, %s24
      %p30 = scmp.ge.s32.totalorder %s29, 2
      %s31 = scalar_select %p30, 0, %s29
      %s32 = sadd.s32 1, %s23
      %s33 = scalar_select %p30, %s32, %s23
      %p34 = scmp.ge.s32.totalorder %s33, 2
      %s35 = scalar_select %p34, 0, %s33
      %s36 = ssub.s32 %s23, %s35
      %s37 = ssub.s32 %s24, %s31
      %s38 = sor.u32 %s36, %s37
      %p39 = scmp.eq.s32.totalorder %s38, 0
      %s41 = sadd.s32 %s40, 1
      %s42 = scalar_select %p39, %s40, %s41
      %p45 = pneg %p39
      %p46 = scmp.eq.s32.totalorder %s16, 3
      %p47 = por %p45, %p46
      %p48 = scmp.ne.s32.totalorder %s40, %s43
      %p49 = scmp.eq.s32.totalorder %s16, 0
      %p50 = por %p48, %p49
      %p51 = scmp.ne.s32.totalorder %s40, %s43
      %p52 = scmp.eq.s32.totalorder %s21, 3
      %p53 = por %p51, %p52
      %p54 = scmp.ne.s32.totalorder %s43, %s44
      %p55 = scmp.eq.s32.totalorder %s21, 0
      %p56 = por %p54, %p55
      %p57 = scmp.ne.s32.totalorder %s43, %s44
      %p58 = scmp.eq.s32.totalorder %s22, 3
      %p59 = por %p57, %p58
      %p61 = scmp.ne.s32.totalorder %s44, %s60
      %p62 = scmp.eq.s32.totalorder %s22, 0
      %p63 = por %p61, %p62
      %s64 = ssub.s32 %s23, %s35
      %s65 = ssub.s32 %s24, %s31
      %s66 = sor.u32 %s64, %s65
      %p67 = scmp.eq.s32.totalorder %s66, 0
      %s69 = sadd.s32 %s68, 1
      %s70 = scalar_select %p67, %s68, %s69
      %p73 = pneg %p67
      %p74 = scmp.eq.s32.totalorder %s16, 3
      %p75 = por %p73, %p74
      %p76 = scmp.ne.s32.totalorder %s68, %s71
      %p77 = scmp.eq.s32.totalorder %s16, 0
      %p78 = por %p76, %p77
      %p79 = scmp.ne.s32.totalorder %s68, %s71
      %p80 = scmp.eq.s32.totalorder %s21, 3
      %p81 = por %p79, %p80
      %p82 = scmp.ne.s32.totalorder %s71, %s72
      %p83 = scmp.eq.s32.totalorder %s21, 0
      %p84 = por %p82, %p83
      %p85 = scmp.ne.s32.totalorder %s71, %s72
      %p86 = scmp.eq.s32.totalorder %s22, 3
      %p87 = por %p85, %p86
      %p89 = scmp.ne.s32.totalorder %s72, %s88
      %p90 = scmp.eq.s32.totalorder %s22, 0
      %p91 = por %p89, %p90
      %s92 = ssub.s32 %s23, %s35
      %p93 = scmp.eq.s32.totalorder %s92, 0
      %s95 = sadd.s32 %s94, 1
      %s96 = scalar_select %p93, %s94, %s95
      %p99 = pneg %p93
      %p100 = scmp.eq.s32.totalorder %s16, 3
      %p101 = por %p99, %p100
      %p102 = scmp.ne.s32.totalorder %s94, %s97
      %p103 = scmp.eq.s32.totalorder %s16, 0
      %p104 = por %p102, %p103
      %p105 = scmp.ne.s32.totalorder %s94, %s97
      %p106 = scmp.eq.s32.totalorder %s21, 3
      %p107 = por %p105, %p106
      %p108 = scmp.ne.s32.totalorder %s97, %s98
      %p109 = scmp.eq.s32.totalorder %s21, 0
      %p110 = por %p108, %p109
      %p111 = scmp.ne.s32.totalorder %s97, %s98
      %p112 = scmp.eq.s32.totalorder %s22, 3
      %p113 = por %p111, %p112
      %p115 = scmp.ne.s32.totalorder %s98, %s114
      %p116 = scmp.eq.s32.totalorder %s22, 0
      %p117 = por %p115, %p116
      %s119 = sadd.s32 %s118, 1
      %p122 = scmp.eq.s32.totalorder %s16, 3
      %p123 = scmp.ne.s32.totalorder %s118, %s120
      %p124 = scmp.eq.s32.totalorder %s16, 0
      %p125 = por %p123, %p124
      %p126 = scmp.ne.s32.totalorder %s118, %s120
      %p127 = scmp.eq.s32.totalorder %s21, 3
      %p128 = por %p126, %p127
      %p129 = scmp.ne.s32.totalorder %s120, %s121
      %p130 = scmp.eq.s32.totalorder %s21, 0
      %p131 = por %p129, %p130
      %p132 = scmp.ne.s32.totalorder %s120, %s121
      %p133 = scmp.eq.s32.totalorder %s22, 3
      %p134 = por %p132, %p133
      %p136 = scmp.ne.s32.totalorder %s121, %s135
      %p137 = scmp.eq.s32.totalorder %s22, 0
      %p138 = por %p136, %p137
      %s140 = sadd.s32 %s139, 1
      %p143 = scmp.eq.s32.totalorder %s16, 3
      %p144 = scmp.ne.s32.totalorder %s139, %s141
      %p145 = scmp.eq.s32.totalorder %s16, 0
      %p146 = por %p144, %p145
      %p147 = scmp.ne.s32.totalorder %s139, %s141
      %p148 = scmp.eq.s32.totalorder %s21, 3
      %p149 = por %p147, %p148
      %p150 = scmp.ne.s32.totalorder %s141, %s142
      %p151 = scmp.eq.s32.totalorder %s21, 0
      %p152 = por %p150, %p151
      %p153 = scmp.ne.s32.totalorder %s141, %s142
      %p154 = scmp.eq.s32.totalorder %s22, 3
      %p155 = por %p153, %p154
      %p157 = scmp.ne.s32.totalorder %s142, %s156
      %p158 = scmp.eq.s32.totalorder %s22, 0
      %p159 = por %p157, %p158
      %s161 = sadd.s32 %s160, 1
      %p164 = scmp.eq.s32.totalorder %s16, 3
      %p165 = scmp.ne.s32.totalorder %s160, %s162
      %p166 = scmp.eq.s32.totalorder %s16, 0
      %p167 = por %p165, %p166
      %p168 = scmp.ne.s32.totalorder %s160, %s162
      %p169 = scmp.eq.s32.totalorder %s21, 3
      %p170 = por %p168, %p169
      %p171 = scmp.ne.s32.totalorder %s162, %s163
      %p172 = scmp.eq.s32.totalorder %s21, 0
      %p173 = por %p171, %p172
      %p174 = scmp.ne.s32.totalorder %s162, %s163
      %p175 = scmp.eq.s32.totalorder %s22, 3
      %p176 = por %p174, %p175
      %p178 = scmp.ne.s32.totalorder %s163, %s177
      %p179 = scmp.eq.s32.totalorder %s22, 0
      %p180 = por %p178, %p179
      %s182 = sadd.s32 %s181, 1
      %p185 = scmp.eq.s32.totalorder %s16, 3
      %p186 = scmp.ne.s32.totalorder %s181, %s183
      %p187 = scmp.eq.s32.totalorder %s16, 0
      %p188 = por %p186, %p187
      %p189 = scmp.ne.s32.totalorder %s181, %s183
      %p190 = scmp.eq.s32.totalorder %s21, 3
      %p191 = por %p189, %p190
      %p192 = scmp.ne.s32.totalorder %s183, %s184
      %p193 = scmp.eq.s32.totalorder %s21, 0
      %p194 = por %p192, %p193
      %p195 = scmp.ne.s32.totalorder %s183, %s184
      %p196 = scmp.eq.s32.totalorder %s22, 3
      %p197 = por %p195, %p196
      %p199 = scmp.ne.s32.totalorder %s184, %s198
      %p200 = scmp.eq.s32.totalorder %s22, 0
      %p201 = por %p199, %p200
      %s202 = ssub.s32 %s23, %s35
      %s203 = ssub.s32 %s24, %s31
      %s204 = sor.u32 %s202, %s203
      %p205 = scmp.eq.s32.totalorder %s204, 0
      %s207 = sadd.s32 %s206, 1
      %s208 = scalar_select %p205, %s206, %s207
      %p211 = pneg %p205
      %p212 = scmp.eq.s32.totalorder %s16, 3
      %p213 = por %p211, %p212
      %p214 = scmp.ne.s32.totalorder %s206, %s209
      %p215 = scmp.eq.s32.totalorder %s16, 0
      %p216 = por %p214, %p215
      %p217 = scmp.ne.s32.totalorder %s206, %s209
      %p218 = scmp.eq.s32.totalorder %s21, 3
      %p219 = por %p217, %p218
      %p220 = scmp.ne.s32.totalorder %s209, %s210
      %p221 = scmp.eq.s32.totalorder %s21, 0
      %p222 = por %p220, %p221
      %p223 = scmp.ne.s32.totalorder %s209, %s210
      %p224 = scmp.eq.s32.totalorder %s22, 3
      %p225 = por %p223, %p224
      %p227 = scmp.ne.s32.totalorder %s210, %s226
      %p228 = scmp.eq.s32.totalorder %s22, 0
      %p229 = por %p227, %p228
      %p230 = scmp.le.s32.totalorder 1, %s16
      %p231 = scmp.lt.s32.totalorder %s16, 5
      %p232 = pnand %p230, %p231
      %p233 = pneg %p232
      // Predicated region
      $region9: #{bottleneck_se.7} parent=5 // pred_check
        _
      $region10: #{bottleneck_se.7} parent=5 // pred_check_branch
        %235 = sbr.rel (%p232) target = $region12
      $region11: #{bottleneck_se.7} parent=5 // pred_region
        %s236 = ssub.s32 %s16, 1
        // Predicated region
        $region13: #{bottleneck_se.7} parent=11 // pred_check
          %p237 = pneg %p131
        $region14: #{bottleneck_se.7} parent=11 // pred_check_branch
          %239 = sbr.rel (%p237) target = $region16
        $region15: #{bottleneck_se.7} parent=11 // pred_region
          _
        $region16: #{bottleneck_se.7} parent=11 // pred_fallthru
          _
        // Predicated region
        $region17: #{bottleneck_se.7} parent=11 // pred_check
          %p240 = pneg %p152
        $region18: #{bottleneck_se.7} parent=11 // pred_check_branch
          %242 = sbr.rel (%p240) target = $region20
        $region19: #{bottleneck_se.7} parent=11 // pred_region
          _
        $region20: #{bottleneck_se.7} parent=11 // pred_fallthru
          _
        // Predicated region
        $region21: #{bottleneck_se.7} parent=11 // pred_check
          %p243 = pneg %p173
        $region22: #{bottleneck_se.7} parent=11 // pred_check_branch
          %245 = sbr.rel (%p243) target = $region24
        $region23: #{bottleneck_se.7} parent=11 // pred_region
          _
        $region24: #{bottleneck_se.7} parent=11 // pred_fallthru
          _
        // Predicated region
        $region25: #{bottleneck_se.7} parent=11 // pred_check
          %p246 = pneg %p194
        $region26: #{bottleneck_se.7} parent=11 // pred_check_branch
          %248 = sbr.rel (%p246) target = $region28
        $region27: #{bottleneck_se.7} parent=11 // pred_region
          _
        $region28: #{bottleneck_se.7} parent=11 // pred_fallthru
          _
      $region12: #{bottleneck_se.7} parent=5 // pred_fallthru
        _
      %p249 = scmp.lt.s32.totalorder %s16, 4
      // Predicated region
      $region29: #{bottleneck_se.7} parent=5 // pred_check
        %p250 = pneg %p249
      $region30: #{bottleneck_se.7} parent=5 // pred_check_branch
        %252 = sbr.rel (%p250) target = $region32
      $region31: #{bottleneck_se.7} parent=5 // pred_region
        // Predicated region
        $region33: #{bottleneck_se.7} parent=31 // pred_check
          %p253 = pneg %p50
        $region34: #{bottleneck_se.7} parent=31 // pred_check_branch
          %255 = sbr.rel (%p253) target = $region36
        $region35: #{bottleneck_se.7} parent=31 // pred_region
          %s256 = smul.u32 16, %s24
          %p257 = scmp.lt.s32.totalorder %s23, 1
          %s258 = scalar_select %p257, %s23, 1
          %p259 = scmp.lt.s32.totalorder %s256, 31
          %s260 = scalar_select %p259, %s256, 31
          %s261 = smul.addr %s258, 32
          %s262 = sadd.s32 %s260, %s261
          %s263 = smul.addr %s262, 4
          %s264 = scalar_lea.vmem %s0, %s263
          %s265 = smul.u32 16, %s24
        $region36: #{bottleneck_se.7} parent=31 // pred_fallthru
          _
        // Predicated region
        $region37: #{bottleneck_se.7} parent=31 // pred_check
          %p266 = pneg %p78
        $region38: #{bottleneck_se.7} parent=31 // pred_check_branch
          %268 = sbr.rel (%p266) target = $region40
        $region39: #{bottleneck_se.7} parent=31 // pred_region
          %s269 = smul.u32 16, %s24
          %p270 = scmp.lt.s32.totalorder %s23, 1
          %s271 = scalar_select %p270, %s23, 1
          %p272 = scmp.lt.s32.totalorder %s269, 31
          %s273 = scalar_select %p272, %s269, 31
          %s274 = smul.addr %s271, 32
          %s275 = sadd.s32 %s273, %s274
          %s276 = smul.addr %s275, 4
          %s277 = scalar_lea.vmem %s1, %s276
          %s278 = smul.u32 16, %s24
        $region40: #{bottleneck_se.7} parent=31 // pred_fallthru
          _
        // Predicated region
        $region41: #{bottleneck_se.7} parent=31 // pred_check
          %p279 = pneg %p104
        $region42: #{bottleneck_se.7} parent=31 // pred_check_branch
          %281 = sbr.rel (%p279) target = $region44
        $region43: #{bottleneck_se.7} parent=31 // pred_region
          %p282 = scmp.lt.s32.totalorder %s23, 1
          %s283 = scalar_select %p282, %s23, 1
          %s284 = scalar_lea.vmem %s2, %s283
        $region44: #{bottleneck_se.7} parent=31 // pred_fallthru
          _
      $region32: #{bottleneck_se.7} parent=5 // pred_fallthru
        _
      %p285 = scmp.le.s32.totalorder 1, %s16
      %p286 = scmp.lt.s32.totalorder %s16, 5
      %p287 = pnand %p285, %p286
      %p288 = pneg %p287
      // Predicated region
      $region45: #{bottleneck_se.7} parent=5 // pred_check
        _
      $region46: #{bottleneck_se.7} parent=5 // pred_check_branch
        %290 = sbr.rel (%p287) target = $region48
      $region47: #{bottleneck_se.7} parent=5 // pred_region
        %s291 = ssub.s32 %s16, 1
        %s292 = smul.u32 16, %s26
        %p293 = scmp.lt.s32.totalorder %s25, 1
        %s294 = scalar_select %p293, %s25, 1
        %p295 = scmp.lt.s32.totalorder %s292, 31
        %s296 = scalar_select %p295, %s292, 31
        %s297 = smul.addr %s294, 32
        %s298 = sadd.s32 %s296, %s297
        %s299 = smul.addr %s298, 4
        %s300 = scalar_lea.vmem %s0, %s299
        %p301 = pneg %p56
        %p302 = pneg %p53
        %s303 = smul.u32 16, %s26
        %p304 = scmp.lt.s32.totalorder %s25, 1
        %s305 = scalar_select %p304, %s25, 1
        %p306 = scmp.lt.s32.totalorder %s303, 31
        %s307 = scalar_select %p306, %s303, 31
        %s308 = smul.addr %s305, 32
        %s309 = sadd.s32 %s307, %s308
        %s310 = smul.addr %s309, 4
        %s311 = scalar_lea.vmem %s1, %s310
        %p312 = pneg %p84
        %p313 = pneg %p81
        %p314 = scmp.lt.s32.totalorder %s25, 1
        %s315 = scalar_select %p314, %s25, 1
        %s316 = scalar_lea.vmem %s2, %s315
        %p317 = pneg %p110
        %p318 = pneg %p107
        %p319 = pneg %p131
        %p320 = pneg %p128
        %p321 = pneg %p152
        %p322 = pneg %p149
        %p323 = pneg %p173
        %p324 = pneg %p170
        %p325 = pneg %p194
        %p326 = pneg %p191
        %p327 = pneg %p222
        %p328 = pneg %p219
        %s329 = sand.u32 %s209, 1
        %s330 = scalar_lea.sflag [#allocation3], %s329
        %s331 = sand.u32 %s209, 1
        %s332 = smul.addr %s331, 128
        %s333 = scalar_lea.vmem [#allocation2], %s332
        %s334 = smul.u32 16, %s26
        %p335 = scmp.lt.s32.totalorder %s25, 1
        %s336 = scalar_select %p335, %s25, 1
        %p337 = scmp.lt.s32.totalorder %s334, 31
        %s338 = scalar_select %p337, %s334, 31
        %s339 = smul.addr %s336, 32
        %s340 = sadd.s32 %s338, %s339
        %s341 = smul.addr %s340, 4
        %s342 = scalar_lea.vmem %s0, %s341
        %s343 = smul.u32 16, %s26
        %s344 = smul.u32 16, %s26
        %p345 = scmp.lt.s32.totalorder %s25, 1
        %s346 = scalar_select %p345, %s25, 1
        %p347 = scmp.lt.s32.totalorder %s344, 31
        %s348 = scalar_select %p347, %s344, 31
        %s349 = smul.addr %s346, 32
        %s350 = sadd.s32 %s348, %s349
        %s351 = smul.addr %s350, 4
        %s352 = scalar_lea.vmem %s1, %s351
        %s353 = smul.u32 16, %s26
        %p354 = scmp.lt.s32.totalorder %s25, 1
        %s355 = scalar_select %p354, %s25, 1
        %s356 = scalar_lea.vmem %s2, %s355
        %s357 = smul.u32 16, %s26
        %v358 = vld [vmem:[%s342] sm:$0xf]
        %v359 = vld [vmem:[%s342 + $0x4] sm:$0xf]
        %v360 = vld [vmem:[%s342 + $0x8] sm:$0xf]
        %v361 = vld [vmem:[%s342 + $0xc] sm:$0xf]
        %v362 = vld [vmem:[%s342 + $0x10] sm:$0xf]
        %v363 = vld [vmem:[%s342 + $0x14] sm:$0xf]
        %v364 = vld [vmem:[%s342 + $0x18] sm:$0xf]
        %v365 = vld [vmem:[%s342 + $0x1c] sm:$0xf]
        %v366 = vld [vmem:[%s342 + $0x20] sm:$0xf]
        %v367 = vld [vmem:[%s342 + $0x24] sm:$0xf]
        %v368 = vld [vmem:[%s342 + $0x28] sm:$0xf]
        %v369 = vld [vmem:[%s342 + $0x2c] sm:$0xf]
        %v370 = vld [vmem:[%s342 + $0x30] sm:$0xf]
        %v371 = vld [vmem:[%s342 + $0x34] sm:$0xf]
        %v372 = vld [vmem:[%s342 + $0x38] sm:$0xf]
        %v373 = vld [vmem:[%s342 + $0x3c] sm:$0xf]
        %v374 = vunpack.c.l.bf16 %v358
        %v375 = vunpack.c.l.bf16 %v359
        %v376 = vunpack.c.l.bf16 %v360
        %v377 = vunpack.c.l.bf16 %v361
        %v378 = vunpack.c.l.bf16 %v362
        %v379 = vunpack.c.l.bf16 %v363
        %v380 = vunpack.c.l.bf16 %v364
        %v381 = vunpack.c.l.bf16 %v365
        %v382 = vunpack.c.l.bf16 %v366
        %v383 = vunpack.c.l.bf16 %v367
        %v384 = vunpack.c.l.bf16 %v368
        %v385 = vunpack.c.l.bf16 %v369
        %v386 = vunpack.c.l.bf16 %v370
        %v387 = vunpack.c.l.bf16 %v371
        %v388 = vunpack.c.l.bf16 %v372
        %v389 = vunpack.c.l.bf16 %v373
        %v390 = vld [vmem:[%s3] sm:$0x1]
        %v392 = vlaneseq
        %v393 = vshrl.u32 %v392, 7
        %v394 = vsub.s32 0, %v393
        %v395 = vrot.slane %v390, %v394
        %v397 = vmul.f32 %v374, %v395
        %v398 = vmul.f32 %v375, %v395
        %v399 = vmul.f32 %v376, %v395
        %v400 = vmul.f32 %v377, %v395
        %v401 = vmul.f32 %v378, %v395
        %v402 = vmul.f32 %v379, %v395
        %v403 = vmul.f32 %v380, %v395
        %v404 = vmul.f32 %v381, %v395
        %v405 = vmul.f32 %v382, %v395
        %v406 = vmul.f32 %v383, %v395
        %v407 = vmul.f32 %v384, %v395
        %v408 = vmul.f32 %v385, %v395
        %v409 = vmul.f32 %v386, %v395
        %v410 = vmul.f32 %v387, %v395
        %v411 = vmul.f32 %v388, %v395
        %v412 = vmul.f32 %v389, %v395
        %v413 = vld [vmem:[%s4] sm:$0x1]
        %v415 = vlaneseq
        %v416 = vshrl.u32 %v415, 7
        %v417 = vsub.s32 0, %v416
        %v418 = vrot.slane %v413, %v417
        %v420 = vadd.f32 %v397, %v418
        %v421 = vadd.f32 %v398, %v418
        %v422 = vadd.f32 %v399, %v418
        %v423 = vadd.f32 %v400, %v418
        %v424 = vadd.f32 %v401, %v418
        %v425 = vadd.f32 %v402, %v418
        %v426 = vadd.f32 %v403, %v418
        %v427 = vadd.f32 %v404, %v418
        %v428 = vadd.f32 %v405, %v418
        %v429 = vadd.f32 %v406, %v418
        %v430 = vadd.f32 %v407, %v418
        %v431 = vadd.f32 %v408, %v418
        %v432 = vadd.f32 %v409, %v418
        %v433 = vadd.f32 %v410, %v418
        %v434 = vadd.f32 %v411, %v418
        %v435 = vadd.f32 %v412, %v418
        %v436 = vld [vmem:[%s356] sm:$0x1]
        %v438 = vlaneseq
        %v439 = vshrl.u32 %v438, 7
        %v440 = vsub.s32 0, %v439
        %v441 = vrot.slane %v436, %v440
        %v443 = vmul.f32 %v420, %v441
        %v444 = vmul.f32 %v421, %v441
        %v445 = vmul.f32 %v422, %v441
        %v446 = vmul.f32 %v423, %v441
        %v447 = vmul.f32 %v424, %v441
        %v448 = vmul.f32 %v425, %v441
        %v449 = vmul.f32 %v426, %v441
        %v450 = vmul.f32 %v427, %v441
        %v451 = vmul.f32 %v428, %v441
        %v452 = vmul.f32 %v429, %v441
        %v453 = vmul.f32 %v430, %v441
        %v454 = vmul.f32 %v431, %v441
        %v455 = vmul.f32 %v432, %v441
        %v456 = vmul.f32 %v433, %v441
        %v457 = vmul.f32 %v434, %v441
        %v458 = vmul.f32 %v435, %v441
        %v459 = vld [vmem:[%s352] sm:$0xf]
        %v460 = vld [vmem:[%s352 + $0x4] sm:$0xf]
        %v461 = vld [vmem:[%s352 + $0x8] sm:$0xf]
        %v462 = vld [vmem:[%s352 + $0xc] sm:$0xf]
        %v463 = vld [vmem:[%s352 + $0x10] sm:$0xf]
        %v464 = vld [vmem:[%s352 + $0x14] sm:$0xf]
        %v465 = vld [vmem:[%s352 + $0x18] sm:$0xf]
        %v466 = vld [vmem:[%s352 + $0x1c] sm:$0xf]
        %v467 = vld [vmem:[%s352 + $0x20] sm:$0xf]
        %v468 = vld [vmem:[%s352 + $0x24] sm:$0xf]
        %v469 = vld [vmem:[%s352 + $0x28] sm:$0xf]
        %v470 = vld [vmem:[%s352 + $0x2c] sm:$0xf]
        %v471 = vld [vmem:[%s352 + $0x30] sm:$0xf]
        %v472 = vld [vmem:[%s352 + $0x34] sm:$0xf]
        %v473 = vld [vmem:[%s352 + $0x38] sm:$0xf]
        %v474 = vld [vmem:[%s352 + $0x3c] sm:$0xf]
        %v475 = vunpack.c.l.bf16 %v459
        %v476 = vunpack.c.l.bf16 %v460
        %v477 = vunpack.c.l.bf16 %v461
        %v478 = vunpack.c.l.bf16 %v462
        %v479 = vunpack.c.l.bf16 %v463
        %v480 = vunpack.c.l.bf16 %v464
        %v481 = vunpack.c.l.bf16 %v465
        %v482 = vunpack.c.l.bf16 %v466
        %v483 = vunpack.c.l.bf16 %v467
        %v484 = vunpack.c.l.bf16 %v468
        %v485 = vunpack.c.l.bf16 %v469
        %v486 = vunpack.c.l.bf16 %v470
        %v487 = vunpack.c.l.bf16 %v471
        %v488 = vunpack.c.l.bf16 %v472
        %v489 = vunpack.c.l.bf16 %v473
        %v490 = vunpack.c.l.bf16 %v474
        %v491 = vld [vmem:[%s5] sm:$0x1]
        %v493 = vlaneseq
        %v494 = vshrl.u32 %v493, 7
        %v495 = vsub.s32 0, %v494
        %v496 = vrot.slane %v491, %v495
        %v498 = vmul.f32 %v475, %v496
        %v499 = vmul.f32 %v476, %v496
        %v500 = vmul.f32 %v477, %v496
        %v501 = vmul.f32 %v478, %v496
        %v502 = vmul.f32 %v479, %v496
        %v503 = vmul.f32 %v480, %v496
        %v504 = vmul.f32 %v481, %v496
        %v505 = vmul.f32 %v482, %v496
        %v506 = vmul.f32 %v483, %v496
        %v507 = vmul.f32 %v484, %v496
        %v508 = vmul.f32 %v485, %v496
        %v509 = vmul.f32 %v486, %v496
        %v510 = vmul.f32 %v487, %v496
        %v511 = vmul.f32 %v488, %v496
        %v512 = vmul.f32 %v489, %v496
        %v513 = vmul.f32 %v490, %v496
        %v514 = vld [vmem:[%s6] sm:$0x1]
        %v516 = vlaneseq
        %v517 = vshrl.u32 %v516, 7
        %v518 = vsub.s32 0, %v517
        %v519 = vrot.slane %v514, %v518
        %v521 = vadd.f32 %v498, %v519
        %v522 = vadd.f32 %v499, %v519
        %v523 = vadd.f32 %v500, %v519
        %v524 = vadd.f32 %v501, %v519
        %v525 = vadd.f32 %v502, %v519
        %v526 = vadd.f32 %v503, %v519
        %v527 = vadd.f32 %v504, %v519
        %v528 = vadd.f32 %v505, %v519
        %v529 = vadd.f32 %v506, %v519
        %v530 = vadd.f32 %v507, %v519
        %v531 = vadd.f32 %v508, %v519
        %v532 = vadd.f32 %v509, %v519
        %v533 = vadd.f32 %v510, %v519
        %v534 = vadd.f32 %v511, %v519
        %v535 = vadd.f32 %v512, %v519
        %v536 = vadd.f32 %v513, %v519
        %v537 = vadd.f32 %v443, %v521
        %v538 = vadd.f32 %v444, %v522
        %v539 = vadd.f32 %v445, %v523
        %v540 = vadd.f32 %v446, %v524
        %v541 = vadd.f32 %v447, %v525
        %v542 = vadd.f32 %v448, %v526
        %v543 = vadd.f32 %v449, %v527
        %v544 = vadd.f32 %v450, %v528
        %v545 = vadd.f32 %v451, %v529
        %v546 = vadd.f32 %v452, %v530
        %v547 = vadd.f32 %v453, %v531
        %v548 = vadd.f32 %v454, %v532
        %v549 = vadd.f32 %v455, %v533
        %v550 = vadd.f32 %v456, %v534
        %v551 = vadd.f32 %v457, %v535
        %v552 = vadd.f32 %v458, %v536
        %v553 = vmax.f32 %v537, 0.0
        %v554 = vmax.f32 %v538, 0.0
        %v555 = vmax.f32 %v539, 0.0
        %v556 = vmax.f32 %v540, 0.0
        %v557 = vmax.f32 %v541, 0.0
        %v558 = vmax.f32 %v542, 0.0
        %v559 = vmax.f32 %v543, 0.0
        %v560 = vmax.f32 %v544, 0.0
        %v561 = vmax.f32 %v545, 0.0
        %v562 = vmax.f32 %v546, 0.0
        %v563 = vmax.f32 %v547, 0.0
        %v564 = vmax.f32 %v548, 0.0
        %v565 = vmax.f32 %v549, 0.0
        %v566 = vmax.f32 %v550, 0.0
        %v567 = vmax.f32 %v551, 0.0
        %v568 = vmax.f32 %v552, 0.0
        %569 = vst [vmem:[%s333] sm:$0xff] %v553
        %570 = vst [vmem:[%s333 + $0x8] sm:$0xff] %v554
        %571 = vst [vmem:[%s333 + $0x10] sm:$0xff] %v555
        %572 = vst [vmem:[%s333 + $0x18] sm:$0xff] %v556
        %573 = vst [vmem:[%s333 + $0x20] sm:$0xff] %v557
        %574 = vst [vmem:[%s333 + $0x28] sm:$0xff] %v558
        %575 = vst [vmem:[%s333 + $0x30] sm:$0xff] %v559
        %576 = vst [vmem:[%s333 + $0x38] sm:$0xff] %v560
        %577 = vst [vmem:[%s333 + $0x40] sm:$0xff] %v561
        %578 = vst [vmem:[%s333 + $0x48] sm:$0xff] %v562
        %579 = vst [vmem:[%s333 + $0x50] sm:$0xff] %v563
        %580 = vst [vmem:[%s333 + $0x58] sm:$0xff] %v564
        %581 = vst [vmem:[%s333 + $0x60] sm:$0xff] %v565
        %582 = vst [vmem:[%s333 + $0x68] sm:$0xff] %v566
        %583 = vst [vmem:[%s333 + $0x70] sm:$0xff] %v567
        %584 = vst [vmem:[%s333 + $0x78] sm:$0xff] %v568
        %s585 = sand.u32 %s209, 1
        %s586 = scalar_lea.sflag [#allocation3], %s585
        %s587 = sand.u32 %s209, 1
        %s588 = smul.addr %s587, 128
        %s589 = scalar_lea.vmem [#allocation2], %s588
        // Predicated region
        $region49: #{bottleneck_se.7} parent=47 // pred_check
          %p590 = pneg %p219
        $region50: #{bottleneck_se.7} parent=47 // pred_check_branch
          %592 = sbr.rel (%p590) target = $region52
        $region51: #{bottleneck_se.7} parent=47 // pred_region
          %s593 = smul.u32 16, %s26
          %s595 = ssub.s32 2048, 2048
          %596 = vsyncadd %s586, %s595
          %s597 = smul.addr %s25, 32
          %s598 = sadd.s32 %s593, %s597
          %s599 = smul.addr %s598, 128
          %s600 = scalar_lea.hbm %s7, %s599
          %s601 = sshll.u32 %s589, 4
          %s602 = int_to_ptr.vmem [resolvable:$true] %s601
          %607 = dma.vmem_to_hbm [thread:$0]  %s602, 2048, %s600, %s586, 128, 128, 8
        $region52: #{bottleneck_se.7} parent=47 // pred_fallthru
          _
      $region48: #{bottleneck_se.7} parent=5 // pred_fallthru
        _
      %p608 = scmp.le.s32.totalorder 2, %s16
      // Predicated region
      $region53: #{bottleneck_se.7} parent=5 // pred_check
        %p609 = pneg %p608
      $region54: #{bottleneck_se.7} parent=5 // pred_check_branch
        %611 = sbr.rel (%p609) target = $region56
      $region55: #{bottleneck_se.7} parent=5 // pred_region
        %s612 = ssub.s32 %s16, 2
        // Predicated region
        $region57: #{bottleneck_se.7} parent=55 // pred_check
          %p613 = pneg %p225
        $region58: #{bottleneck_se.7} parent=55 // pred_check_branch
          %615 = sbr.rel (%p613) target = $region60
        $region59: #{bottleneck_se.7} parent=55 // pred_region
          %s616 = sand.u32 %s210, 1
          %s617 = scalar_lea.sflag [#allocation3], %s616
          %s618 = sand.u32 %s210, 1
          %s619 = smul.addr %s618, 128
          %s620 = scalar_lea.vmem [#allocation2], %s619
          %621 = dma.done %s617, 2048
        $region60: #{bottleneck_se.7} parent=55 // pred_fallthru
          _
      $region56: #{bottleneck_se.7} parent=5 // pred_fallthru
        _
    $region6: #{bottleneck_se.7} parent=1 // loop_footer
      %s20 = sadd.s32 1, %s16
    $region7: #{bottleneck_se.7} parent=1 // loop_footer_branch
      %15 = sbr.rel target = $region3
    $region8: #{bottleneck_se.7} parent=1 // loop_exit
      _
    %622 = vsyncpa [#allocation3], 1
    %s623 = scalar_lea.sflag [#allocation3], 1
    %624 = vsyncpa %s623, 1

// kernel: bottleneck_se.5
$region0: #{bottleneck_se.5}
  #allocation0 [shape = 'u32[]', space=smem, size = 0x4, offset = 0x4, fixed_abs, tag = 'smem constant byte address 0x4 - core index']
  #allocation1 [shape = 'u32[144,128]{1,0:T(1,128)}', space=vmem, size = 0x12000, scoped, tag = 'internal scratch']
  %s0 = inlined_call_operand.vmem [shape: bf16[2,18,18,32], index: 0, kind: input, shape index: {}]
  %s1 = inlined_call_operand.vmem [shape: bf16[9,32,32], index: 1, kind: input, shape index: {}]
  %s2 = inlined_call_operand.vmem [shape: bf16[2,256,32], index: 2, kind: output, shape index: {0}]
  %s3 = inlined_call_operand.vmem [shape: f32[2,1,32], index: 3, kind: output, shape index: {1}]
  %s4 = inlined_call_operand.vmem [shape: f32[2,1,32], index: 4, kind: output, shape index: {2}]
  %5 = xla_tuple %s2, %s3, %s4
  %s6 = sld [smem:[#allocation0]]
  $region57: #{bottleneck_se.5} parent=0
    _
  %s8 = ssub.s32 1, %s6
  %s9 = scalar_select 0, %s8, %s6
  loop: start=0, step=1, limit=4
  $region2: #{bottleneck_se.5} parent=0 // loop_pre_header
    _
  $region3: #{bottleneck_se.5} parent=0 // loop_header
    %s11 = sphi 0, %s15
    %p12 = scmp.ge.s32.totalorder %s11, 4
    %s21 = sphi 0, %s23
    %s24 = sphi 0, %s21
    %s25 = sphi 0, %s24
    %s41 = sphi 0, %s25
    %s45 = sphi 0, %s45
    %s47 = sphi 0, %s45
    %s48 = sphi 0, %s47
    %s62 = sphi 0, %s48
    %s68 = sphi 0, %s70
    %s71 = sphi 0, %s68
    %s72 = sphi 0, %s71
    %s88 = sphi 0, %s72
    %s94 = sphi 0, %s96
    %s97 = sphi 0, %s94
    %s98 = sphi 0, %s97
    %s114 = sphi 0, %s98
    %s120 = sphi 0, %s122
    %s123 = sphi 0, %s120
    %s124 = sphi 0, %s123
    %s140 = sphi 0, %s124
  $region4: #{bottleneck_se.5} parent=0 // loop_header_branch
    %14 = sbr.rel (%p12) target = $region8
  $region5: #{bottleneck_se.5} parent=0 // loop_body
    %s16 = ssub.s32 %s11, 1
    %s17 = ssub.s32 %s11, 2
    %s18 = sadd.s32 %s11, 1
    %s19 = ssub.s32 %s11, %s18
    %p20 = scmp.eq.s32.totalorder %s19, 0
    %s22 = sadd.s32 %s21, 1
    %s23 = scalar_select %p20, %s21, %s22
    %p26 = pneg %p20
    %p27 = scmp.eq.s32.totalorder %s11, 1
    %p28 = por %p26, %p27
    %p29 = scmp.ne.s32.totalorder %s21, %s24
    %p30 = scmp.eq.s32.totalorder %s11, 0
    %p31 = por %p29, %p30
    %p32 = scmp.ne.s32.totalorder %s21, %s24
    %p33 = scmp.eq.s32.totalorder %s16, 1
    %p34 = por %p32, %p33
    %p35 = scmp.ne.s32.totalorder %s24, %s25
    %p36 = scmp.eq.s32.totalorder %s16, 0
    %p37 = por %p35, %p36
    %p38 = scmp.ne.s32.totalorder %s24, %s25
    %p39 = scmp.eq.s32.totalorder %s17, 1
    %p40 = por %p38, %p39
    %p42 = scmp.ne.s32.totalorder %s25, %s41
    %p43 = scmp.eq.s32.totalorder %s17, 0
    %p44 = por %p42, %p43
    %s46 = sadd.s32 %s45, 1
    %p49 = scmp.eq.s32.totalorder %s11, 1
    %p50 = scmp.ne.s32.totalorder %s45, %s47
    %p51 = scmp.eq.s32.totalorder %s11, 0
    %p52 = por %p50, %p51
    %p53 = scmp.ne.s32.totalorder %s45, %s47
    %p54 = scmp.eq.s32.totalorder %s16, 1
    %p55 = por %p53, %p54
    %p56 = scmp.ne.s32.totalorder %s47, %s48
    %p57 = scmp.eq.s32.totalorder %s16, 0
    %p58 = por %p56, %p57
    %p59 = scmp.ne.s32.totalorder %s47, %s48
    %p60 = scmp.eq.s32.totalorder %s17, 1
    %p61 = por %p59, %p60
    %p63 = scmp.ne.s32.totalorder %s48, %s62
    %p64 = scmp.eq.s32.totalorder %s17, 0
    %p65 = por %p63, %p64
    %s66 = ssub.s32 %s11, %s18
    %p67 = scmp.eq.s32.totalorder %s66, 0
    %s69 = sadd.s32 %s68, 1
    %s70 = scalar_select %p67, %s68, %s69
    %p73 = pneg %p67
    %p74 = scmp.eq.s32.totalorder %s11, 1
    %p75 = por %p73, %p74
    %p76 = scmp.ne.s32.totalorder %s68, %s71
    %p77 = scmp.eq.s32.totalorder %s11, 0
    %p78 = por %p76, %p77
    %p79 = scmp.ne.s32.totalorder %s68, %s71
    %p80 = scmp.eq.s32.totalorder %s16, 1
    %p81 = por %p79, %p80
    %p82 = scmp.ne.s32.totalorder %s71, %s72
    %p83 = scmp.eq.s32.totalorder %s16, 0
    %p84 = por %p82, %p83
    %p85 = scmp.ne.s32.totalorder %s71, %s72
    %p86 = scmp.eq.s32.totalorder %s17, 1
    %p87 = por %p85, %p86
    %p89 = scmp.ne.s32.totalorder %s72, %s88
    %p90 = scmp.eq.s32.totalorder %s17, 0
    %p91 = por %p89, %p90
    %s92 = ssub.s32 %s11, %s18
    %p93 = scmp.eq.s32.totalorder %s92, 0
    %s95 = sadd.s32 %s94, 1
    %s96 = scalar_select %p93, %s94, %s95
    %p99 = pneg %p93
    %p100 = scmp.eq.s32.totalorder %s11, 1
    %p101 = por %p99, %p100
    %p102 = scmp.ne.s32.totalorder %s94, %s97
    %p103 = scmp.eq.s32.totalorder %s11, 0
    %p104 = por %p102, %p103
    %p105 = scmp.ne.s32.totalorder %s94, %s97
    %p106 = scmp.eq.s32.totalorder %s16, 1
    %p107 = por %p105, %p106
    %p108 = scmp.ne.s32.totalorder %s97, %s98
    %p109 = scmp.eq.s32.totalorder %s16, 0
    %p110 = por %p108, %p109
    %p111 = scmp.ne.s32.totalorder %s97, %s98
    %p112 = scmp.eq.s32.totalorder %s17, 1
    %p113 = por %p111, %p112
    %p115 = scmp.ne.s32.totalorder %s98, %s114
    %p116 = scmp.eq.s32.totalorder %s17, 0
    %p117 = por %p115, %p116
    %s118 = ssub.s32 %s11, %s18
    %p119 = scmp.eq.s32.totalorder %s118, 0
    %s121 = sadd.s32 %s120, 1
    %s122 = scalar_select %p119, %s120, %s121
    %p125 = pneg %p119
    %p126 = scmp.eq.s32.totalorder %s11, 1
    %p127 = por %p125, %p126
    %p128 = scmp.ne.s32.totalorder %s120, %s123
    %p129 = scmp.eq.s32.totalorder %s11, 0
    %p130 = por %p128, %p129
    %p131 = scmp.ne.s32.totalorder %s120, %s123
    %p132 = scmp.eq.s32.totalorder %s16, 1
    %p133 = por %p131, %p132
    %p134 = scmp.ne.s32.totalorder %s123, %s124
    %p135 = scmp.eq.s32.totalorder %s16, 0
    %p136 = por %p134, %p135
    %p137 = scmp.ne.s32.totalorder %s123, %s124
    %p138 = scmp.eq.s32.totalorder %s17, 1
    %p139 = por %p137, %p138
    %p141 = scmp.ne.s32.totalorder %s124, %s140
    %p142 = scmp.eq.s32.totalorder %s17, 0
    %p143 = por %p141, %p142
    %p144 = scmp.le.s32.totalorder 1, %s11
    %p145 = scmp.lt.s32.totalorder %s11, 3
    %p146 = pnand %p144, %p145
    %p147 = pneg %p146
    // Predicated region
    $region9: #{bottleneck_se.5} parent=5 // pred_check
      _
    $region10: #{bottleneck_se.5} parent=5 // pred_check_branch
      %149 = sbr.rel (%p146) target = $region12
    $region11: #{bottleneck_se.5} parent=5 // pred_region
      %s150 = ssub.s32 %s11, 1
      // Predicated region
      $region13: #{bottleneck_se.5} parent=11 // pred_check
        %p151 = pneg %p58
      $region14: #{bottleneck_se.5} parent=11 // pred_check_branch
        %153 = sbr.rel (%p151) target = $region16
      $region15: #{bottleneck_se.5} parent=11 // pred_region
        _
      $region16: #{bottleneck_se.5} parent=11 // pred_fallthru
        _
    $region12: #{bottleneck_se.5} parent=5 // pred_fallthru
      _
    %p154 = scmp.lt.s32.totalorder %s11, 2
    // Predicated region
    $region17: #{bottleneck_se.5} parent=5 // pred_check
      %p155 = pneg %p154
    $region18: #{bottleneck_se.5} parent=5 // pred_check_branch
      %157 = sbr.rel (%p155) target = $region20
    $region19: #{bottleneck_se.5} parent=5 // pred_region
      // Predicated region
      $region21: #{bottleneck_se.5} parent=19 // pred_check
        %p158 = pneg %p31
      $region22: #{bottleneck_se.5} parent=19 // pred_check_branch
        %160 = sbr.rel (%p158) target = $region24
      $region23: #{bottleneck_se.5} parent=19 // pred_region
        %p161 = scmp.lt.s32.totalorder %s11, 1
        %s162 = scalar_select %p161, %s11, 1
        %s163 = smul.addr %s162, 54
        %s164 = smul.addr %s163, 4
        %s165 = scalar_lea.vmem %s0, %s164
      $region24: #{bottleneck_se.5} parent=19 // pred_fallthru
        _
    $region20: #{bottleneck_se.5} parent=5 // pred_fallthru
      _
    %p166 = scmp.le.s32.totalorder 1, %s11
    %p167 = scmp.lt.s32.totalorder %s11, 3
    %p168 = pnand %p166, %p167
    %p169 = pneg %p168
    // Predicated region
    $region25: #{bottleneck_se.5} parent=5 // pred_check
      _
    $region26: #{bottleneck_se.5} parent=5 // pred_check_branch
      %171 = sbr.rel (%p168) target = $region28
    $region27: #{bottleneck_se.5} parent=5 // pred_region
      %s172 = ssub.s32 %s11, 1
      %p173 = scmp.lt.s32.totalorder %s16, 1
      %s174 = scalar_select %p173, %s16, 1
      %s175 = smul.addr %s174, 54
      %s176 = smul.addr %s175, 4
      %s177 = scalar_lea.vmem %s0, %s176
      %p178 = pneg %p37
      %p179 = pneg %p34
      %p180 = pneg %p58
      %p181 = pneg %p55
      %p182 = pneg %p84
      %p183 = pneg %p81
      %p184 = scmp.lt.s32.totalorder %s16, 1
      %s185 = scalar_select %p184, %s16, 1
      %s186 = smul.addr %s185, 32
      %s187 = smul.addr %s186, 4
      %s188 = scalar_lea.vmem %s2, %s187
      %p189 = pneg %p110
      %p190 = pneg %p107
      %p191 = scmp.lt.s32.totalorder %s16, 1
      %s192 = scalar_select %p191, %s16, 1
      %s193 = scalar_lea.vmem %s3, %s192
      %p194 = pneg %p136
      %p195 = pneg %p133
      %p196 = scmp.lt.s32.totalorder %s16, 1
      %s197 = scalar_select %p196, %s16, 1
      %s198 = scalar_lea.vmem %s4, %s197
      %p199 = scmp.lt.s32.totalorder %s16, 1
      %s200 = scalar_select %p199, %s16, 1
      %s201 = smul.addr %s200, 54
      %s202 = smul.addr %s201, 4
      %s203 = scalar_lea.vmem %s0, %s202
      %p204 = scmp.lt.s32.totalorder %s16, 1
      %s205 = scalar_select %p204, %s16, 1
      %s206 = smul.addr %s205, 32
      %s207 = smul.addr %s206, 4
      %s208 = scalar_lea.vmem %s2, %s207
      %p209 = scmp.lt.s32.totalorder %s16, 1
      %s210 = scalar_select %p209, %s16, 1
      %s211 = scalar_lea.vmem %s3, %s210
      %p212 = scmp.lt.s32.totalorder %s16, 1
      %s213 = scalar_select %p212, %s16, 1
      %s214 = scalar_lea.vmem %s4, %s213
      %v216 = vld [vmem:[%s203] sm:$0xf]
      %v217 = vld [vmem:[%s203 + $0x4] sm:$0xf]
      %v218 = vld [vmem:[%s203 + $0x8] sm:$0x1]
      %v219 = vld [vmem:[%s203 + $0xc] sm:$0xf]
      %v220 = vld [vmem:[%s203 + $0x10] sm:$0xf]
      %v221 = vld [vmem:[%s203 + $0x14] sm:$0x1]
      %v222 = vld [vmem:[%s203 + $0x18] sm:$0xf]
      %v223 = vld [vmem:[%s203 + $0x1c] sm:$0xf]
      %v224 = vld [vmem:[%s203 + $0x20] sm:$0x1]
      %v225 = vld [vmem:[%s203 + $0x24] sm:$0xf]
      %v226 = vld [vmem:[%s203 + $0x28] sm:$0xf]
      %v227 = vld [vmem:[%s203 + $0x2c] sm:$0x1]
      %v228 = vld [vmem:[%s203 + $0x30] sm:$0xf]
      %v229 = vld [vmem:[%s203 + $0x34] sm:$0xf]
      %v230 = vld [vmem:[%s203 + $0x38] sm:$0x1]
      %v231 = vld [vmem:[%s203 + $0x3c] sm:$0xf]
      %v232 = vld [vmem:[%s203 + $0x40] sm:$0xf]
      %v233 = vld [vmem:[%s203 + $0x44] sm:$0x1]
      %v234 = vld [vmem:[%s203 + $0x48] sm:$0xf]
      %v235 = vld [vmem:[%s203 + $0x4c] sm:$0xf]
      %v236 = vld [vmem:[%s203 + $0x50] sm:$0x1]
      %v237 = vld [vmem:[%s203 + $0x54] sm:$0xf]
      %v238 = vld [vmem:[%s203 + $0x58] sm:$0xf]
      %v239 = vld [vmem:[%s203 + $0x5c] sm:$0x1]
      %v240 = vld [vmem:[%s203 + $0x60] sm:$0xf]
      %v241 = vld [vmem:[%s203 + $0x64] sm:$0xf]
      %v242 = vld [vmem:[%s203 + $0x68] sm:$0x1]
      %v243 = vld [vmem:[%s203 + $0x6c] sm:$0xf]
      %v244 = vld [vmem:[%s203 + $0x70] sm:$0xf]
      %v245 = vld [vmem:[%s203 + $0x74] sm:$0x1]
      %v246 = vld [vmem:[%s203 + $0x78] sm:$0xf]
      %v247 = vld [vmem:[%s203 + $0x7c] sm:$0xf]
      %v248 = vld [vmem:[%s203 + $0x80] sm:$0x1]
      %v249 = vld [vmem:[%s203 + $0x84] sm:$0xf]
      %v250 = vld [vmem:[%s203 + $0x88] sm:$0xf]
      %v251 = vld [vmem:[%s203 + $0x8c] sm:$0x1]
      %v252 = vld [vmem:[%s203 + $0x90] sm:$0xf]
      %v253 = vld [vmem:[%s203 + $0x94] sm:$0xf]
      %v254 = vld [vmem:[%s203 + $0x98] sm:$0x1]
      %v255 = vld [vmem:[%s203 + $0x9c] sm:$0xf]
      %v256 = vld [vmem:[%s203 + $0xa0] sm:$0xf]
      %v257 = vld [vmem:[%s203 + $0xa4] sm:$0x1]
      %v258 = vld [vmem:[%s203 + $0xa8] sm:$0xf]
      %v259 = vld [vmem:[%s203 + $0xac] sm:$0xf]
      %v260 = vld [vmem:[%s203 + $0xb0] sm:$0x1]
      %v261 = vld [vmem:[%s203 + $0xb4] sm:$0xf]
      %v262 = vld [vmem:[%s203 + $0xb8] sm:$0xf]
      %v263 = vld [vmem:[%s203 + $0xbc] sm:$0x1]
      %v264 = vld [vmem:[%s203 + $0xc0] sm:$0xf]
      %v265 = vld [vmem:[%s203 + $0xc4] sm:$0xf]
      %v266 = vld [vmem:[%s203 + $0xc8] sm:$0x1]
      %v267 = vld [vmem:[%s203 + $0xcc] sm:$0xf]
      %v268 = vld [vmem:[%s203 + $0xd0] sm:$0xf]
      %v269 = vld [vmem:[%s203 + $0xd4] sm:$0x1]
      %v270 = vld [vmem:[%s1] sm:$0xf]
      %v271 = vld [vmem:[%s1 + $0x4] sm:$0xf]
      %v272 = vld [vmem:[%s1 + $0x8] sm:$0xf]
      %v273 = vld [vmem:[%s1 + $0xc] sm:$0xf]
      %vm274 = vsmask.f32 3328
      %vm275 = vsmask.f32 7440
      %vm276 = vmor %vm274, %vm275
      %v278 = vshrl.u32 %v216, 16
      %v280 = vrot.slane %v278, 4
      %v281 = vshll.u32 %v216, 16
      %v283 = vrot.slane %v281, 5
      %v284 = vor.u32 %v280, %v283
      %v285 = vrot.slane %v284, 4
      %v287 = vshll.u32 %v217, 16
      %v289 = vrot.slane %v287, 5
      %v290 = vsel %vm276, %v285, %v289
      %v291 = vshrl.u32 %v217, 16
      %v293 = vrot.slane %v291, 4
      %v294 = vor.u32 %v293, %v289
      %v295 = vrot.slane %v294, 4
      %v297 = vshll.u32 %v218, 16
      %v299 = vrot.slane %v297, 5
      %v300 = vsel %vm276, %v295, %v299
      %v302 = vshrl.u32 %v219, 16
      %v304 = vrot.slane %v302, 4
      %v305 = vshll.u32 %v219, 16
      %v307 = vrot.slane %v305, 5
      %v308 = vor.u32 %v304, %v307
      %v309 = vrot.slane %v308, 4
      %v311 = vshll.u32 %v220, 16
      %v313 = vrot.slane %v311, 5
      %v314 = vsel %vm276, %v309, %v313
      %v315 = vshrl.u32 %v220, 16
      %v317 = vrot.slane %v315, 4
      %v318 = vor.u32 %v317, %v313
      %v319 = vrot.slane %v318, 4
      %v321 = vshll.u32 %v221, 16
      %v323 = vrot.slane %v321, 5
      %v324 = vsel %vm276, %v319, %v323
      %v326 = vshrl.u32 %v222, 16
      %v328 = vrot.slane %v326, 4
      %v329 = vshll.u32 %v222, 16
      %v331 = vrot.slane %v329, 5
      %v332 = vor.u32 %v328, %v331
      %v333 = vrot.slane %v332, 4
      %v335 = vshll.u32 %v223, 16
      %v337 = vrot.slane %v335, 5
      %v338 = vsel %vm276, %v333, %v337
      %v339 = vshrl.u32 %v223, 16
      %v341 = vrot.slane %v339, 4
      %v342 = vor.u32 %v341, %v337
      %v343 = vrot.slane %v342, 4
      %v345 = vshll.u32 %v224, 16
      %v347 = vrot.slane %v345, 5
      %v348 = vsel %vm276, %v343, %v347
      %v350 = vshrl.u32 %v225, 16
      %v352 = vrot.slane %v350, 4
      %v353 = vshll.u32 %v225, 16
      %v355 = vrot.slane %v353, 5
      %v356 = vor.u32 %v352, %v355
      %v357 = vrot.slane %v356, 4
      %v359 = vshll.u32 %v226, 16
      %v361 = vrot.slane %v359, 5
      %v362 = vsel %vm276, %v357, %v361
      %v363 = vshrl.u32 %v226, 16
      %v365 = vrot.slane %v363, 4
      %v366 = vor.u32 %v365, %v361
      %v367 = vrot.slane %v366, 4
      %v369 = vshll.u32 %v227, 16
      %v371 = vrot.slane %v369, 5
      %v372 = vsel %vm276, %v367, %v371
      %v374 = vshrl.u32 %v228, 16
      %v376 = vrot.slane %v374, 4
      %v377 = vshll.u32 %v228, 16
      %v379 = vrot.slane %v377, 5
      %v380 = vor.u32 %v376, %v379
      %v381 = vrot.slane %v380, 4
      %v383 = vshll.u32 %v229, 16
      %v385 = vrot.slane %v383, 5
      %v386 = vsel %vm276, %v381, %v385
      %v387 = vshrl.u32 %v229, 16
      %v389 = vrot.slane %v387, 4
      %v390 = vor.u32 %v389, %v385
      %v391 = vrot.slane %v390, 4
      %v393 = vshll.u32 %v230, 16
      %v395 = vrot.slane %v393, 5
      %v396 = vsel %vm276, %v391, %v395
      %v398 = vshrl.u32 %v231, 16
      %v400 = vrot.slane %v398, 4
      %v401 = vshll.u32 %v231, 16
      %v403 = vrot.slane %v401, 5
      %v404 = vor.u32 %v400, %v403
      %v405 = vrot.slane %v404, 4
      %v407 = vshll.u32 %v232, 16
      %v409 = vrot.slane %v407, 5
      %v410 = vsel %vm276, %v405, %v409
      %v411 = vshrl.u32 %v232, 16
      %v413 = vrot.slane %v411, 4
      %v414 = vor.u32 %v413, %v409
      %v415 = vrot.slane %v414, 4
      %v417 = vshll.u32 %v233, 16
      %v419 = vrot.slane %v417, 5
      %v420 = vsel %vm276, %v415, %v419
      %v422 = vshrl.u32 %v234, 16
      %v424 = vrot.slane %v422, 4
      %v425 = vshll.u32 %v234, 16
      %v427 = vrot.slane %v425, 5
      %v428 = vor.u32 %v424, %v427
      %v429 = vrot.slane %v428, 4
      %v431 = vshll.u32 %v235, 16
      %v433 = vrot.slane %v431, 5
      %v434 = vsel %vm276, %v429, %v433
      %v435 = vshrl.u32 %v235, 16
      %v437 = vrot.slane %v435, 4
      %v438 = vor.u32 %v437, %v433
      %v439 = vrot.slane %v438, 4
      %v441 = vshll.u32 %v236, 16
      %v443 = vrot.slane %v441, 5
      %v444 = vsel %vm276, %v439, %v443
      %v446 = vshrl.u32 %v237, 16
      %v448 = vrot.slane %v446, 4
      %v449 = vshll.u32 %v237, 16
      %v451 = vrot.slane %v449, 5
      %v452 = vor.u32 %v448, %v451
      %v453 = vrot.slane %v452, 4
      %v455 = vshll.u32 %v238, 16
      %v457 = vrot.slane %v455, 5
      %v458 = vsel %vm276, %v453, %v457
      %v459 = vshrl.u32 %v238, 16
      %v461 = vrot.slane %v459, 4
      %v462 = vor.u32 %v461, %v457
      %v463 = vrot.slane %v462, 4
      %v465 = vshll.u32 %v239, 16
      %v467 = vrot.slane %v465, 5
      %v468 = vsel %vm276, %v463, %v467
      %v470 = vshrl.u32 %v240, 16
      %v472 = vrot.slane %v470, 4
      %v473 = vshll.u32 %v240, 16
      %v475 = vrot.slane %v473, 5
      %v476 = vor.u32 %v472, %v475
      %v477 = vrot.slane %v476, 4
      %v479 = vshll.u32 %v241, 16
      %v481 = vrot.slane %v479, 5
      %v482 = vsel %vm276, %v477, %v481
      %v483 = vshrl.u32 %v241, 16
      %v485 = vrot.slane %v483, 4
      %v486 = vor.u32 %v485, %v481
      %v487 = vrot.slane %v486, 4
      %v489 = vshll.u32 %v242, 16
      %v491 = vrot.slane %v489, 5
      %v492 = vsel %vm276, %v487, %v491
      %v494 = vshrl.u32 %v243, 16
      %v496 = vrot.slane %v494, 4
      %v497 = vshll.u32 %v243, 16
      %v499 = vrot.slane %v497, 5
      %v500 = vor.u32 %v496, %v499
      %v501 = vrot.slane %v500, 4
      %v503 = vshll.u32 %v244, 16
      %v505 = vrot.slane %v503, 5
      %v506 = vsel %vm276, %v501, %v505
      %v507 = vshrl.u32 %v244, 16
      %v509 = vrot.slane %v507, 4
      %v510 = vor.u32 %v509, %v505
      %v511 = vrot.slane %v510, 4
      %v513 = vshll.u32 %v245, 16
      %v515 = vrot.slane %v513, 5
      %v516 = vsel %vm276, %v511, %v515
      %v518 = vshrl.u32 %v246, 16
      %v520 = vrot.slane %v518, 4
      %v521 = vshll.u32 %v246, 16
      %v523 = vrot.slane %v521, 5
      %v524 = vor.u32 %v520, %v523
      %v525 = vrot.slane %v524, 4
      %v527 = vshll.u32 %v247, 16
      %v529 = vrot.slane %v527, 5
      %v530 = vsel %vm276, %v525, %v529
      %v531 = vshrl.u32 %v247, 16
      %v533 = vrot.slane %v531, 4
      %v534 = vor.u32 %v533, %v529
      %v535 = vrot.slane %v534, 4
      %v537 = vshll.u32 %v248, 16
      %v539 = vrot.slane %v537, 5
      %v540 = vsel %vm276, %v535, %v539
      %v542 = vshrl.u32 %v249, 16
      %v544 = vrot.slane %v542, 4
      %v545 = vshll.u32 %v249, 16
      %v547 = vrot.slane %v545, 5
      %v548 = vor.u32 %v544, %v547
      %v549 = vrot.slane %v548, 4
      %v551 = vshll.u32 %v250, 16
      %v553 = vrot.slane %v551, 5
      %v554 = vsel %vm276, %v549, %v553
      %v555 = vshrl.u32 %v250, 16
      %v557 = vrot.slane %v555, 4
      %v558 = vor.u32 %v557, %v553
      %v559 = vrot.slane %v558, 4
      %v561 = vshll.u32 %v251, 16
      %v563 = vrot.slane %v561, 5
      %v564 = vsel %vm276, %v559, %v563
      %v566 = vshrl.u32 %v252, 16
      %v568 = vrot.slane %v566, 4
      %v569 = vshll.u32 %v252, 16
      %v571 = vrot.slane %v569, 5
      %v572 = vor.u32 %v568, %v571
      %v573 = vrot.slane %v572, 4
      %v575 = vshll.u32 %v253, 16
      %v577 = vrot.slane %v575, 5
      %v578 = vsel %vm276, %v573, %v577
      %v579 = vshrl.u32 %v253, 16
      %v581 = vrot.slane %v579, 4
      %v582 = vor.u32 %v581, %v577
      %v583 = vrot.slane %v582, 4
      %v585 = vshll.u32 %v254, 16
      %v587 = vrot.slane %v585, 5
      %v588 = vsel %vm276, %v583, %v587
      %v590 = vshrl.u32 %v255, 16
      %v592 = vrot.slane %v590, 4
      %v593 = vshll.u32 %v255, 16
      %v595 = vrot.slane %v593, 5
      %v596 = vor.u32 %v592, %v595
      %v597 = vrot.slane %v596, 4
      %v599 = vshll.u32 %v256, 16
      %v601 = vrot.slane %v599, 5
      %v602 = vsel %vm276, %v597, %v601
      %v603 = vshrl.u32 %v256, 16
      %v605 = vrot.slane %v603, 4
      %v606 = vor.u32 %v605, %v601
      %v607 = vrot.slane %v606, 4
      %v609 = vshll.u32 %v257, 16
      %v611 = vrot.slane %v609, 5
      %v612 = vsel %vm276, %v607, %v611
      %v614 = vshrl.u32 %v258, 16
      %v616 = vrot.slane %v614, 4
      %v617 = vshll.u32 %v258, 16
      %v619 = vrot.slane %v617, 5
      %v620 = vor.u32 %v616, %v619
      %v621 = vrot.slane %v620, 4
      %v623 = vshll.u32 %v259, 16
      %v625 = vrot.slane %v623, 5
      %v626 = vsel %vm276, %v621, %v625
      %v627 = vshrl.u32 %v259, 16
      %v629 = vrot.slane %v627, 4
      %v630 = vor.u32 %v629, %v625
      %v631 = vrot.slane %v630, 4
      %v633 = vshll.u32 %v260, 16
      %v635 = vrot.slane %v633, 5
      %v636 = vsel %vm276, %v631, %v635
      %v638 = vshrl.u32 %v261, 16
      %v640 = vrot.slane %v638, 4
      %v641 = vshll.u32 %v261, 16
      %v643 = vrot.slane %v641, 5
      %v644 = vor.u32 %v640, %v643
      %v645 = vrot.slane %v644, 4
      %v647 = vshll.u32 %v262, 16
      %v649 = vrot.slane %v647, 5
      %v650 = vsel %vm276, %v645, %v649
      %v651 = vshrl.u32 %v262, 16
      %v653 = vrot.slane %v651, 4
      %v654 = vor.u32 %v653, %v649
      %v655 = vrot.slane %v654, 4
      %v657 = vshll.u32 %v263, 16
      %v659 = vrot.slane %v657, 5
      %v660 = vsel %vm276, %v655, %v659
      %s661 = scalar_lea.vmem %s1, 16
      %v662 = vld [vmem:[%s661] sm:$0xf]
      %v663 = vld [vmem:[%s661 + $0x4] sm:$0xf]
      %v664 = vld [vmem:[%s661 + $0x8] sm:$0xf]
      %v665 = vld [vmem:[%s661 + $0xc] sm:$0xf]
      %v666 = vunpack.c.l.b16 %v290
      %v667 = vunpack.c.l.b16 %v300
      %v668 = vunpack.c.l.b16 %v314
      %v669 = vunpack.c.l.b16 %v324
      %v670 = vunpack.c.l.b16 %v338
      %v671 = vunpack.c.l.b16 %v348
      %v672 = vunpack.c.l.b16 %v362
      %v673 = vunpack.c.l.b16 %v372
      %v674 = vunpack.c.l.b16 %v386
      %v675 = vunpack.c.l.b16 %v396
      %v676 = vunpack.c.l.b16 %v410
      %v677 = vunpack.c.l.b16 %v420
      %v678 = vunpack.c.l.b16 %v434
      %v679 = vunpack.c.l.b16 %v444
      %v680 = vunpack.c.l.b16 %v458
      %v681 = vunpack.c.l.b16 %v468
      %v682 = vunpack.c.l.b16 %v482
      %v683 = vunpack.c.l.b16 %v492
      %v684 = vunpack.c.l.b16 %v506
      %v685 = vunpack.c.l.b16 %v516
      %v686 = vunpack.c.l.b16 %v530
      %v687 = vunpack.c.l.b16 %v540
      %v688 = vunpack.c.l.b16 %v554
      %v689 = vunpack.c.l.b16 %v564
      %v690 = vunpack.c.l.b16 %v578
      %v691 = vunpack.c.l.b16 %v588
      %v692 = vunpack.c.l.b16 %v602
      %v693 = vunpack.c.l.b16 %v612
      %v694 = vunpack.c.l.b16 %v626
      %v695 = vunpack.c.l.b16 %v636
      %v696 = vunpack.c.l.b16 %v650
      %v697 = vunpack.c.l.b16 %v660
      %v698 = vpack.c.b16 %v667, %v666
      %v699 = vpack.c.b16 %v669, %v668
      %v700 = vpack.c.b16 %v671, %v670
      %v701 = vpack.c.b16 %v673, %v672
      %v702 = vpack.c.b16 %v675, %v674
      %v703 = vpack.c.b16 %v677, %v676
      %v704 = vpack.c.b16 %v679, %v678
      %v705 = vpack.c.b16 %v681, %v680
      %v706 = vpack.c.b16 %v683, %v682
      %v707 = vpack.c.b16 %v685, %v684
      %v708 = vpack.c.b16 %v687, %v686
      %v709 = vpack.c.b16 %v689, %v688
      %v710 = vpack.c.b16 %v691, %v690
      %v711 = vpack.c.b16 %v693, %v692
      %v712 = vpack.c.b16 %v695, %v694
      %v713 = vpack.c.b16 %v697, %v696
      %v718 = vunpack.c.l.b16 %v662
      %v719 = vunpack.c.l.b16 %v663
      %v720 = vunpack.c.l.b16 %v664
      %v721 = vunpack.c.l.b16 %v665
      %v722 = vpack.c.b16 %v719, %v718
      %v723 = vpack.c.b16 %v721, %v720
      %vm726 = vcmask 261120
      %v728 = vsel %vm726, %v698, 0
      %v731 = vsel %vm726, %v699, 0
      %v734 = vsel %vm726, %v700, 0
      %v737 = vsel %vm726, %v701, 0
      %v740 = vsel %vm726, %v702, 0
      %v743 = vsel %vm726, %v703, 0
      %v746 = vsel %vm726, %v704, 0
      %v749 = vsel %vm726, %v705, 0
      %v752 = vsel %vm726, %v706, 0
      %v755 = vsel %vm726, %v707, 0
      %v758 = vsel %vm726, %v708, 0
      %v761 = vsel %vm726, %v709, 0
      %v764 = vsel %vm726, %v710, 0
      %v767 = vsel %vm726, %v711, 0
      %v770 = vsel %vm726, %v712, 0
      %v773 = vsel %vm726, %v713, 0
      %775 = vmatprep.subr.bf16.mxu0 0
      %776 = vmatpush1.bf16.msra.mxu0 0
      %777 = vmatprep.subr.bf16.mxu0 0
      %778 = vmatpush1.bf16.msra.mxu0 0
      %779 = vmatprep.subr.bf16.mxu0 0
      %780 = vmatpush1.bf16.msra.mxu0 0
      %781 = vmatprep.subr.bf16.mxu0 0
      %782 = vmatpush1.bf16.msra.mxu0 0
      %783 = vmatprep.subr.bf16.mxu0 0
      %784 = vmatpush1.bf16.msra.mxu0 0
      %785 = vmatprep.subr.bf16.mxu0 0
      %786 = vmatpush1.bf16.msra.mxu0 0
      %787 = vmatprep.subr.bf16.mxu0 0
      %788 = vmatpush1.bf16.msra.mxu0 %v723
      %789 = vmatprep.subr.bf16.mxu0 0
      %790 = vmatpush1.bf16.msra.mxu0 %v722
      %791 = vmatprep.subr.bf16.mxu0 0
      %792 = vmatpush2.bf16.msra.mxu0 0
      %793 = vmatprep.subr.bf16.mxu0 0
      %794 = vmatpush2.bf16.msra.mxu0 0
      %795 = vmatprep.subr.bf16.mxu0 0
      %796 = vmatpush2.bf16.msra.mxu0 0
      %797 = vmatprep.subr.bf16.mxu0 0
      %798 = vmatpush2.bf16.msra.mxu0 0
      %799 = vmatprep.subr.bf16.mxu0 0
      %800 = vmatpush2.bf16.msra.mxu0 0
      %801 = vmatprep.subr.bf16.mxu0 0
      %802 = vmatpush2.bf16.msra.mxu0 0
      %803 = vmatprep.subr.bf16.mxu0 0
      %804 = vmatpush2.bf16.msra.mxu0 0
      %805 = vmatprep.subr.bf16.mxu0 0
      %806 = vmatpush2.bf16.msra.mxu0 0
      %807 = vmatprep.mubr.bf16.mxu0 0
      %808 = vmatmul.mubr.bf16.gmra.mxu0 %v728
      %v809 = vpop.f32.mrf.mxu0
      %v810 = vadd.f32 0.0, %v809
      %v811 = vpop.f32.mrf.mxu0
      %v812 = vpop.f32.mrf.mxu0
      %v813 = vadd.f32 0.0, %v812
      %v814 = vpop.f32.mrf.mxu0
      %815 = vmatprep.mubr.bf16.mxu0 0
      %816 = vmatmul.mubr.bf16.gmra.mxu0 %v731
      %v817 = vpop.f32.mrf.mxu0
      %v818 = vadd.f32 0.0, %v817
      %v819 = vpop.f32.mrf.mxu0
      %v820 = vpop.f32.mrf.mxu0
      %v821 = vadd.f32 0.0, %v820
      %v822 = vpop.f32.mrf.mxu0
      %823 = vmatprep.mubr.bf16.mxu0 0
      %824 = vmatmul.mubr.bf16.gmra.mxu0 %v734
      %v825 = vpop.f32.mrf.mxu0
      %v826 = vadd.f32 0.0, %v825
      %v827 = vpop.f32.mrf.mxu0
      %v828 = vpop.f32.mrf.mxu0
      %v829 = vadd.f32 0.0, %v828
      %v830 = vpop.f32.mrf.mxu0
      %831 = vmatprep.mubr.bf16.mxu0 0
      %832 = vmatmul.mubr.bf16.gmra.mxu0 %v737
      %v833 = vpop.f32.mrf.mxu0
      %v834 = vadd.f32 0.0, %v833
      %v835 = vpop.f32.mrf.mxu0
      %v836 = vpop.f32.mrf.mxu0
      %v837 = vadd.f32 0.0, %v836
      %v838 = vpop.f32.mrf.mxu0
      %839 = vmatprep.mubr.bf16.mxu0 0
      %840 = vmatmul.mubr.bf16.gmra.mxu0 %v740
      %v841 = vpop.f32.mrf.mxu0
      %v842 = vadd.f32 0.0, %v841
      %v843 = vpop.f32.mrf.mxu0
      %v844 = vpop.f32.mrf.mxu0
      %v845 = vadd.f32 0.0, %v844
      %v846 = vpop.f32.mrf.mxu0
      %847 = vmatprep.mubr.bf16.mxu0 0
      %848 = vmatmul.mubr.bf16.gmra.mxu0 %v743
      %v849 = vpop.f32.mrf.mxu0
      %v850 = vadd.f32 0.0, %v849
      %v851 = vpop.f32.mrf.mxu0
      %v852 = vpop.f32.mrf.mxu0
      %v853 = vadd.f32 0.0, %v852
      %v854 = vpop.f32.mrf.mxu0
      %855 = vmatprep.mubr.bf16.mxu0 0
      %856 = vmatmul.mubr.bf16.gmra.mxu0 %v746
      %v857 = vpop.f32.mrf.mxu0
      %v858 = vadd.f32 0.0, %v857
      %v859 = vpop.f32.mrf.mxu0
      %v860 = vpop.f32.mrf.mxu0
      %v861 = vadd.f32 0.0, %v860
      %v862 = vpop.f32.mrf.mxu0
      %863 = vmatprep.mubr.bf16.mxu0 0
      %864 = vmatmul.mubr.bf16.gmra.mxu0 %v749
      %v865 = vpop.f32.mrf.mxu0
      %v866 = vadd.f32 0.0, %v865
      %v867 = vpop.f32.mrf.mxu0
      %v868 = vpop.f32.mrf.mxu0
      %v869 = vadd.f32 0.0, %v868
      %v870 = vpop.f32.mrf.mxu0
      %871 = vmatprep.mubr.bf16.mxu0 0
      %872 = vmatmul.mubr.bf16.gmra.mxu0 %v752
      %v873 = vpop.f32.mrf.mxu0
      %v874 = vadd.f32 0.0, %v873
      %v875 = vpop.f32.mrf.mxu0
      %v876 = vpop.f32.mrf.mxu0
      %v877 = vadd.f32 0.0, %v876
      %v878 = vpop.f32.mrf.mxu0
      %879 = vmatprep.mubr.bf16.mxu0 0
      %880 = vmatmul.mubr.bf16.gmra.mxu0 %v755
      %v881 = vpop.f32.mrf.mxu0
      %v882 = vadd.f32 0.0, %v881
      %v883 = vpop.f32.mrf.mxu0
      %v884 = vpop.f32.mrf.mxu0
      %v885 = vadd.f32 0.0, %v884
      %v886 = vpop.f32.mrf.mxu0
      %887 = vmatprep.mubr.bf16.mxu0 0
      %888 = vmatmul.mubr.bf16.gmra.mxu0 %v758
      %v889 = vpop.f32.mrf.mxu0
      %v890 = vadd.f32 0.0, %v889
      %v891 = vpop.f32.mrf.mxu0
      %v892 = vpop.f32.mrf.mxu0
      %v893 = vadd.f32 0.0, %v892
      %v894 = vpop.f32.mrf.mxu0
      %895 = vmatprep.mubr.bf16.mxu0 0
      %896 = vmatmul.mubr.bf16.gmra.mxu0 %v761
      %v897 = vpop.f32.mrf.mxu0
      %v898 = vadd.f32 0.0, %v897
      %v899 = vpop.f32.mrf.mxu0
      %v900 = vpop.f32.mrf.mxu0
      %v901 = vadd.f32 0.0, %v900
      %v902 = vpop.f32.mrf.mxu0
      %903 = vmatprep.mubr.bf16.mxu0 0
      %904 = vmatmul.mubr.bf16.gmra.mxu0 %v764
      %v905 = vpop.f32.mrf.mxu0
      %v906 = vadd.f32 0.0, %v905
      %v907 = vpop.f32.mrf.mxu0
      %v908 = vpop.f32.mrf.mxu0
      %v909 = vadd.f32 0.0, %v908
      %v910 = vpop.f32.mrf.mxu0
      %911 = vmatprep.mubr.bf16.mxu0 0
      %912 = vmatmul.mubr.bf16.gmra.mxu0 %v767
      %v913 = vpop.f32.mrf.mxu0
      %v914 = vadd.f32 0.0, %v913
      %v915 = vpop.f32.mrf.mxu0
      %v916 = vpop.f32.mrf.mxu0
      %v917 = vadd.f32 0.0, %v916
      %v918 = vpop.f32.mrf.mxu0
      %919 = vmatprep.mubr.bf16.mxu0 0
      %920 = vmatmul.mubr.bf16.gmra.mxu0 %v770
      %v921 = vpop.f32.mrf.mxu0
      %v922 = vadd.f32 0.0, %v921
      %v923 = vpop.f32.mrf.mxu0
      %v924 = vpop.f32.mrf.mxu0
      %v925 = vadd.f32 0.0, %v924
      %v926 = vpop.f32.mrf.mxu0
      %927 = vmatprep.mubr.bf16.mxu0 0
      %928 = vmatmul.mubr.bf16.gmra.mxu0 %v773
      %v929 = vpop.f32.mrf.mxu0
      %v930 = vadd.f32 0.0, %v929
      %v931 = vpop.f32.mrf.mxu0
      %v932 = vpop.f32.mrf.mxu0
      %v933 = vadd.f32 0.0, %v932
      %v934 = vpop.f32.mrf.mxu0
      %935 = vdwg.mxu0
      %v968 = vunpack.c.l.b16 %v216
      %v969 = vunpack.c.l.b16 %v217
      %v970 = vunpack.c.l.b16 %v219
      %v971 = vunpack.c.l.b16 %v220
      %v972 = vunpack.c.l.b16 %v222
      %v973 = vunpack.c.l.b16 %v223
      %v974 = vunpack.c.l.b16 %v225
      %v975 = vunpack.c.l.b16 %v226
      %v976 = vunpack.c.l.b16 %v228
      %v977 = vunpack.c.l.b16 %v229
      %v978 = vunpack.c.l.b16 %v231
      %v979 = vunpack.c.l.b16 %v232
      %v980 = vunpack.c.l.b16 %v234
      %v981 = vunpack.c.l.b16 %v235
      %v982 = vunpack.c.l.b16 %v237
      %v983 = vunpack.c.l.b16 %v238
      %v984 = vunpack.c.l.b16 %v240
      %v985 = vunpack.c.l.b16 %v241
      %v986 = vunpack.c.l.b16 %v243
      %v987 = vunpack.c.l.b16 %v244
      %v988 = vunpack.c.l.b16 %v246
      %v989 = vunpack.c.l.b16 %v247
      %v990 = vunpack.c.l.b16 %v249
      %v991 = vunpack.c.l.b16 %v250
      %v992 = vunpack.c.l.b16 %v252
      %v993 = vunpack.c.l.b16 %v253
      %v994 = vunpack.c.l.b16 %v255
      %v995 = vunpack.c.l.b16 %v256
      %v996 = vunpack.c.l.b16 %v258
      %v997 = vunpack.c.l.b16 %v259
      %v998 = vunpack.c.l.b16 %v261
      %v999 = vunpack.c.l.b16 %v262
      %v1000 = vpack.c.b16 %v969, %v968
      %v1001 = vpack.c.b16 %v971, %v970
      %v1002 = vpack.c.b16 %v973, %v972
      %v1003 = vpack.c.b16 %v975, %v974
      %v1004 = vpack.c.b16 %v977, %v976
      %v1005 = vpack.c.b16 %v979, %v978
      %v1006 = vpack.c.b16 %v981, %v980
      %v1007 = vpack.c.b16 %v983, %v982
      %v1008 = vpack.c.b16 %v985, %v984
      %v1009 = vpack.c.b16 %v987, %v986
      %v1010 = vpack.c.b16 %v989, %v988
      %v1011 = vpack.c.b16 %v991, %v990
      %v1012 = vpack.c.b16 %v993, %v992
      %v1013 = vpack.c.b16 %v995, %v994
      %v1014 = vpack.c.b16 %v997, %v996
      %v1015 = vpack.c.b16 %v999, %v998
      %v1020 = vunpack.c.l.b16 %v270
      %v1021 = vunpack.c.l.b16 %v271
      %v1022 = vunpack.c.l.b16 %v272
      %v1023 = vunpack.c.l.b16 %v273
      %v1024 = vpack.c.b16 %v1021, %v1020
      %v1025 = vpack.c.b16 %v1023, %v1022
      %v1029 = vsel %vm726, %v1000, 0
      %v1032 = vsel %vm726, %v1001, 0
      %v1035 = vsel %vm726, %v1002, 0
      %v1038 = vsel %vm726, %v1003, 0
      %v1041 = vsel %vm726, %v1004, 0
      %v1044 = vsel %vm726, %v1005, 0
      %v1047 = vsel %vm726, %v1006, 0
      %v1050 = vsel %vm726, %v1007, 0
      %v1053 = vsel %vm726, %v1008, 0
      %v1056 = vsel %vm726, %v1009, 0
      %v1059 = vsel %vm726, %v1010, 0
      %v1062 = vsel %vm726, %v1011, 0
      %v1065 = vsel %vm726, %v1012, 0
      %v1068 = vsel %vm726, %v1013, 0
      %v1071 = vsel %vm726, %v1014, 0
      %v1074 = vsel %vm726, %v1015, 0
      %1076 = vmatprep.subr.bf16.mxu0 0
      %1077 = vmatpush1.bf16.msra.mxu0 0
      %1078 = vmatprep.subr.bf16.mxu0 0
      %1079 = vmatpush1.bf16.msra.mxu0 0
      %1080 = vmatprep.subr.bf16.mxu0 0
      %1081 = vmatpush1.bf16.msra.mxu0 0
      %1082 = vmatprep.subr.bf16.mxu0 0
      %1083 = vmatpush1.bf16.msra.mxu0 0
      %1084 = vmatprep.subr.bf16.mxu0 0
      %1085 = vmatpush1.bf16.msra.mxu0 0
      %1086 = vmatprep.subr.bf16.mxu0 0
      %1087 = vmatpush1.bf16.msra.mxu0 0
      %1088 = vmatprep.subr.bf16.mxu0 0
      %1089 = vmatpush1.bf16.msra.mxu0 %v1025
      %1090 = vmatprep.subr.bf16.mxu0 0
      %1091 = vmatpush1.bf16.msra.mxu0 %v1024
      %1092 = vmatprep.subr.bf16.mxu0 0
      %1093 = vmatpush2.bf16.msra.mxu0 0
      %1094 = vmatprep.subr.bf16.mxu0 0
      %1095 = vmatpush2.bf16.msra.mxu0 0
      %1096 = vmatprep.subr.bf16.mxu0 0
      %1097 = vmatpush2.bf16.msra.mxu0 0
      %1098 = vmatprep.subr.bf16.mxu0 0
      %1099 = vmatpush2.bf16.msra.mxu0 0
      %1100 = vmatprep.subr.bf16.mxu0 0
      %1101 = vmatpush2.bf16.msra.mxu0 0
      %1102 = vmatprep.subr.bf16.mxu0 0
      %1103 = vmatpush2.bf16.msra.mxu0 0
      %1104 = vmatprep.subr.bf16.mxu0 0
      %1105 = vmatpush2.bf16.msra.mxu0 0
      %1106 = vmatprep.subr.bf16.mxu0 0
      %1107 = vmatpush2.bf16.msra.mxu0 0
      %1108 = vmatprep.mubr.bf16.mxu0 0
      %1109 = vmatmul.mubr.bf16.gmra.mxu0 %v1029
      %v1110 = vpop.f32.mrf.mxu0
      %v1111 = vadd.f32 %v810, %v1110
      %v1112 = vpop.f32.mrf.mxu0
      %v1113 = vpop.f32.mrf.mxu0
      %v1114 = vadd.f32 %v813, %v1113
      %v1115 = vpop.f32.mrf.mxu0
      %1116 = vmatprep.mubr.bf16.mxu0 0
      %1117 = vmatmul.mubr.bf16.gmra.mxu0 %v1032
      %v1118 = vpop.f32.mrf.mxu0
      %v1119 = vadd.f32 %v818, %v1118
      %v1120 = vpop.f32.mrf.mxu0
      %v1121 = vpop.f32.mrf.mxu0
      %v1122 = vadd.f32 %v821, %v1121
      %v1123 = vpop.f32.mrf.mxu0
      %1124 = vmatprep.mubr.bf16.mxu0 0
      %1125 = vmatmul.mubr.bf16.gmra.mxu0 %v1035
      %v1126 = vpop.f32.mrf.mxu0
      %v1127 = vadd.f32 %v826, %v1126
      %v1128 = vpop.f32.mrf.mxu0
      %v1129 = vpop.f32.mrf.mxu0
      %v1130 = vadd.f32 %v829, %v1129
      %v1131 = vpop.f32.mrf.mxu0
      %1132 = vmatprep.mubr.bf16.mxu0 0
      %1133 = vmatmul.mubr.bf16.gmra.mxu0 %v1038
      %v1134 = vpop.f32.mrf.mxu0
      %v1135 = vadd.f32 %v834, %v1134
      %v1136 = vpop.f32.mrf.mxu0
      %v1137 = vpop.f32.mrf.mxu0
      %v1138 = vadd.f32 %v837, %v1137
      %v1139 = vpop.f32.mrf.mxu0
      %1140 = vmatprep.mubr.bf16.mxu0 0
      %1141 = vmatmul.mubr.bf16.gmra.mxu0 %v1041
      %v1142 = vpop.f32.mrf.mxu0
      %v1143 = vadd.f32 %v842, %v1142
      %v1144 = vpop.f32.mrf.mxu0
      %v1145 = vpop.f32.mrf.mxu0
      %v1146 = vadd.f32 %v845, %v1145
      %v1147 = vpop.f32.mrf.mxu0
      %1148 = vmatprep.mubr.bf16.mxu0 0
      %1149 = vmatmul.mubr.bf16.gmra.mxu0 %v1044
      %v1150 = vpop.f32.mrf.mxu0
      %v1151 = vadd.f32 %v850, %v1150
      %v1152 = vpop.f32.mrf.mxu0
      %v1153 = vpop.f32.mrf.mxu0
      %v1154 = vadd.f32 %v853, %v1153
      %v1155 = vpop.f32.mrf.mxu0
      %1156 = vmatprep.mubr.bf16.mxu0 0
      %1157 = vmatmul.mubr.bf16.gmra.mxu0 %v1047
      %v1158 = vpop.f32.mrf.mxu0
      %v1159 = vadd.f32 %v858, %v1158
      %v1160 = vpop.f32.mrf.mxu0
      %v1161 = vpop.f32.mrf.mxu0
      %v1162 = vadd.f32 %v861, %v1161
      %v1163 = vpop.f32.mrf.mxu0
      %1164 = vmatprep.mubr.bf16.mxu0 0
      %1165 = vmatmul.mubr.bf16.gmra.mxu0 %v1050
      %v1166 = vpop.f32.mrf.mxu0
      %v1167 = vadd.f32 %v866, %v1166
      %v1168 = vpop.f32.mrf.mxu0
      %v1169 = vpop.f32.mrf.mxu0
      %v1170 = vadd.f32 %v869, %v1169
      %v1171 = vpop.f32.mrf.mxu0
      %1172 = vmatprep.mubr.bf16.mxu0 0
      %1173 = vmatmul.mubr.bf16.gmra.mxu0 %v1053
      %v1174 = vpop.f32.mrf.mxu0
      %v1175 = vadd.f32 %v874, %v1174
      %v1176 = vpop.f32.mrf.mxu0
      %v1177 = vpop.f32.mrf.mxu0
      %v1178 = vadd.f32 %v877, %v1177
      %v1179 = vpop.f32.mrf.mxu0
      %1180 = vmatprep.mubr.bf16.mxu0 0
      %1181 = vmatmul.mubr.bf16.gmra.mxu0 %v1056
      %v1182 = vpop.f32.mrf.mxu0
      %v1183 = vadd.f32 %v882, %v1182
      %v1184 = vpop.f32.mrf.mxu0
      %v1185 = vpop.f32.mrf.mxu0
      %v1186 = vadd.f32 %v885, %v1185
      %v1187 = vpop.f32.mrf.mxu0
      %1188 = vmatprep.mubr.bf16.mxu0 0
      %1189 = vmatmul.mubr.bf16.gmra.mxu0 %v1059
      %v1190 = vpop.f32.mrf.mxu0
      %v1191 = vadd.f32 %v890, %v1190
      %v1192 = vpop.f32.mrf.mxu0
      %v1193 = vpop.f32.mrf.mxu0
      %v1194 = vadd.f32 %v893, %v1193
      %v1195 = vpop.f32.mrf.mxu0
      %1196 = vmatprep.mubr.bf16.mxu0 0
      %1197 = vmatmul.mubr.bf16.gmra.mxu0 %v1062
      %v1198 = vpop.f32.mrf.mxu0
      %v1199 = vadd.f32 %v898, %v1198
      %v1200 = vpop.f32.mrf.mxu0
      %v1201 = vpop.f32.mrf.mxu0
      %v1202 = vadd.f32 %v901, %v1201
      %v1203 = vpop.f32.mrf.mxu0
      %1204 = vmatprep.mubr.bf16.mxu0 0
      %1205 = vmatmul.mubr.bf16.gmra.mxu0 %v1065
      %v1206 = vpop.f32.mrf.mxu0
      %v1207 = vadd.f32 %v906, %v1206
      %v1208 = vpop.f32.mrf.mxu0
      %v1209 = vpop.f32.mrf.mxu0
      %v1210 = vadd.f32 %v909, %v1209
      %v1211 = vpop.f32.mrf.mxu0
      %1212 = vmatprep.mubr.bf16.mxu0 0
      %1213 = vmatmul.mubr.bf16.gmra.mxu0 %v1068
      %v1214 = vpop.f32.mrf.mxu0
      %v1215 = vadd.f32 %v914, %v1214
      %v1216 = vpop.f32.mrf.mxu0
      %v1217 = vpop.f32.mrf.mxu0
      %v1218 = vadd.f32 %v917, %v1217
      %v1219 = vpop.f32.mrf.mxu0
      %1220 = vmatprep.mubr.bf16.mxu0 0
      %1221 = vmatmul.mubr.bf16.gmra.mxu0 %v1071
      %v1222 = vpop.f32.mrf.mxu0
      %v1223 = vadd.f32 %v922, %v1222
      %v1224 = vpop.f32.mrf.mxu0
      %v1225 = vpop.f32.mrf.mxu0
      %v1226 = vadd.f32 %v925, %v1225
      %v1227 = vpop.f32.mrf.mxu0
      %1228 = vmatprep.mubr.bf16.mxu0 0
      %1229 = vmatmul.mubr.bf16.gmra.mxu0 %v1074
      %v1230 = vpop.f32.mrf.mxu0
      %v1231 = vadd.f32 %v930, %v1230
      %v1232 = vpop.f32.mrf.mxu0
      %v1233 = vpop.f32.mrf.mxu0
      %v1234 = vadd.f32 %v933, %v1233
      %v1235 = vpop.f32.mrf.mxu0
      %1236 = vdwg.mxu0
      %vm1253 = vcmask 1042432
      %vm1254 = vcmask 1046532
      %vm1255 = vmor %vm1253, %vm1254
      %v1256 = vrot.slane %v216, 5
      %v1257 = vrot.slane %v1256, 4
      %v1258 = vrot.slane %v217, 5
      %v1259 = vsel %vm1255, %v1257, %v1258
      %v1260 = vrot.slane %v1258, 4
      %v1261 = vrot.slane %v218, 5
      %v1262 = vsel %vm1255, %v1260, %v1261
      %v1263 = vrot.slane %v219, 5
      %v1264 = vrot.slane %v1263, 4
      %v1265 = vrot.slane %v220, 5
      %v1266 = vsel %vm1255, %v1264, %v1265
      %v1267 = vrot.slane %v1265, 4
      %v1268 = vrot.slane %v221, 5
      %v1269 = vsel %vm1255, %v1267, %v1268
      %v1270 = vrot.slane %v222, 5
      %v1271 = vrot.slane %v1270, 4
      %v1272 = vrot.slane %v223, 5
      %v1273 = vsel %vm1255, %v1271, %v1272
      %v1274 = vrot.slane %v1272, 4
      %v1275 = vrot.slane %v224, 5
      %v1276 = vsel %vm1255, %v1274, %v1275
      %v1277 = vrot.slane %v225, 5
      %v1278 = vrot.slane %v1277, 4
      %v1279 = vrot.slane %v226, 5
      %v1280 = vsel %vm1255, %v1278, %v1279
      %v1281 = vrot.slane %v1279, 4
      %v1282 = vrot.slane %v227, 5
      %v1283 = vsel %vm1255, %v1281, %v1282
      %v1284 = vrot.slane %v228, 5
      %v1285 = vrot.slane %v1284, 4
      %v1286 = vrot.slane %v229, 5
      %v1287 = vsel %vm1255, %v1285, %v1286
      %v1288 = vrot.slane %v1286, 4
      %v1289 = vrot.slane %v230, 5
      %v1290 = vsel %vm1255, %v1288, %v1289
      %v1291 = vrot.slane %v231, 5
      %v1292 = vrot.slane %v1291, 4
      %v1293 = vrot.slane %v232, 5
      %v1294 = vsel %vm1255, %v1292, %v1293
      %v1295 = vrot.slane %v1293, 4
      %v1296 = vrot.slane %v233, 5
      %v1297 = vsel %vm1255, %v1295, %v1296
      %v1298 = vrot.slane %v234, 5
      %v1299 = vrot.slane %v1298, 4
      %v1300 = vrot.slane %v235, 5
      %v1301 = vsel %vm1255, %v1299, %v1300
      %v1302 = vrot.slane %v1300, 4
      %v1303 = vrot.slane %v236, 5
      %v1304 = vsel %vm1255, %v1302, %v1303
      %v1305 = vrot.slane %v237, 5
      %v1306 = vrot.slane %v1305, 4
      %v1307 = vrot.slane %v238, 5
      %v1308 = vsel %vm1255, %v1306, %v1307
      %v1309 = vrot.slane %v1307, 4
      %v1310 = vrot.slane %v239, 5
      %v1311 = vsel %vm1255, %v1309, %v1310
      %v1312 = vrot.slane %v240, 5
      %v1313 = vrot.slane %v1312, 4
      %v1314 = vrot.slane %v241, 5
      %v1315 = vsel %vm1255, %v1313, %v1314
      %v1316 = vrot.slane %v1314, 4
      %v1317 = vrot.slane %v242, 5
      %v1318 = vsel %vm1255, %v1316, %v1317
      %v1319 = vrot.slane %v243, 5
      %v1320 = vrot.slane %v1319, 4
      %v1321 = vrot.slane %v244, 5
      %v1322 = vsel %vm1255, %v1320, %v1321
      %v1323 = vrot.slane %v1321, 4
      %v1324 = vrot.slane %v245, 5
      %v1325 = vsel %vm1255, %v1323, %v1324
      %v1326 = vrot.slane %v246, 5
      %v1327 = vrot.slane %v1326, 4
      %v1328 = vrot.slane %v247, 5
      %v1329 = vsel %vm1255, %v1327, %v1328
      %v1330 = vrot.slane %v1328, 4
      %v1331 = vrot.slane %v248, 5
      %v1332 = vsel %vm1255, %v1330, %v1331
      %v1333 = vrot.slane %v249, 5
      %v1334 = vrot.slane %v1333, 4
      %v1335 = vrot.slane %v250, 5
      %v1336 = vsel %vm1255, %v1334, %v1335
      %v1337 = vrot.slane %v1335, 4
      %v1338 = vrot.slane %v251, 5
      %v1339 = vsel %vm1255, %v1337, %v1338
      %v1340 = vrot.slane %v252, 5
      %v1341 = vrot.slane %v1340, 4
      %v1342 = vrot.slane %v253, 5
      %v1343 = vsel %vm1255, %v1341, %v1342
      %v1344 = vrot.slane %v1342, 4
      %v1345 = vrot.slane %v254, 5
      %v1346 = vsel %vm1255, %v1344, %v1345
      %v1347 = vrot.slane %v255, 5
      %v1348 = vrot.slane %v1347, 4
      %v1349 = vrot.slane %v256, 5
      %v1350 = vsel %vm1255, %v1348, %v1349
      %v1351 = vrot.slane %v1349, 4
      %v1352 = vrot.slane %v257, 5
      %v1353 = vsel %vm1255, %v1351, %v1352
      %v1354 = vrot.slane %v258, 5
      %v1355 = vrot.slane %v1354, 4
      %v1356 = vrot.slane %v259, 5
      %v1357 = vsel %vm1255, %v1355, %v1356
      %v1358 = vrot.slane %v1356, 4
      %v1359 = vrot.slane %v260, 5
      %v1360 = vsel %vm1255, %v1358, %v1359
      %v1361 = vrot.slane %v261, 5
      %v1362 = vrot.slane %v1361, 4
      %v1363 = vrot.slane %v262, 5
      %v1364 = vsel %vm1255, %v1362, %v1363
      %v1365 = vrot.slane %v1363, 4
      %v1366 = vrot.slane %v263, 5
      %v1367 = vsel %vm1255, %v1365, %v1366
      %s1368 = scalar_lea.vmem %s1, 32
      %v1369 = vld [vmem:[%s1368] sm:$0xf]
      %v1370 = vld [vmem:[%s1368 + $0x4] sm:$0xf]
      %v1371 = vld [vmem:[%s1368 + $0x8] sm:$0xf]
      %v1372 = vld [vmem:[%s1368 + $0xc] sm:$0xf]
      %v1373 = vunpack.c.l.b16 %v1259
      %v1374 = vunpack.c.l.b16 %v1262
      %v1375 = vunpack.c.l.b16 %v1266
      %v1376 = vunpack.c.l.b16 %v1269
      %v1377 = vunpack.c.l.b16 %v1273
      %v1378 = vunpack.c.l.b16 %v1276
      %v1379 = vunpack.c.l.b16 %v1280
      %v1380 = vunpack.c.l.b16 %v1283
      %v1381 = vunpack.c.l.b16 %v1287
      %v1382 = vunpack.c.l.b16 %v1290
      %v1383 = vunpack.c.l.b16 %v1294
      %v1384 = vunpack.c.l.b16 %v1297
      %v1385 = vunpack.c.l.b16 %v1301
      %v1386 = vunpack.c.l.b16 %v1304
      %v1387 = vunpack.c.l.b16 %v1308
      %v1388 = vunpack.c.l.b16 %v1311
      %v1389 = vunpack.c.l.b16 %v1315
      %v1390 = vunpack.c.l.b16 %v1318
      %v1391 = vunpack.c.l.b16 %v1322
      %v1392 = vunpack.c.l.b16 %v1325
      %v1393 = vunpack.c.l.b16 %v1329
      %v1394 = vunpack.c.l.b16 %v1332
      %v1395 = vunpack.c.l.b16 %v1336
      %v1396 = vunpack.c.l.b16 %v1339
      %v1397 = vunpack.c.l.b16 %v1343
      %v1398 = vunpack.c.l.b16 %v1346
      %v1399 = vunpack.c.l.b16 %v1350
      %v1400 = vunpack.c.l.b16 %v1353
      %v1401 = vunpack.c.l.b16 %v1357
      %v1402 = vunpack.c.l.b16 %v1360
      %v1403 = vunpack.c.l.b16 %v1364
      %v1404 = vunpack.c.l.b16 %v1367
      %v1405 = vpack.c.b16 %v1374, %v1373
      %v1406 = vpack.c.b16 %v1376, %v1375
      %v1407 = vpack.c.b16 %v1378, %v1377
      %v1408 = vpack.c.b16 %v1380, %v1379
      %v1409 = vpack.c.b16 %v1382, %v1381
      %v1410 = vpack.c.b16 %v1384, %v1383
      %v1411 = vpack.c.b16 %v1386, %v1385
      %v1412 = vpack.c.b16 %v1388, %v1387
      %v1413 = vpack.c.b16 %v1390, %v1389
      %v1414 = vpack.c.b16 %v1392, %v1391
      %v1415 = vpack.c.b16 %v1394, %v1393
      %v1416 = vpack.c.b16 %v1396, %v1395
      %v1417 = vpack.c.b16 %v1398, %v1397
      %v1418 = vpack.c.b16 %v1400, %v1399
      %v1419 = vpack.c.b16 %v1402, %v1401
      %v1420 = vpack.c.b16 %v1404, %v1403
      %v1425 = vunpack.c.l.b16 %v1369
      %v1426 = vunpack.c.l.b16 %v1370
      %v1427 = vunpack.c.l.b16 %v1371
      %v1428 = vunpack.c.l.b16 %v1372
      %v1429 = vpack.c.b16 %v1426, %v1425
      %v1430 = vpack.c.b16 %v1428, %v1427
      %v1434 = vsel %vm726, %v1405, 0
      %v1437 = vsel %vm726, %v1406, 0
      %v1440 = vsel %vm726, %v1407, 0
      %v1443 = vsel %vm726, %v1408, 0
      %v1446 = vsel %vm726, %v1409, 0
      %v1449 = vsel %vm726, %v1410, 0
      %v1452 = vsel %vm726, %v1411, 0
      %v1455 = vsel %vm726, %v1412, 0
      %v1458 = vsel %vm726, %v1413, 0
      %v1461 = vsel %vm726, %v1414, 0
      %v1464 = vsel %vm726, %v1415, 0
      %v1467 = vsel %vm726, %v1416, 0
      %v1470 = vsel %vm726, %v1417, 0
      %v1473 = vsel %vm726, %v1418, 0
      %v1476 = vsel %vm726, %v1419, 0
      %v1479 = vsel %vm726, %v1420, 0
      %1481 = vmatprep.subr.bf16.mxu0 0
      %1482 = vmatpush1.bf16.msra.mxu0 0
      %1483 = vmatprep.subr.bf16.mxu0 0
      %1484 = vmatpush1.bf16.msra.mxu0 0
      %1485 = vmatprep.subr.bf16.mxu0 0
      %1486 = vmatpush1.bf16.msra.mxu0 0
      %1487 = vmatprep.subr.bf16.mxu0 0
      %1488 = vmatpush1.bf16.msra.mxu0 0
      %1489 = vmatprep.subr.bf16.mxu0 0
      %1490 = vmatpush1.bf16.msra.mxu0 0
      %1491 = vmatprep.subr.bf16.mxu0 0
      %1492 = vmatpush1.bf16.msra.mxu0 0
      %1493 = vmatprep.subr.bf16.mxu0 0
      %1494 = vmatpush1.bf16.msra.mxu0 %v1430
      %1495 = vmatprep.subr.bf16.mxu0 0
      %1496 = vmatpush1.bf16.msra.mxu0 %v1429
      %1497 = vmatprep.subr.bf16.mxu0 0
      %1498 = vmatpush2.bf16.msra.mxu0 0
      %1499 = vmatprep.subr.bf16.mxu0 0
      %1500 = vmatpush2.bf16.msra.mxu0 0
      %1501 = vmatprep.subr.bf16.mxu0 0
      %1502 = vmatpush2.bf16.msra.mxu0 0
      %1503 = vmatprep.subr.bf16.mxu0 0
      %1504 = vmatpush2.bf16.msra.mxu0 0
      %1505 = vmatprep.subr.bf16.mxu0 0
      %1506 = vmatpush2.bf16.msra.mxu0 0
      %1507 = vmatprep.subr.bf16.mxu0 0
      %1508 = vmatpush2.bf16.msra.mxu0 0
      %1509 = vmatprep.subr.bf16.mxu0 0
      %1510 = vmatpush2.bf16.msra.mxu0 0
      %1511 = vmatprep.subr.bf16.mxu0 0
      %1512 = vmatpush2.bf16.msra.mxu0 0
      %1513 = vmatprep.mubr.bf16.mxu0 0
      %1514 = vmatmul.mubr.bf16.gmra.mxu0 %v1434
      %v1515 = vpop.f32.mrf.mxu0
      %v1516 = vadd.f32 0.0, %v1515
      %v1517 = vpop.f32.mrf.mxu0
      %v1518 = vpop.f32.mrf.mxu0
      %v1519 = vadd.f32 0.0, %v1518
      %v1520 = vpop.f32.mrf.mxu0
      %1521 = vmatprep.mubr.bf16.mxu0 0
      %1522 = vmatmul.mubr.bf16.gmra.mxu0 %v1437
      %v1523 = vpop.f32.mrf.mxu0
      %v1524 = vadd.f32 0.0, %v1523
      %v1525 = vpop.f32.mrf.mxu0
      %v1526 = vpop.f32.mrf.mxu0
      %v1527 = vadd.f32 0.0, %v1526
      %v1528 = vpop.f32.mrf.mxu0
      %1529 = vmatprep.mubr.bf16.mxu0 0
      %1530 = vmatmul.mubr.bf16.gmra.mxu0 %v1440
      %v1531 = vpop.f32.mrf.mxu0
      %v1532 = vadd.f32 0.0, %v1531
      %v1533 = vpop.f32.mrf.mxu0
      %v1534 = vpop.f32.mrf.mxu0
      %v1535 = vadd.f32 0.0, %v1534
      %v1536 = vpop.f32.mrf.mxu0
      %1537 = vmatprep.mubr.bf16.mxu0 0
      %1538 = vmatmul.mubr.bf16.gmra.mxu0 %v1443
      %v1539 = vpop.f32.mrf.mxu0
      %v1540 = vadd.f32 0.0, %v1539
      %v1541 = vpop.f32.mrf.mxu0
      %v1542 = vpop.f32.mrf.mxu0
      %v1543 = vadd.f32 0.0, %v1542
      %v1544 = vpop.f32.mrf.mxu0
      %1545 = vmatprep.mubr.bf16.mxu0 0
      %1546 = vmatmul.mubr.bf16.gmra.mxu0 %v1446
      %v1547 = vpop.f32.mrf.mxu0
      %v1548 = vadd.f32 0.0, %v1547
      %v1549 = vpop.f32.mrf.mxu0
      %v1550 = vpop.f32.mrf.mxu0
      %v1551 = vadd.f32 0.0, %v1550
      %v1552 = vpop.f32.mrf.mxu0
      %1553 = vmatprep.mubr.bf16.mxu0 0
      %1554 = vmatmul.mubr.bf16.gmra.mxu0 %v1449
      %v1555 = vpop.f32.mrf.mxu0
      %v1556 = vadd.f32 0.0, %v1555
      %v1557 = vpop.f32.mrf.mxu0
      %v1558 = vpop.f32.mrf.mxu0
      %v1559 = vadd.f32 0.0, %v1558
      %v1560 = vpop.f32.mrf.mxu0
      %1561 = vmatprep.mubr.bf16.mxu0 0
      %1562 = vmatmul.mubr.bf16.gmra.mxu0 %v1452
      %v1563 = vpop.f32.mrf.mxu0
      %v1564 = vadd.f32 0.0, %v1563
      %v1565 = vpop.f32.mrf.mxu0
      %v1566 = vpop.f32.mrf.mxu0
      %v1567 = vadd.f32 0.0, %v1566
      %v1568 = vpop.f32.mrf.mxu0
      %1569 = vmatprep.mubr.bf16.mxu0 0
      %1570 = vmatmul.mubr.bf16.gmra.mxu0 %v1455
      %v1571 = vpop.f32.mrf.mxu0
      %v1572 = vadd.f32 0.0, %v1571
      %v1573 = vpop.f32.mrf.mxu0
      %v1574 = vpop.f32.mrf.mxu0
      %v1575 = vadd.f32 0.0, %v1574
      %v1576 = vpop.f32.mrf.mxu0
      %1577 = vmatprep.mubr.bf16.mxu0 0
      %1578 = vmatmul.mubr.bf16.gmra.mxu0 %v1458
      %v1579 = vpop.f32.mrf.mxu0
      %v1580 = vadd.f32 0.0, %v1579
      %v1581 = vpop.f32.mrf.mxu0
      %v1582 = vpop.f32.mrf.mxu0
      %v1583 = vadd.f32 0.0, %v1582
      %v1584 = vpop.f32.mrf.mxu0
      %1585 = vmatprep.mubr.bf16.mxu0 0
      %1586 = vmatmul.mubr.bf16.gmra.mxu0 %v1461
      %v1587 = vpop.f32.mrf.mxu0
      %v1588 = vadd.f32 0.0, %v1587
      %v1589 = vpop.f32.mrf.mxu0
      %v1590 = vpop.f32.mrf.mxu0
      %v1591 = vadd.f32 0.0, %v1590
      %v1592 = vpop.f32.mrf.mxu0
      %1593 = vmatprep.mubr.bf16.mxu0 0
      %1594 = vmatmul.mubr.bf16.gmra.mxu0 %v1464
      %v1595 = vpop.f32.mrf.mxu0
      %v1596 = vadd.f32 0.0, %v1595
      %v1597 = vpop.f32.mrf.mxu0
      %v1598 = vpop.f32.mrf.mxu0
      %v1599 = vadd.f32 0.0, %v1598
      %v1600 = vpop.f32.mrf.mxu0
      %1601 = vmatprep.mubr.bf16.mxu0 0
      %1602 = vmatmul.mubr.bf16.gmra.mxu0 %v1467
      %v1603 = vpop.f32.mrf.mxu0
      %v1604 = vadd.f32 0.0, %v1603
      %v1605 = vpop.f32.mrf.mxu0
      %v1606 = vpop.f32.mrf.mxu0
      %v1607 = vadd.f32 0.0, %v1606
      %v1608 = vpop.f32.mrf.mxu0
      %1609 = vmatprep.mubr.bf16.mxu0 0
      %1610 = vmatmul.mubr.bf16.gmra.mxu0 %v1470
      %v1611 = vpop.f32.mrf.mxu0
      %v1612 = vadd.f32 0.0, %v1611
      %v1613 = vpop.f32.mrf.mxu0
      %v1614 = vpop.f32.mrf.mxu0
      %v1615 = vadd.f32 0.0, %v1614
      %v1616 = vpop.f32.mrf.mxu0
      %1617 = vmatprep.mubr.bf16.mxu0 0
      %1618 = vmatmul.mubr.bf16.gmra.mxu0 %v1473
      %v1619 = vpop.f32.mrf.mxu0
      %v1620 = vadd.f32 0.0, %v1619
      %v1621 = vpop.f32.mrf.mxu0
      %v1622 = vpop.f32.mrf.mxu0
      %v1623 = vadd.f32 0.0, %v1622
      %v1624 = vpop.f32.mrf.mxu0
      %1625 = vmatprep.mubr.bf16.mxu0 0
      %1626 = vmatmul.mubr.bf16.gmra.mxu0 %v1476
      %v1627 = vpop.f32.mrf.mxu0
      %v1628 = vadd.f32 0.0, %v1627
      %v1629 = vpop.f32.mrf.mxu0
      %v1630 = vpop.f32.mrf.mxu0
      %v1631 = vadd.f32 0.0, %v1630
      %v1632 = vpop.f32.mrf.mxu0
      %1633 = vmatprep.mubr.bf16.mxu0 0
      %1634 = vmatmul.mubr.bf16.gmra.mxu0 %v1479
      %v1635 = vpop.f32.mrf.mxu0
      %v1636 = vadd.f32 0.0, %v1635
      %v1637 = vpop.f32.mrf.mxu0
      %v1638 = vpop.f32.mrf.mxu0
      %v1639 = vadd.f32 0.0, %v1638
      %v1640 = vpop.f32.mrf.mxu0
      %1641 = vdwg.mxu0
      %v1642 = vadd.f32 %v1111, %v1516
      %v1643 = vadd.f32 %v1114, %v1519
      %v1644 = vadd.f32 %v1119, %v1524
      %v1645 = vadd.f32 %v1122, %v1527
      %v1646 = vadd.f32 %v1127, %v1532
      %v1647 = vadd.f32 %v1130, %v1535
      %v1648 = vadd.f32 %v1135, %v1540
      %v1649 = vadd.f32 %v1138, %v1543
      %v1650 = vadd.f32 %v1143, %v1548
      %v1651 = vadd.f32 %v1146, %v1551
      %v1652 = vadd.f32 %v1151, %v1556
      %v1653 = vadd.f32 %v1154, %v1559
      %v1654 = vadd.f32 %v1159, %v1564
      %v1655 = vadd.f32 %v1162, %v1567
      %v1656 = vadd.f32 %v1167, %v1572
      %v1657 = vadd.f32 %v1170, %v1575
      %v1658 = vadd.f32 %v1175, %v1580
      %v1659 = vadd.f32 %v1178, %v1583
      %v1660 = vadd.f32 %v1183, %v1588
      %v1661 = vadd.f32 %v1186, %v1591
      %v1662 = vadd.f32 %v1191, %v1596
      %v1663 = vadd.f32 %v1194, %v1599
      %v1664 = vadd.f32 %v1199, %v1604
      %v1665 = vadd.f32 %v1202, %v1607
      %v1666 = vadd.f32 %v1207, %v1612
      %v1667 = vadd.f32 %v1210, %v1615
      %v1668 = vadd.f32 %v1215, %v1620
      %v1669 = vadd.f32 %v1218, %v1623
      %v1670 = vadd.f32 %v1223, %v1628
      %v1671 = vadd.f32 %v1226, %v1631
      %v1672 = vadd.f32 %v1231, %v1636
      %v1673 = vadd.f32 %v1234, %v1639
      %s1674 = scalar_lea.vmem %s1, 48
      %v1675 = vld [vmem:[%s1674] sm:$0xf]
      %v1676 = vld [vmem:[%s1674 + $0x4] sm:$0xf]
      %v1677 = vld [vmem:[%s1674 + $0x8] sm:$0xf]
      %v1678 = vld [vmem:[%s1674 + $0xc] sm:$0xf]
      %v1681 = vunpack.c.l.b16 %v264
      %v1682 = vunpack.c.l.b16 %v265
      %v1683 = vpack.c.b16 %v1682, %v1681
      %v1688 = vunpack.c.l.b16 %v1675
      %v1689 = vunpack.c.l.b16 %v1676
      %v1690 = vunpack.c.l.b16 %v1677
      %v1691 = vunpack.c.l.b16 %v1678
      %v1692 = vpack.c.b16 %v1689, %v1688
      %v1693 = vpack.c.b16 %v1691, %v1690
      %v1697 = vsel %vm726, %v1683, 0
      %1699 = vmatprep.subr.bf16.mxu0 0
      %1700 = vmatpush1.bf16.msra.mxu0 0
      %1701 = vmatprep.subr.bf16.mxu0 0
      %1702 = vmatpush1.bf16.msra.mxu0 0
      %1703 = vmatprep.subr.bf16.mxu0 0
      %1704 = vmatpush1.bf16.msra.mxu0 0
      %1705 = vmatprep.subr.bf16.mxu0 0
      %1706 = vmatpush1.bf16.msra.mxu0 0
      %1707 = vmatprep.subr.bf16.mxu0 0
      %1708 = vmatpush1.bf16.msra.mxu0 0
      %1709 = vmatprep.subr.bf16.mxu0 0
      %1710 = vmatpush1.bf16.msra.mxu0 0
      %1711 = vmatprep.subr.bf16.mxu0 0
      %1712 = vmatpush1.bf16.msra.mxu0 %v1693
      %1713 = vmatprep.subr.bf16.mxu0 0
      %1714 = vmatpush1.bf16.msra.mxu0 %v1692
      %1715 = vmatprep.subr.bf16.mxu0 0
      %1716 = vmatpush2.bf16.msra.mxu0 0
      %1717 = vmatprep.subr.bf16.mxu0 0
      %1718 = vmatpush2.bf16.msra.mxu0 0
      %1719 = vmatprep.subr.bf16.mxu0 0
      %1720 = vmatpush2.bf16.msra.mxu0 0
      %1721 = vmatprep.subr.bf16.mxu0 0
      %1722 = vmatpush2.bf16.msra.mxu0 0
      %1723 = vmatprep.subr.bf16.mxu0 0
      %1724 = vmatpush2.bf16.msra.mxu0 0
      %1725 = vmatprep.subr.bf16.mxu0 0
      %1726 = vmatpush2.bf16.msra.mxu0 0
      %1727 = vmatprep.subr.bf16.mxu0 0
      %1728 = vmatpush2.bf16.msra.mxu0 0
      %1729 = vmatprep.subr.bf16.mxu0 0
      %1730 = vmatpush2.bf16.msra.mxu0 0
      %1731 = vmatprep.mubr.bf16.mxu0 0
      %1732 = vmatmul.mubr.bf16.gmra.mxu0 %v1032
      %v1733 = vpop.f32.mrf.mxu0
      %v1734 = vadd.f32 0.0, %v1733
      %v1735 = vpop.f32.mrf.mxu0
      %v1736 = vpop.f32.mrf.mxu0
      %v1737 = vadd.f32 0.0, %v1736
      %v1738 = vpop.f32.mrf.mxu0
      %1739 = vmatprep.mubr.bf16.mxu0 0
      %1740 = vmatmul.mubr.bf16.gmra.mxu0 %v1035
      %v1741 = vpop.f32.mrf.mxu0
      %v1742 = vadd.f32 0.0, %v1741
      %v1743 = vpop.f32.mrf.mxu0
      %v1744 = vpop.f32.mrf.mxu0
      %v1745 = vadd.f32 0.0, %v1744
      %v1746 = vpop.f32.mrf.mxu0
      %1747 = vmatprep.mubr.bf16.mxu0 0
      %1748 = vmatmul.mubr.bf16.gmra.mxu0 %v1038
      %v1749 = vpop.f32.mrf.mxu0
      %v1750 = vadd.f32 0.0, %v1749
      %v1751 = vpop.f32.mrf.mxu0
      %v1752 = vpop.f32.mrf.mxu0
      %v1753 = vadd.f32 0.0, %v1752
      %v1754 = vpop.f32.mrf.mxu0
      %1755 = vmatprep.mubr.bf16.mxu0 0
      %1756 = vmatmul.mubr.bf16.gmra.mxu0 %v1041
      %v1757 = vpop.f32.mrf.mxu0
      %v1758 = vadd.f32 0.0, %v1757
      %v1759 = vpop.f32.mrf.mxu0
      %v1760 = vpop.f32.mrf.mxu0
      %v1761 = vadd.f32 0.0, %v1760
      %v1762 = vpop.f32.mrf.mxu0
      %1763 = vmatprep.mubr.bf16.mxu0 0
      %1764 = vmatmul.mubr.bf16.gmra.mxu0 %v1044
      %v1765 = vpop.f32.mrf.mxu0
      %v1766 = vadd.f32 0.0, %v1765
      %v1767 = vpop.f32.mrf.mxu0
      %v1768 = vpop.f32.mrf.mxu0
      %v1769 = vadd.f32 0.0, %v1768
      %v1770 = vpop.f32.mrf.mxu0
      %1771 = vmatprep.mubr.bf16.mxu0 0
      %1772 = vmatmul.mubr.bf16.gmra.mxu0 %v1047
      %v1773 = vpop.f32.mrf.mxu0
      %v1774 = vadd.f32 0.0, %v1773
      %v1775 = vpop.f32.mrf.mxu0
      %v1776 = vpop.f32.mrf.mxu0
      %v1777 = vadd.f32 0.0, %v1776
      %v1778 = vpop.f32.mrf.mxu0
      %1779 = vmatprep.mubr.bf16.mxu0 0
      %1780 = vmatmul.mubr.bf16.gmra.mxu0 %v1050
      %v1781 = vpop.f32.mrf.mxu0
      %v1782 = vadd.f32 0.0, %v1781
      %v1783 = vpop.f32.mrf.mxu0
      %v1784 = vpop.f32.mrf.mxu0
      %v1785 = vadd.f32 0.0, %v1784
      %v1786 = vpop.f32.mrf.mxu0
      %1787 = vmatprep.mubr.bf16.mxu0 0
      %1788 = vmatmul.mubr.bf16.gmra.mxu0 %v1053
      %v1789 = vpop.f32.mrf.mxu0
      %v1790 = vadd.f32 0.0, %v1789
      %v1791 = vpop.f32.mrf.mxu0
      %v1792 = vpop.f32.mrf.mxu0
      %v1793 = vadd.f32 0.0, %v1792
      %v1794 = vpop.f32.mrf.mxu0
      %1795 = vmatprep.mubr.bf16.mxu0 0
      %1796 = vmatmul.mubr.bf16.gmra.mxu0 %v1056
      %v1797 = vpop.f32.mrf.mxu0
      %v1798 = vadd.f32 0.0, %v1797
      %v1799 = vpop.f32.mrf.mxu0
      %v1800 = vpop.f32.mrf.mxu0
      %v1801 = vadd.f32 0.0, %v1800
      %v1802 = vpop.f32.mrf.mxu0
      %1803 = vmatprep.mubr.bf16.mxu0 0
      %1804 = vmatmul.mubr.bf16.gmra.mxu0 %v1059
      %v1805 = vpop.f32.mrf.mxu0
      %v1806 = vadd.f32 0.0, %v1805
      %v1807 = vpop.f32.mrf.mxu0
      %v1808 = vpop.f32.mrf.mxu0
      %v1809 = vadd.f32 0.0, %v1808
      %v1810 = vpop.f32.mrf.mxu0
      %1811 = vmatprep.mubr.bf16.mxu0 0
      %1812 = vmatmul.mubr.bf16.gmra.mxu0 %v1062
      %v1813 = vpop.f32.mrf.mxu0
      %v1814 = vadd.f32 0.0, %v1813
      %v1815 = vpop.f32.mrf.mxu0
      %v1816 = vpop.f32.mrf.mxu0
      %v1817 = vadd.f32 0.0, %v1816
      %v1818 = vpop.f32.mrf.mxu0
      %1819 = vmatprep.mubr.bf16.mxu0 0
      %1820 = vmatmul.mubr.bf16.gmra.mxu0 %v1065
      %v1821 = vpop.f32.mrf.mxu0
      %v1822 = vadd.f32 0.0, %v1821
      %v1823 = vpop.f32.mrf.mxu0
      %v1824 = vpop.f32.mrf.mxu0
      %v1825 = vadd.f32 0.0, %v1824
      %v1826 = vpop.f32.mrf.mxu0
      %1827 = vmatprep.mubr.bf16.mxu0 0
      %1828 = vmatmul.mubr.bf16.gmra.mxu0 %v1068
      %v1829 = vpop.f32.mrf.mxu0
      %v1830 = vadd.f32 0.0, %v1829
      %v1831 = vpop.f32.mrf.mxu0
      %v1832 = vpop.f32.mrf.mxu0
      %v1833 = vadd.f32 0.0, %v1832
      %v1834 = vpop.f32.mrf.mxu0
      %1835 = vmatprep.mubr.bf16.mxu0 0
      %1836 = vmatmul.mubr.bf16.gmra.mxu0 %v1071
      %v1837 = vpop.f32.mrf.mxu0
      %v1838 = vadd.f32 0.0, %v1837
      %v1839 = vpop.f32.mrf.mxu0
      %v1840 = vpop.f32.mrf.mxu0
      %v1841 = vadd.f32 0.0, %v1840
      %v1842 = vpop.f32.mrf.mxu0
      %1843 = vmatprep.mubr.bf16.mxu0 0
      %1844 = vmatmul.mubr.bf16.gmra.mxu0 %v1074
      %v1845 = vpop.f32.mrf.mxu0
      %v1846 = vadd.f32 0.0, %v1845
      %v1847 = vpop.f32.mrf.mxu0
      %v1848 = vpop.f32.mrf.mxu0
      %v1849 = vadd.f32 0.0, %v1848
      %v1850 = vpop.f32.mrf.mxu0
      %1851 = vmatprep.mubr.bf16.mxu0 0
      %1852 = vmatmul.mubr.bf16.gmra.mxu0 %v1697
      %v1853 = vpop.f32.mrf.mxu0
      %v1854 = vadd.f32 0.0, %v1853
      %v1855 = vpop.f32.mrf.mxu0
      %v1856 = vpop.f32.mrf.mxu0
      %v1857 = vadd.f32 0.0, %v1856
      %v1858 = vpop.f32.mrf.mxu0
      %1859 = vdwg.mxu0
      %v1860 = vadd.f32 %v1642, %v1734
      %v1861 = vadd.f32 %v1643, %v1737
      %v1862 = vadd.f32 %v1644, %v1742
      %v1863 = vadd.f32 %v1645, %v1745
      %v1864 = vadd.f32 %v1646, %v1750
      %v1865 = vadd.f32 %v1647, %v1753
      %v1866 = vadd.f32 %v1648, %v1758
      %v1867 = vadd.f32 %v1649, %v1761
      %v1868 = vadd.f32 %v1650, %v1766
      %v1869 = vadd.f32 %v1651, %v1769
      %v1870 = vadd.f32 %v1652, %v1774
      %v1871 = vadd.f32 %v1653, %v1777
      %v1872 = vadd.f32 %v1654, %v1782
      %v1873 = vadd.f32 %v1655, %v1785
      %v1874 = vadd.f32 %v1656, %v1790
      %v1875 = vadd.f32 %v1657, %v1793
      %v1876 = vadd.f32 %v1658, %v1798
      %v1877 = vadd.f32 %v1659, %v1801
      %v1878 = vadd.f32 %v1660, %v1806
      %v1879 = vadd.f32 %v1661, %v1809
      %v1880 = vadd.f32 %v1662, %v1814
      %v1881 = vadd.f32 %v1663, %v1817
      %v1882 = vadd.f32 %v1664, %v1822
      %v1883 = vadd.f32 %v1665, %v1825
      %v1884 = vadd.f32 %v1666, %v1830
      %v1885 = vadd.f32 %v1667, %v1833
      %v1886 = vadd.f32 %v1668, %v1838
      %v1887 = vadd.f32 %v1669, %v1841
      %v1888 = vadd.f32 %v1670, %v1846
      %v1889 = vadd.f32 %v1671, %v1849
      %v1890 = vadd.f32 %v1672, %v1854
      %v1891 = vadd.f32 %v1673, %v1857
      %v1893 = vshrl.u32 %v264, 16
      %v1895 = vrot.slane %v1893, 4
      %v1896 = vshll.u32 %v264, 16
      %v1898 = vrot.slane %v1896, 5
      %v1899 = vor.u32 %v1895, %v1898
      %v1900 = vrot.slane %v1899, 4
      %v1902 = vshll.u32 %v265, 16
      %v1904 = vrot.slane %v1902, 5
      %v1905 = vsel %vm276, %v1900, %v1904
      %v1906 = vshrl.u32 %v265, 16
      %v1908 = vrot.slane %v1906, 4
      %v1909 = vor.u32 %v1908, %v1904
      %v1910 = vrot.slane %v1909, 4
      %v1912 = vshll.u32 %v266, 16
      %v1914 = vrot.slane %v1912, 5
      %v1915 = vsel %vm276, %v1910, %v1914
      %s1916 = scalar_lea.vmem %s1, 64
      %v1917 = vld [vmem:[%s1916] sm:$0xf]
      %v1918 = vld [vmem:[%s1916 + $0x4] sm:$0xf]
      %v1919 = vld [vmem:[%s1916 + $0x8] sm:$0xf]
      %v1920 = vld [vmem:[%s1916 + $0xc] sm:$0xf]
      %v1921 = vunpack.c.l.b16 %v1905
      %v1922 = vunpack.c.l.b16 %v1915
      %v1923 = vpack.c.b16 %v1922, %v1921
      %v1928 = vunpack.c.l.b16 %v1917
      %v1929 = vunpack.c.l.b16 %v1918
      %v1930 = vunpack.c.l.b16 %v1919
      %v1931 = vunpack.c.l.b16 %v1920
      %v1932 = vpack.c.b16 %v1929, %v1928
      %v1933 = vpack.c.b16 %v1931, %v1930
      %v1937 = vsel %vm726, %v1923, 0
      %1939 = vmatprep.subr.bf16.mxu0 0
      %1940 = vmatpush1.bf16.msra.mxu0 0
      %1941 = vmatprep.subr.bf16.mxu0 0
      %1942 = vmatpush1.bf16.msra.mxu0 0
      %1943 = vmatprep.subr.bf16.mxu0 0
      %1944 = vmatpush1.bf16.msra.mxu0 0
      %1945 = vmatprep.subr.bf16.mxu0 0
      %1946 = vmatpush1.bf16.msra.mxu0 0
      %1947 = vmatprep.subr.bf16.mxu0 0
      %1948 = vmatpush1.bf16.msra.mxu0 0
      %1949 = vmatprep.subr.bf16.mxu0 0
      %1950 = vmatpush1.bf16.msra.mxu0 0
      %1951 = vmatprep.subr.bf16.mxu0 0
      %1952 = vmatpush1.bf16.msra.mxu0 %v1933
      %1953 = vmatprep.subr.bf16.mxu0 0
      %1954 = vmatpush1.bf16.msra.mxu0 %v1932
      %1955 = vmatprep.subr.bf16.mxu0 0
      %1956 = vmatpush2.bf16.msra.mxu0 0
      %1957 = vmatprep.subr.bf16.mxu0 0
      %1958 = vmatpush2.bf16.msra.mxu0 0
      %1959 = vmatprep.subr.bf16.mxu0 0
      %1960 = vmatpush2.bf16.msra.mxu0 0
      %1961 = vmatprep.subr.bf16.mxu0 0
      %1962 = vmatpush2.bf16.msra.mxu0 0
      %1963 = vmatprep.subr.bf16.mxu0 0
      %1964 = vmatpush2.bf16.msra.mxu0 0
      %1965 = vmatprep.subr.bf16.mxu0 0
      %1966 = vmatpush2.bf16.msra.mxu0 0
      %1967 = vmatprep.subr.bf16.mxu0 0
      %1968 = vmatpush2.bf16.msra.mxu0 0
      %1969 = vmatprep.subr.bf16.mxu0 0
      %1970 = vmatpush2.bf16.msra.mxu0 0
      %1971 = vmatprep.mubr.bf16.mxu0 0
      %1972 = vmatmul.mubr.bf16.gmra.mxu0 %v731
      %v1973 = vpop.f32.mrf.mxu0
      %v1974 = vadd.f32 0.0, %v1973
      %v1975 = vpop.f32.mrf.mxu0
      %v1976 = vpop.f32.mrf.mxu0
      %v1977 = vadd.f32 0.0, %v1976
      %v1978 = vpop.f32.mrf.mxu0
      %1979 = vmatprep.mubr.bf16.mxu0 0
      %1980 = vmatmul.mubr.bf16.gmra.mxu0 %v734
      %v1981 = vpop.f32.mrf.mxu0
      %v1982 = vadd.f32 0.0, %v1981
      %v1983 = vpop.f32.mrf.mxu0
      %v1984 = vpop.f32.mrf.mxu0
      %v1985 = vadd.f32 0.0, %v1984
      %v1986 = vpop.f32.mrf.mxu0
      %1987 = vmatprep.mubr.bf16.mxu0 0
      %1988 = vmatmul.mubr.bf16.gmra.mxu0 %v737
      %v1989 = vpop.f32.mrf.mxu0
      %v1990 = vadd.f32 0.0, %v1989
      %v1991 = vpop.f32.mrf.mxu0
      %v1992 = vpop.f32.mrf.mxu0
      %v1993 = vadd.f32 0.0, %v1992
      %v1994 = vpop.f32.mrf.mxu0
      %1995 = vmatprep.mubr.bf16.mxu0 0
      %1996 = vmatmul.mubr.bf16.gmra.mxu0 %v740
      %v1997 = vpop.f32.mrf.mxu0
      %v1998 = vadd.f32 0.0, %v1997
      %v1999 = vpop.f32.mrf.mxu0
      %v2000 = vpop.f32.mrf.mxu0
      %v2001 = vadd.f32 0.0, %v2000
      %v2002 = vpop.f32.mrf.mxu0
      %2003 = vmatprep.mubr.bf16.mxu0 0
      %2004 = vmatmul.mubr.bf16.gmra.mxu0 %v743
      %v2005 = vpop.f32.mrf.mxu0
      %v2006 = vadd.f32 0.0, %v2005
      %v2007 = vpop.f32.mrf.mxu0
      %v2008 = vpop.f32.mrf.mxu0
      %v2009 = vadd.f32 0.0, %v2008
      %v2010 = vpop.f32.mrf.mxu0
      %2011 = vmatprep.mubr.bf16.mxu0 0
      %2012 = vmatmul.mubr.bf16.gmra.mxu0 %v746
      %v2013 = vpop.f32.mrf.mxu0
      %v2014 = vadd.f32 0.0, %v2013
      %v2015 = vpop.f32.mrf.mxu0
      %v2016 = vpop.f32.mrf.mxu0
      %v2017 = vadd.f32 0.0, %v2016
      %v2018 = vpop.f32.mrf.mxu0
      %2019 = vmatprep.mubr.bf16.mxu0 0
      %2020 = vmatmul.mubr.bf16.gmra.mxu0 %v749
      %v2021 = vpop.f32.mrf.mxu0
      %v2022 = vadd.f32 0.0, %v2021
      %v2023 = vpop.f32.mrf.mxu0
      %v2024 = vpop.f32.mrf.mxu0
      %v2025 = vadd.f32 0.0, %v2024
      %v2026 = vpop.f32.mrf.mxu0
      %2027 = vmatprep.mubr.bf16.mxu0 0
      %2028 = vmatmul.mubr.bf16.gmra.mxu0 %v752
      %v2029 = vpop.f32.mrf.mxu0
      %v2030 = vadd.f32 0.0, %v2029
      %v2031 = vpop.f32.mrf.mxu0
      %v2032 = vpop.f32.mrf.mxu0
      %v2033 = vadd.f32 0.0, %v2032
      %v2034 = vpop.f32.mrf.mxu0
      %2035 = vmatprep.mubr.bf16.mxu0 0
      %2036 = vmatmul.mubr.bf16.gmra.mxu0 %v755
      %v2037 = vpop.f32.mrf.mxu0
      %v2038 = vadd.f32 0.0, %v2037
      %v2039 = vpop.f32.mrf.mxu0
      %v2040 = vpop.f32.mrf.mxu0
      %v2041 = vadd.f32 0.0, %v2040
      %v2042 = vpop.f32.mrf.mxu0
      %2043 = vmatprep.mubr.bf16.mxu0 0
      %2044 = vmatmul.mubr.bf16.gmra.mxu0 %v758
      %v2045 = vpop.f32.mrf.mxu0
      %v2046 = vadd.f32 0.0, %v2045
      %v2047 = vpop.f32.mrf.mxu0
      %v2048 = vpop.f32.mrf.mxu0
      %v2049 = vadd.f32 0.0, %v2048
      %v2050 = vpop.f32.mrf.mxu0
      %2051 = vmatprep.mubr.bf16.mxu0 0
      %2052 = vmatmul.mubr.bf16.gmra.mxu0 %v761
      %v2053 = vpop.f32.mrf.mxu0
      %v2054 = vadd.f32 0.0, %v2053
      %v2055 = vpop.f32.mrf.mxu0
      %v2056 = vpop.f32.mrf.mxu0
      %v2057 = vadd.f32 0.0, %v2056
      %v2058 = vpop.f32.mrf.mxu0
      %2059 = vmatprep.mubr.bf16.mxu0 0
      %2060 = vmatmul.mubr.bf16.gmra.mxu0 %v764
      %v2061 = vpop.f32.mrf.mxu0
      %v2062 = vadd.f32 0.0, %v2061
      %v2063 = vpop.f32.mrf.mxu0
      %v2064 = vpop.f32.mrf.mxu0
      %v2065 = vadd.f32 0.0, %v2064
      %v2066 = vpop.f32.mrf.mxu0
      %2067 = vmatprep.mubr.bf16.mxu0 0
      %2068 = vmatmul.mubr.bf16.gmra.mxu0 %v767
      %v2069 = vpop.f32.mrf.mxu0
      %v2070 = vadd.f32 0.0, %v2069
      %v2071 = vpop.f32.mrf.mxu0
      %v2072 = vpop.f32.mrf.mxu0
      %v2073 = vadd.f32 0.0, %v2072
      %v2074 = vpop.f32.mrf.mxu0
      %2075 = vmatprep.mubr.bf16.mxu0 0
      %2076 = vmatmul.mubr.bf16.gmra.mxu0 %v770
      %v2077 = vpop.f32.mrf.mxu0
      %v2078 = vadd.f32 0.0, %v2077
      %v2079 = vpop.f32.mrf.mxu0
      %v2080 = vpop.f32.mrf.mxu0
      %v2081 = vadd.f32 0.0, %v2080
      %v2082 = vpop.f32.mrf.mxu0
      %2083 = vmatprep.mubr.bf16.mxu0 0
      %2084 = vmatmul.mubr.bf16.gmra.mxu0 %v773
      %v2085 = vpop.f32.mrf.mxu0
      %v2086 = vadd.f32 0.0, %v2085
      %v2087 = vpop.f32.mrf.mxu0
      %v2088 = vpop.f32.mrf.mxu0
      %v2089 = vadd.f32 0.0, %v2088
      %v2090 = vpop.f32.mrf.mxu0
      %2091 = vmatprep.mubr.bf16.mxu0 0
      %2092 = vmatmul.mubr.bf16.gmra.mxu0 %v1937
      %v2093 = vpop.f32.mrf.mxu0
      %v2094 = vadd.f32 0.0, %v2093
      %v2095 = vpop.f32.mrf.mxu0
      %v2096 = vpop.f32.mrf.mxu0
      %v2097 = vadd.f32 0.0, %v2096
      %v2098 = vpop.f32.mrf.mxu0
      %2099 = vdwg.mxu0
      %v2100 = vadd.f32 %v1860, %v1974
      %v2101 = vadd.f32 %v1861, %v1977
      %v2102 = vadd.f32 %v1862, %v1982
      %v2103 = vadd.f32 %v1863, %v1985
      %v2104 = vadd.f32 %v1864, %v1990
      %v2105 = vadd.f32 %v1865, %v1993
      %v2106 = vadd.f32 %v1866, %v1998
      %v2107 = vadd.f32 %v1867, %v2001
      %v2108 = vadd.f32 %v1868, %v2006
      %v2109 = vadd.f32 %v1869, %v2009
      %v2110 = vadd.f32 %v1870, %v2014
      %v2111 = vadd.f32 %v1871, %v2017
      %v2112 = vadd.f32 %v1872, %v2022
      %v2113 = vadd.f32 %v1873, %v2025
      %v2114 = vadd.f32 %v1874, %v2030
      %v2115 = vadd.f32 %v1875, %v2033
      %v2116 = vadd.f32 %v1876, %v2038
      %v2117 = vadd.f32 %v1877, %v2041
      %v2118 = vadd.f32 %v1878, %v2046
      %v2119 = vadd.f32 %v1879, %v2049
      %v2120 = vadd.f32 %v1880, %v2054
      %v2121 = vadd.f32 %v1881, %v2057
      %v2122 = vadd.f32 %v1882, %v2062
      %v2123 = vadd.f32 %v1883, %v2065
      %v2124 = vadd.f32 %v1884, %v2070
      %v2125 = vadd.f32 %v1885, %v2073
      %v2126 = vadd.f32 %v1886, %v2078
      %v2127 = vadd.f32 %v1887, %v2081
      %v2128 = vadd.f32 %v1888, %v2086
      %v2129 = vadd.f32 %v1889, %v2089
      %v2130 = vadd.f32 %v1890, %v2094
      %v2131 = vadd.f32 %v1891, %v2097
      %v2133 = vrot.slane %v264, 5
      %v2134 = vrot.slane %v2133, 4
      %v2135 = vrot.slane %v265, 5
      %v2136 = vsel %vm1255, %v2134, %v2135
      %v2137 = vrot.slane %v2135, 4
      %v2138 = vrot.slane %v266, 5
      %v2139 = vsel %vm1255, %v2137, %v2138
      %s2140 = scalar_lea.vmem %s1, 80
      %v2141 = vld [vmem:[%s2140] sm:$0xf]
      %v2142 = vld [vmem:[%s2140 + $0x4] sm:$0xf]
      %v2143 = vld [vmem:[%s2140 + $0x8] sm:$0xf]
      %v2144 = vld [vmem:[%s2140 + $0xc] sm:$0xf]
      %v2145 = vunpack.c.l.b16 %v2136
      %v2146 = vunpack.c.l.b16 %v2139
      %v2147 = vpack.c.b16 %v2146, %v2145
      %v2152 = vunpack.c.l.b16 %v2141
      %v2153 = vunpack.c.l.b16 %v2142
      %v2154 = vunpack.c.l.b16 %v2143
      %v2155 = vunpack.c.l.b16 %v2144
      %v2156 = vpack.c.b16 %v2153, %v2152
      %v2157 = vpack.c.b16 %v2155, %v2154
      %v2161 = vsel %vm726, %v2147, 0
      %2163 = vmatprep.subr.bf16.mxu0 0
      %2164 = vmatpush1.bf16.msra.mxu0 0
      %2165 = vmatprep.subr.bf16.mxu0 0
      %2166 = vmatpush1.bf16.msra.mxu0 0
      %2167 = vmatprep.subr.bf16.mxu0 0
      %2168 = vmatpush1.bf16.msra.mxu0 0
      %2169 = vmatprep.subr.bf16.mxu0 0
      %2170 = vmatpush1.bf16.msra.mxu0 0
      %2171 = vmatprep.subr.bf16.mxu0 0
      %2172 = vmatpush1.bf16.msra.mxu0 0
      %2173 = vmatprep.subr.bf16.mxu0 0
      %2174 = vmatpush1.bf16.msra.mxu0 0
      %2175 = vmatprep.subr.bf16.mxu0 0
      %2176 = vmatpush1.bf16.msra.mxu0 %v2157
      %2177 = vmatprep.subr.bf16.mxu0 0
      %2178 = vmatpush1.bf16.msra.mxu0 %v2156
      %2179 = vmatprep.subr.bf16.mxu0 0
      %2180 = vmatpush2.bf16.msra.mxu0 0
      %2181 = vmatprep.subr.bf16.mxu0 0
      %2182 = vmatpush2.bf16.msra.mxu0 0
      %2183 = vmatprep.subr.bf16.mxu0 0
      %2184 = vmatpush2.bf16.msra.mxu0 0
      %2185 = vmatprep.subr.bf16.mxu0 0
      %2186 = vmatpush2.bf16.msra.mxu0 0
      %2187 = vmatprep.subr.bf16.mxu0 0
      %2188 = vmatpush2.bf16.msra.mxu0 0
      %2189 = vmatprep.subr.bf16.mxu0 0
      %2190 = vmatpush2.bf16.msra.mxu0 0
      %2191 = vmatprep.subr.bf16.mxu0 0
      %2192 = vmatpush2.bf16.msra.mxu0 0
      %2193 = vmatprep.subr.bf16.mxu0 0
      %2194 = vmatpush2.bf16.msra.mxu0 0
      %2195 = vmatprep.mubr.bf16.mxu0 0
      %2196 = vmatmul.mubr.bf16.gmra.mxu0 %v1437
      %v2197 = vpop.f32.mrf.mxu0
      %v2198 = vadd.f32 0.0, %v2197
      %v2199 = vpop.f32.mrf.mxu0
      %v2200 = vpop.f32.mrf.mxu0
      %v2201 = vadd.f32 0.0, %v2200
      %v2202 = vpop.f32.mrf.mxu0
      %2203 = vmatprep.mubr.bf16.mxu0 0
      %2204 = vmatmul.mubr.bf16.gmra.mxu0 %v1440
      %v2205 = vpop.f32.mrf.mxu0
      %v2206 = vadd.f32 0.0, %v2205
      %v2207 = vpop.f32.mrf.mxu0
      %v2208 = vpop.f32.mrf.mxu0
      %v2209 = vadd.f32 0.0, %v2208
      %v2210 = vpop.f32.mrf.mxu0
      %2211 = vmatprep.mubr.bf16.mxu0 0
      %2212 = vmatmul.mubr.bf16.gmra.mxu0 %v1443
      %v2213 = vpop.f32.mrf.mxu0
      %v2214 = vadd.f32 0.0, %v2213
      %v2215 = vpop.f32.mrf.mxu0
      %v2216 = vpop.f32.mrf.mxu0
      %v2217 = vadd.f32 0.0, %v2216
      %v2218 = vpop.f32.mrf.mxu0
      %2219 = vmatprep.mubr.bf16.mxu0 0
      %2220 = vmatmul.mubr.bf16.gmra.mxu0 %v1446
      %v2221 = vpop.f32.mrf.mxu0
      %v2222 = vadd.f32 0.0, %v2221
      %v2223 = vpop.f32.mrf.mxu0
      %v2224 = vpop.f32.mrf.mxu0
      %v2225 = vadd.f32 0.0, %v2224
      %v2226 = vpop.f32.mrf.mxu0
      %2227 = vmatprep.mubr.bf16.mxu0 0
      %2228 = vmatmul.mubr.bf16.gmra.mxu0 %v1449
      %v2229 = vpop.f32.mrf.mxu0
      %v2230 = vadd.f32 0.0, %v2229
      %v2231 = vpop.f32.mrf.mxu0
      %v2232 = vpop.f32.mrf.mxu0
      %v2233 = vadd.f32 0.0, %v2232
      %v2234 = vpop.f32.mrf.mxu0
      %2235 = vmatprep.mubr.bf16.mxu0 0
      %2236 = vmatmul.mubr.bf16.gmra.mxu0 %v1452
      %v2237 = vpop.f32.mrf.mxu0
      %v2238 = vadd.f32 0.0, %v2237
      %v2239 = vpop.f32.mrf.mxu0
      %v2240 = vpop.f32.mrf.mxu0
      %v2241 = vadd.f32 0.0, %v2240
      %v2242 = vpop.f32.mrf.mxu0
      %2243 = vmatprep.mubr.bf16.mxu0 0
      %2244 = vmatmul.mubr.bf16.gmra.mxu0 %v1455
      %v2245 = vpop.f32.mrf.mxu0
      %v2246 = vadd.f32 0.0, %v2245
      %v2247 = vpop.f32.mrf.mxu0
      %v2248 = vpop.f32.mrf.mxu0
      %v2249 = vadd.f32 0.0, %v2248
      %v2250 = vpop.f32.mrf.mxu0
      %2251 = vmatprep.mubr.bf16.mxu0 0
      %2252 = vmatmul.mubr.bf16.gmra.mxu0 %v1458
      %v2253 = vpop.f32.mrf.mxu0
      %v2254 = vadd.f32 0.0, %v2253
      %v2255 = vpop.f32.mrf.mxu0
      %v2256 = vpop.f32.mrf.mxu0
      %v2257 = vadd.f32 0.0, %v2256
      %v2258 = vpop.f32.mrf.mxu0
      %2259 = vmatprep.mubr.bf16.mxu0 0
      %2260 = vmatmul.mubr.bf16.gmra.mxu0 %v1461
      %v2261 = vpop.f32.mrf.mxu0
      %v2262 = vadd.f32 0.0, %v2261
      %v2263 = vpop.f32.mrf.mxu0
      %v2264 = vpop.f32.mrf.mxu0
      %v2265 = vadd.f32 0.0, %v2264
      %v2266 = vpop.f32.mrf.mxu0
      %2267 = vmatprep.mubr.bf16.mxu0 0
      %2268 = vmatmul.mubr.bf16.gmra.mxu0 %v1464
      %v2269 = vpop.f32.mrf.mxu0
      %v2270 = vadd.f32 0.0, %v2269
      %v2271 = vpop.f32.mrf.mxu0
      %v2272 = vpop.f32.mrf.mxu0
      %v2273 = vadd.f32 0.0, %v2272
      %v2274 = vpop.f32.mrf.mxu0
      %2275 = vmatprep.mubr.bf16.mxu0 0
      %2276 = vmatmul.mubr.bf16.gmra.mxu0 %v1467
      %v2277 = vpop.f32.mrf.mxu0
      %v2278 = vadd.f32 0.0, %v2277
      %v2279 = vpop.f32.mrf.mxu0
      %v2280 = vpop.f32.mrf.mxu0
      %v2281 = vadd.f32 0.0, %v2280
      %v2282 = vpop.f32.mrf.mxu0
      %2283 = vmatprep.mubr.bf16.mxu0 0
      %2284 = vmatmul.mubr.bf16.gmra.mxu0 %v1470
      %v2285 = vpop.f32.mrf.mxu0
      %v2286 = vadd.f32 0.0, %v2285
      %v2287 = vpop.f32.mrf.mxu0
      %v2288 = vpop.f32.mrf.mxu0
      %v2289 = vadd.f32 0.0, %v2288
      %v2290 = vpop.f32.mrf.mxu0
      %2291 = vmatprep.mubr.bf16.mxu0 0
      %2292 = vmatmul.mubr.bf16.gmra.mxu0 %v1473
      %v2293 = vpop.f32.mrf.mxu0
      %v2294 = vadd.f32 0.0, %v2293
      %v2295 = vpop.f32.mrf.mxu0
      %v2296 = vpop.f32.mrf.mxu0
      %v2297 = vadd.f32 0.0, %v2296
      %v2298 = vpop.f32.mrf.mxu0
      %2299 = vmatprep.mubr.bf16.mxu0 0
      %2300 = vmatmul.mubr.bf16.gmra.mxu0 %v1476
      %v2301 = vpop.f32.mrf.mxu0
      %v2302 = vadd.f32 0.0, %v2301
      %v2303 = vpop.f32.mrf.mxu0
      %v2304 = vpop.f32.mrf.mxu0
      %v2305 = vadd.f32 0.0, %v2304
      %v2306 = vpop.f32.mrf.mxu0
      %2307 = vmatprep.mubr.bf16.mxu0 0
      %2308 = vmatmul.mubr.bf16.gmra.mxu0 %v1479
      %v2309 = vpop.f32.mrf.mxu0
      %v2310 = vadd.f32 0.0, %v2309
      %v2311 = vpop.f32.mrf.mxu0
      %v2312 = vpop.f32.mrf.mxu0
      %v2313 = vadd.f32 0.0, %v2312
      %v2314 = vpop.f32.mrf.mxu0
      %2315 = vmatprep.mubr.bf16.mxu0 0
      %2316 = vmatmul.mubr.bf16.gmra.mxu0 %v2161
      %v2317 = vpop.f32.mrf.mxu0
      %v2318 = vadd.f32 0.0, %v2317
      %v2319 = vpop.f32.mrf.mxu0
      %v2320 = vpop.f32.mrf.mxu0
      %v2321 = vadd.f32 0.0, %v2320
      %v2322 = vpop.f32.mrf.mxu0
      %2323 = vdwg.mxu0
      %v2324 = vadd.f32 %v2100, %v2198
      %v2325 = vadd.f32 %v2101, %v2201
      %v2326 = vadd.f32 %v2102, %v2206
      %v2327 = vadd.f32 %v2103, %v2209
      %v2328 = vadd.f32 %v2104, %v2214
      %v2329 = vadd.f32 %v2105, %v2217
      %v2330 = vadd.f32 %v2106, %v2222
      %v2331 = vadd.f32 %v2107, %v2225
      %v2332 = vadd.f32 %v2108, %v2230
      %v2333 = vadd.f32 %v2109, %v2233
      %v2334 = vadd.f32 %v2110, %v2238
      %v2335 = vadd.f32 %v2111, %v2241
      %v2336 = vadd.f32 %v2112, %v2246
      %v2337 = vadd.f32 %v2113, %v2249
      %v2338 = vadd.f32 %v2114, %v2254
      %v2339 = vadd.f32 %v2115, %v2257
      %v2340 = vadd.f32 %v2116, %v2262
      %v2341 = vadd.f32 %v2117, %v2265
      %v2342 = vadd.f32 %v2118, %v2270
      %v2343 = vadd.f32 %v2119, %v2273
      %v2344 = vadd.f32 %v2120, %v2278
      %v2345 = vadd.f32 %v2121, %v2281
      %v2346 = vadd.f32 %v2122, %v2286
      %v2347 = vadd.f32 %v2123, %v2289
      %v2348 = vadd.f32 %v2124, %v2294
      %v2349 = vadd.f32 %v2125, %v2297
      %v2350 = vadd.f32 %v2126, %v2302
      %v2351 = vadd.f32 %v2127, %v2305
      %v2352 = vadd.f32 %v2128, %v2310
      %v2353 = vadd.f32 %v2129, %v2313
      %v2354 = vadd.f32 %v2130, %v2318
      %v2355 = vadd.f32 %v2131, %v2321
      %s2356 = scalar_lea.vmem %s1, 96
      %v2357 = vld [vmem:[%s2356] sm:$0xf]
      %v2358 = vld [vmem:[%s2356 + $0x4] sm:$0xf]
      %v2359 = vld [vmem:[%s2356 + $0x8] sm:$0xf]
      %v2360 = vld [vmem:[%s2356 + $0xc] sm:$0xf]
      %v2363 = vunpack.c.l.b16 %v267
      %v2364 = vunpack.c.l.b16 %v268
      %v2365 = vpack.c.b16 %v2364, %v2363
      %v2370 = vunpack.c.l.b16 %v2357
      %v2371 = vunpack.c.l.b16 %v2358
      %v2372 = vunpack.c.l.b16 %v2359
      %v2373 = vunpack.c.l.b16 %v2360
      %v2374 = vpack.c.b16 %v2371, %v2370
      %v2375 = vpack.c.b16 %v2373, %v2372
      %v2379 = vsel %vm726, %v2365, 0
      %2381 = vmatprep.subr.bf16.mxu0 0
      %2382 = vmatpush1.bf16.msra.mxu0 0
      %2383 = vmatprep.subr.bf16.mxu0 0
      %2384 = vmatpush1.bf16.msra.mxu0 0
      %2385 = vmatprep.subr.bf16.mxu0 0
      %2386 = vmatpush1.bf16.msra.mxu0 0
      %2387 = vmatprep.subr.bf16.mxu0 0
      %2388 = vmatpush1.bf16.msra.mxu0 0
      %2389 = vmatprep.subr.bf16.mxu0 0
      %2390 = vmatpush1.bf16.msra.mxu0 0
      %2391 = vmatprep.subr.bf16.mxu0 0
      %2392 = vmatpush1.bf16.msra.mxu0 0
      %2393 = vmatprep.subr.bf16.mxu0 0
      %2394 = vmatpush1.bf16.msra.mxu0 %v2375
      %2395 = vmatprep.subr.bf16.mxu0 0
      %2396 = vmatpush1.bf16.msra.mxu0 %v2374
      %2397 = vmatprep.subr.bf16.mxu0 0
      %2398 = vmatpush2.bf16.msra.mxu0 0
      %2399 = vmatprep.subr.bf16.mxu0 0
      %2400 = vmatpush2.bf16.msra.mxu0 0
      %2401 = vmatprep.subr.bf16.mxu0 0
      %2402 = vmatpush2.bf16.msra.mxu0 0
      %2403 = vmatprep.subr.bf16.mxu0 0
      %2404 = vmatpush2.bf16.msra.mxu0 0
      %2405 = vmatprep.subr.bf16.mxu0 0
      %2406 = vmatpush2.bf16.msra.mxu0 0
      %2407 = vmatprep.subr.bf16.mxu0 0
      %2408 = vmatpush2.bf16.msra.mxu0 0
      %2409 = vmatprep.subr.bf16.mxu0 0
      %2410 = vmatpush2.bf16.msra.mxu0 0
      %2411 = vmatprep.subr.bf16.mxu0 0
      %2412 = vmatpush2.bf16.msra.mxu0 0
      %2413 = vmatprep.mubr.bf16.mxu0 0
      %2414 = vmatmul.mubr.bf16.gmra.mxu0 %v1035
      %v2415 = vpop.f32.mrf.mxu0
      %v2416 = vadd.f32 0.0, %v2415
      %v2417 = vpop.f32.mrf.mxu0
      %v2418 = vpop.f32.mrf.mxu0
      %v2419 = vadd.f32 0.0, %v2418
      %v2420 = vpop.f32.mrf.mxu0
      %2421 = vmatprep.mubr.bf16.mxu0 0
      %2422 = vmatmul.mubr.bf16.gmra.mxu0 %v1038
      %v2423 = vpop.f32.mrf.mxu0
      %v2424 = vadd.f32 0.0, %v2423
      %v2425 = vpop.f32.mrf.mxu0
      %v2426 = vpop.f32.mrf.mxu0
      %v2427 = vadd.f32 0.0, %v2426
      %v2428 = vpop.f32.mrf.mxu0
      %2429 = vmatprep.mubr.bf16.mxu0 0
      %2430 = vmatmul.mubr.bf16.gmra.mxu0 %v1041
      %v2431 = vpop.f32.mrf.mxu0
      %v2432 = vadd.f32 0.0, %v2431
      %v2433 = vpop.f32.mrf.mxu0
      %v2434 = vpop.f32.mrf.mxu0
      %v2435 = vadd.f32 0.0, %v2434
      %v2436 = vpop.f32.mrf.mxu0
      %2437 = vmatprep.mubr.bf16.mxu0 0
      %2438 = vmatmul.mubr.bf16.gmra.mxu0 %v1044
      %v2439 = vpop.f32.mrf.mxu0
      %v2440 = vadd.f32 0.0, %v2439
      %v2441 = vpop.f32.mrf.mxu0
      %v2442 = vpop.f32.mrf.mxu0
      %v2443 = vadd.f32 0.0, %v2442
      %v2444 = vpop.f32.mrf.mxu0
      %2445 = vmatprep.mubr.bf16.mxu0 0
      %2446 = vmatmul.mubr.bf16.gmra.mxu0 %v1047
      %v2447 = vpop.f32.mrf.mxu0
      %v2448 = vadd.f32 0.0, %v2447
      %v2449 = vpop.f32.mrf.mxu0
      %v2450 = vpop.f32.mrf.mxu0
      %v2451 = vadd.f32 0.0, %v2450
      %v2452 = vpop.f32.mrf.mxu0
      %2453 = vmatprep.mubr.bf16.mxu0 0
      %2454 = vmatmul.mubr.bf16.gmra.mxu0 %v1050
      %v2455 = vpop.f32.mrf.mxu0
      %v2456 = vadd.f32 0.0, %v2455
      %v2457 = vpop.f32.mrf.mxu0
      %v2458 = vpop.f32.mrf.mxu0
      %v2459 = vadd.f32 0.0, %v2458
      %v2460 = vpop.f32.mrf.mxu0
      %2461 = vmatprep.mubr.bf16.mxu0 0
      %2462 = vmatmul.mubr.bf16.gmra.mxu0 %v1053
      %v2463 = vpop.f32.mrf.mxu0
      %v2464 = vadd.f32 0.0, %v2463
      %v2465 = vpop.f32.mrf.mxu0
      %v2466 = vpop.f32.mrf.mxu0
      %v2467 = vadd.f32 0.0, %v2466
      %v2468 = vpop.f32.mrf.mxu0
      %2469 = vmatprep.mubr.bf16.mxu0 0
      %2470 = vmatmul.mubr.bf16.gmra.mxu0 %v1056
      %v2471 = vpop.f32.mrf.mxu0
      %v2472 = vadd.f32 0.0, %v2471
      %v2473 = vpop.f32.mrf.mxu0
      %v2474 = vpop.f32.mrf.mxu0
      %v2475 = vadd.f32 0.0, %v2474
      %v2476 = vpop.f32.mrf.mxu0
      %2477 = vmatprep.mubr.bf16.mxu0 0
      %2478 = vmatmul.mubr.bf16.gmra.mxu0 %v1059
      %v2479 = vpop.f32.mrf.mxu0
      %v2480 = vadd.f32 0.0, %v2479
      %v2481 = vpop.f32.mrf.mxu0
      %v2482 = vpop.f32.mrf.mxu0
      %v2483 = vadd.f32 0.0, %v2482
      %v2484 = vpop.f32.mrf.mxu0
      %2485 = vmatprep.mubr.bf16.mxu0 0
      %2486 = vmatmul.mubr.bf16.gmra.mxu0 %v1062
      %v2487 = vpop.f32.mrf.mxu0
      %v2488 = vadd.f32 0.0, %v2487
      %v2489 = vpop.f32.mrf.mxu0
      %v2490 = vpop.f32.mrf.mxu0
      %v2491 = vadd.f32 0.0, %v2490
      %v2492 = vpop.f32.mrf.mxu0
      %2493 = vmatprep.mubr.bf16.mxu0 0
      %2494 = vmatmul.mubr.bf16.gmra.mxu0 %v1065
      %v2495 = vpop.f32.mrf.mxu0
      %v2496 = vadd.f32 0.0, %v2495
      %v2497 = vpop.f32.mrf.mxu0
      %v2498 = vpop.f32.mrf.mxu0
      %v2499 = vadd.f32 0.0, %v2498
      %v2500 = vpop.f32.mrf.mxu0
      %2501 = vmatprep.mubr.bf16.mxu0 0
      %2502 = vmatmul.mubr.bf16.gmra.mxu0 %v1068
      %v2503 = vpop.f32.mrf.mxu0
      %v2504 = vadd.f32 0.0, %v2503
      %v2505 = vpop.f32.mrf.mxu0
      %v2506 = vpop.f32.mrf.mxu0
      %v2507 = vadd.f32 0.0, %v2506
      %v2508 = vpop.f32.mrf.mxu0
      %2509 = vmatprep.mubr.bf16.mxu0 0
      %2510 = vmatmul.mubr.bf16.gmra.mxu0 %v1071
      %v2511 = vpop.f32.mrf.mxu0
      %v2512 = vadd.f32 0.0, %v2511
      %v2513 = vpop.f32.mrf.mxu0
      %v2514 = vpop.f32.mrf.mxu0
      %v2515 = vadd.f32 0.0, %v2514
      %v2516 = vpop.f32.mrf.mxu0
      %2517 = vmatprep.mubr.bf16.mxu0 0
      %2518 = vmatmul.mubr.bf16.gmra.mxu0 %v1074
      %v2519 = vpop.f32.mrf.mxu0
      %v2520 = vadd.f32 0.0, %v2519
      %v2521 = vpop.f32.mrf.mxu0
      %v2522 = vpop.f32.mrf.mxu0
      %v2523 = vadd.f32 0.0, %v2522
      %v2524 = vpop.f32.mrf.mxu0
      %2525 = vmatprep.mubr.bf16.mxu0 0
      %2526 = vmatmul.mubr.bf16.gmra.mxu0 %v1697
      %v2527 = vpop.f32.mrf.mxu0
      %v2528 = vadd.f32 0.0, %v2527
      %v2529 = vpop.f32.mrf.mxu0
      %v2530 = vpop.f32.mrf.mxu0
      %v2531 = vadd.f32 0.0, %v2530
      %v2532 = vpop.f32.mrf.mxu0
      %2533 = vmatprep.mubr.bf16.mxu0 0
      %2534 = vmatmul.mubr.bf16.gmra.mxu0 %v2379
      %v2535 = vpop.f32.mrf.mxu0
      %v2536 = vadd.f32 0.0, %v2535
      %v2537 = vpop.f32.mrf.mxu0
      %v2538 = vpop.f32.mrf.mxu0
      %v2539 = vadd.f32 0.0, %v2538
      %v2540 = vpop.f32.mrf.mxu0
      %2541 = vdwg.mxu0
      %v2542 = vadd.f32 %v2324, %v2416
      %v2543 = vadd.f32 %v2325, %v2419
      %v2544 = vadd.f32 %v2326, %v2424
      %v2545 = vadd.f32 %v2327, %v2427
      %v2546 = vadd.f32 %v2328, %v2432
      %v2547 = vadd.f32 %v2329, %v2435
      %v2548 = vadd.f32 %v2330, %v2440
      %v2549 = vadd.f32 %v2331, %v2443
      %v2550 = vadd.f32 %v2332, %v2448
      %v2551 = vadd.f32 %v2333, %v2451
      %v2552 = vadd.f32 %v2334, %v2456
      %v2553 = vadd.f32 %v2335, %v2459
      %v2554 = vadd.f32 %v2336, %v2464
      %v2555 = vadd.f32 %v2337, %v2467
      %v2556 = vadd.f32 %v2338, %v2472
      %v2557 = vadd.f32 %v2339, %v2475
      %v2558 = vadd.f32 %v2340, %v2480
      %v2559 = vadd.f32 %v2341, %v2483
      %v2560 = vadd.f32 %v2342, %v2488
      %v2561 = vadd.f32 %v2343, %v2491
      %v2562 = vadd.f32 %v2344, %v2496
      %v2563 = vadd.f32 %v2345, %v2499
      %v2564 = vadd.f32 %v2346, %v2504
      %v2565 = vadd.f32 %v2347, %v2507
      %v2566 = vadd.f32 %v2348, %v2512
      %v2567 = vadd.f32 %v2349, %v2515
      %v2568 = vadd.f32 %v2350, %v2520
      %v2569 = vadd.f32 %v2351, %v2523
      %v2570 = vadd.f32 %v2352, %v2528
      %v2571 = vadd.f32 %v2353, %v2531
      %v2572 = vadd.f32 %v2354, %v2536
      %v2573 = vadd.f32 %v2355, %v2539
      %v2575 = vshrl.u32 %v267, 16
      %v2577 = vrot.slane %v2575, 4
      %v2578 = vshll.u32 %v267, 16
      %v2580 = vrot.slane %v2578, 5
      %v2581 = vor.u32 %v2577, %v2580
      %v2582 = vrot.slane %v2581, 4
      %v2584 = vshll.u32 %v268, 16
      %v2586 = vrot.slane %v2584, 5
      %v2587 = vsel %vm276, %v2582, %v2586
      %v2588 = vshrl.u32 %v268, 16
      %v2590 = vrot.slane %v2588, 4
      %v2591 = vor.u32 %v2590, %v2586
      %v2592 = vrot.slane %v2591, 4
      %v2594 = vshll.u32 %v269, 16
      %v2596 = vrot.slane %v2594, 5
      %v2597 = vsel %vm276, %v2592, %v2596
      %s2598 = scalar_lea.vmem %s1, 112
      %v2599 = vld [vmem:[%s2598] sm:$0xf]
      %v2600 = vld [vmem:[%s2598 + $0x4] sm:$0xf]
      %v2601 = vld [vmem:[%s2598 + $0x8] sm:$0xf]
      %v2602 = vld [vmem:[%s2598 + $0xc] sm:$0xf]
      %v2603 = vunpack.c.l.b16 %v2587
      %v2604 = vunpack.c.l.b16 %v2597
      %v2605 = vpack.c.b16 %v2604, %v2603
      %v2610 = vunpack.c.l.b16 %v2599
      %v2611 = vunpack.c.l.b16 %v2600
      %v2612 = vunpack.c.l.b16 %v2601
      %v2613 = vunpack.c.l.b16 %v2602
      %v2614 = vpack.c.b16 %v2611, %v2610
      %v2615 = vpack.c.b16 %v2613, %v2612
      %v2619 = vsel %vm726, %v2605, 0
      %2621 = vmatprep.subr.bf16.mxu0 0
      %2622 = vmatpush1.bf16.msra.mxu0 0
      %2623 = vmatprep.subr.bf16.mxu0 0
      %2624 = vmatpush1.bf16.msra.mxu0 0
      %2625 = vmatprep.subr.bf16.mxu0 0
      %2626 = vmatpush1.bf16.msra.mxu0 0
      %2627 = vmatprep.subr.bf16.mxu0 0
      %2628 = vmatpush1.bf16.msra.mxu0 0
      %2629 = vmatprep.subr.bf16.mxu0 0
      %2630 = vmatpush1.bf16.msra.mxu0 0
      %2631 = vmatprep.subr.bf16.mxu0 0
      %2632 = vmatpush1.bf16.msra.mxu0 0
      %2633 = vmatprep.subr.bf16.mxu0 0
      %2634 = vmatpush1.bf16.msra.mxu0 %v2615
      %2635 = vmatprep.subr.bf16.mxu0 0
      %2636 = vmatpush1.bf16.msra.mxu0 %v2614
      %2637 = vmatprep.subr.bf16.mxu0 0
      %2638 = vmatpush2.bf16.msra.mxu0 0
      %2639 = vmatprep.subr.bf16.mxu0 0
      %2640 = vmatpush2.bf16.msra.mxu0 0
      %2641 = vmatprep.subr.bf16.mxu0 0
      %2642 = vmatpush2.bf16.msra.mxu0 0
      %2643 = vmatprep.subr.bf16.mxu0 0
      %2644 = vmatpush2.bf16.msra.mxu0 0
      %2645 = vmatprep.subr.bf16.mxu0 0
      %2646 = vmatpush2.bf16.msra.mxu0 0
      %2647 = vmatprep.subr.bf16.mxu0 0
      %2648 = vmatpush2.bf16.msra.mxu0 0
      %2649 = vmatprep.subr.bf16.mxu0 0
      %2650 = vmatpush2.bf16.msra.mxu0 0
      %2651 = vmatprep.subr.bf16.mxu0 0
      %2652 = vmatpush2.bf16.msra.mxu0 0
      %2653 = vmatprep.mubr.bf16.mxu0 0
      %2654 = vmatmul.mubr.bf16.gmra.mxu0 %v734
      %v2655 = vpop.f32.mrf.mxu0
      %v2656 = vadd.f32 0.0, %v2655
      %v2657 = vpop.f32.mrf.mxu0
      %v2658 = vpop.f32.mrf.mxu0
      %v2659 = vadd.f32 0.0, %v2658
      %v2660 = vpop.f32.mrf.mxu0
      %2661 = vmatprep.mubr.bf16.mxu0 0
      %2662 = vmatmul.mubr.bf16.gmra.mxu0 %v737
      %v2663 = vpop.f32.mrf.mxu0
      %v2664 = vadd.f32 0.0, %v2663
      %v2665 = vpop.f32.mrf.mxu0
      %v2666 = vpop.f32.mrf.mxu0
      %v2667 = vadd.f32 0.0, %v2666
      %v2668 = vpop.f32.mrf.mxu0
      %2669 = vmatprep.mubr.bf16.mxu0 0
      %2670 = vmatmul.mubr.bf16.gmra.mxu0 %v740
      %v2671 = vpop.f32.mrf.mxu0
      %v2672 = vadd.f32 0.0, %v2671
      %v2673 = vpop.f32.mrf.mxu0
      %v2674 = vpop.f32.mrf.mxu0
      %v2675 = vadd.f32 0.0, %v2674
      %v2676 = vpop.f32.mrf.mxu0
      %2677 = vmatprep.mubr.bf16.mxu0 0
      %2678 = vmatmul.mubr.bf16.gmra.mxu0 %v743
      %v2679 = vpop.f32.mrf.mxu0
      %v2680 = vadd.f32 0.0, %v2679
      %v2681 = vpop.f32.mrf.mxu0
      %v2682 = vpop.f32.mrf.mxu0
      %v2683 = vadd.f32 0.0, %v2682
      %v2684 = vpop.f32.mrf.mxu0
      %2685 = vmatprep.mubr.bf16.mxu0 0
      %2686 = vmatmul.mubr.bf16.gmra.mxu0 %v746
      %v2687 = vpop.f32.mrf.mxu0
      %v2688 = vadd.f32 0.0, %v2687
      %v2689 = vpop.f32.mrf.mxu0
      %v2690 = vpop.f32.mrf.mxu0
      %v2691 = vadd.f32 0.0, %v2690
      %v2692 = vpop.f32.mrf.mxu0
      %2693 = vmatprep.mubr.bf16.mxu0 0
      %2694 = vmatmul.mubr.bf16.gmra.mxu0 %v749
      %v2695 = vpop.f32.mrf.mxu0
      %v2696 = vadd.f32 0.0, %v2695
      %v2697 = vpop.f32.mrf.mxu0
      %v2698 = vpop.f32.mrf.mxu0
      %v2699 = vadd.f32 0.0, %v2698
      %v2700 = vpop.f32.mrf.mxu0
      %2701 = vmatprep.mubr.bf16.mxu0 0
      %2702 = vmatmul.mubr.bf16.gmra.mxu0 %v752
      %v2703 = vpop.f32.mrf.mxu0
      %v2704 = vadd.f32 0.0, %v2703
      %v2705 = vpop.f32.mrf.mxu0
      %v2706 = vpop.f32.mrf.mxu0
      %v2707 = vadd.f32 0.0, %v2706
      %v2708 = vpop.f32.mrf.mxu0
      %2709 = vmatprep.mubr.bf16.mxu0 0
      %2710 = vmatmul.mubr.bf16.gmra.mxu0 %v755
      %v2711 = vpop.f32.mrf.mxu0
      %v2712 = vadd.f32 0.0, %v2711
      %v2713 = vpop.f32.mrf.mxu0
      %v2714 = vpop.f32.mrf.mxu0
      %v2715 = vadd.f32 0.0, %v2714
      %v2716 = vpop.f32.mrf.mxu0
      %2717 = vmatprep.mubr.bf16.mxu0 0
      %2718 = vmatmul.mubr.bf16.gmra.mxu0 %v758
      %v2719 = vpop.f32.mrf.mxu0
      %v2720 = vadd.f32 0.0, %v2719
      %v2721 = vpop.f32.mrf.mxu0
      %v2722 = vpop.f32.mrf.mxu0
      %v2723 = vadd.f32 0.0, %v2722
      %v2724 = vpop.f32.mrf.mxu0
      %2725 = vmatprep.mubr.bf16.mxu0 0
      %2726 = vmatmul.mubr.bf16.gmra.mxu0 %v761
      %v2727 = vpop.f32.mrf.mxu0
      %v2728 = vadd.f32 0.0, %v2727
      %v2729 = vpop.f32.mrf.mxu0
      %v2730 = vpop.f32.mrf.mxu0
      %v2731 = vadd.f32 0.0, %v2730
      %v2732 = vpop.f32.mrf.mxu0
      %2733 = vmatprep.mubr.bf16.mxu0 0
      %2734 = vmatmul.mubr.bf16.gmra.mxu0 %v764
      %v2735 = vpop.f32.mrf.mxu0
      %v2736 = vadd.f32 0.0, %v2735
      %v2737 = vpop.f32.mrf.mxu0
      %v2738 = vpop.f32.mrf.mxu0
      %v2739 = vadd.f32 0.0, %v2738
      %v2740 = vpop.f32.mrf.mxu0
      %2741 = vmatprep.mubr.bf16.mxu0 0
      %2742 = vmatmul.mubr.bf16.gmra.mxu0 %v767
      %v2743 = vpop.f32.mrf.mxu0
      %v2744 = vadd.f32 0.0, %v2743
      %v2745 = vpop.f32.mrf.mxu0
      %v2746 = vpop.f32.mrf.mxu0
      %v2747 = vadd.f32 0.0, %v2746
      %v2748 = vpop.f32.mrf.mxu0
      %2749 = vmatprep.mubr.bf16.mxu0 0
      %2750 = vmatmul.mubr.bf16.gmra.mxu0 %v770
      %v2751 = vpop.f32.mrf.mxu0
      %v2752 = vadd.f32 0.0, %v2751
      %v2753 = vpop.f32.mrf.mxu0
      %v2754 = vpop.f32.mrf.mxu0
      %v2755 = vadd.f32 0.0, %v2754
      %v2756 = vpop.f32.mrf.mxu0
      %2757 = vmatprep.mubr.bf16.mxu0 0
      %2758 = vmatmul.mubr.bf16.gmra.mxu0 %v773
      %v2759 = vpop.f32.mrf.mxu0
      %v2760 = vadd.f32 0.0, %v2759
      %v2761 = vpop.f32.mrf.mxu0
      %v2762 = vpop.f32.mrf.mxu0
      %v2763 = vadd.f32 0.0, %v2762
      %v2764 = vpop.f32.mrf.mxu0
      %2765 = vmatprep.mubr.bf16.mxu0 0
      %2766 = vmatmul.mubr.bf16.gmra.mxu0 %v1937
      %v2767 = vpop.f32.mrf.mxu0
      %v2768 = vadd.f32 0.0, %v2767
      %v2769 = vpop.f32.mrf.mxu0
      %v2770 = vpop.f32.mrf.mxu0
      %v2771 = vadd.f32 0.0, %v2770
      %v2772 = vpop.f32.mrf.mxu0
      %2773 = vmatprep.mubr.bf16.mxu0 0
      %2774 = vmatmul.mubr.bf16.gmra.mxu0 %v2619
      %v2775 = vpop.f32.mrf.mxu0
      %v2776 = vadd.f32 0.0, %v2775
      %v2777 = vpop.f32.mrf.mxu0
      %v2778 = vpop.f32.mrf.mxu0
      %v2779 = vadd.f32 0.0, %v2778
      %v2780 = vpop.f32.mrf.mxu0
      %2781 = vdwg.mxu0
      %v2782 = vadd.f32 %v2542, %v2656
      %v2783 = vadd.f32 %v2543, %v2659
      %v2784 = vadd.f32 %v2544, %v2664
      %v2785 = vadd.f32 %v2545, %v2667
      %v2786 = vadd.f32 %v2546, %v2672
      %v2787 = vadd.f32 %v2547, %v2675
      %v2788 = vadd.f32 %v2548, %v2680
      %v2789 = vadd.f32 %v2549, %v2683
      %v2790 = vadd.f32 %v2550, %v2688
      %v2791 = vadd.f32 %v2551, %v2691
      %v2792 = vadd.f32 %v2552, %v2696
      %v2793 = vadd.f32 %v2553, %v2699
      %v2794 = vadd.f32 %v2554, %v2704
      %v2795 = vadd.f32 %v2555, %v2707
      %v2796 = vadd.f32 %v2556, %v2712
      %v2797 = vadd.f32 %v2557, %v2715
      %v2798 = vadd.f32 %v2558, %v2720
      %v2799 = vadd.f32 %v2559, %v2723
      %v2800 = vadd.f32 %v2560, %v2728
      %v2801 = vadd.f32 %v2561, %v2731
      %v2802 = vadd.f32 %v2562, %v2736
      %v2803 = vadd.f32 %v2563, %v2739
      %v2804 = vadd.f32 %v2564, %v2744
      %v2805 = vadd.f32 %v2565, %v2747
      %v2806 = vadd.f32 %v2566, %v2752
      %v2807 = vadd.f32 %v2567, %v2755
      %v2808 = vadd.f32 %v2568, %v2760
      %v2809 = vadd.f32 %v2569, %v2763
      %v2810 = vadd.f32 %v2570, %v2768
      %v2811 = vadd.f32 %v2571, %v2771
      %v2812 = vadd.f32 %v2572, %v2776
      %v2813 = vadd.f32 %v2573, %v2779
      %v2815 = vrot.slane %v267, 5
      %v2816 = vrot.slane %v2815, 4
      %v2817 = vrot.slane %v268, 5
      %v2818 = vsel %vm1255, %v2816, %v2817
      %v2819 = vrot.slane %v2817, 4
      %v2820 = vrot.slane %v269, 5
      %v2821 = vsel %vm1255, %v2819, %v2820
      %s2822 = scalar_lea.vmem %s1, 128
      %v2823 = vld [vmem:[%s2822] sm:$0xf]
      %v2824 = vld [vmem:[%s2822 + $0x4] sm:$0xf]
      %v2825 = vld [vmem:[%s2822 + $0x8] sm:$0xf]
      %v2826 = vld [vmem:[%s2822 + $0xc] sm:$0xf]
      %v2827 = vunpack.c.l.b16 %v2818
      %v2828 = vunpack.c.l.b16 %v2821
      %v2829 = vpack.c.b16 %v2828, %v2827
      %v2834 = vunpack.c.l.b16 %v2823
      %v2835 = vunpack.c.l.b16 %v2824
      %v2836 = vunpack.c.l.b16 %v2825
      %v2837 = vunpack.c.l.b16 %v2826
      %v2838 = vpack.c.b16 %v2835, %v2834
      %v2839 = vpack.c.b16 %v2837, %v2836
      %v2843 = vsel %vm726, %v2829, 0
      %2845 = vmatprep.subr.bf16.mxu0 0
      %2846 = vmatpush1.bf16.msra.mxu0 0
      %2847 = vmatprep.subr.bf16.mxu0 0
      %2848 = vmatpush1.bf16.msra.mxu0 0
      %2849 = vmatprep.subr.bf16.mxu0 0
      %2850 = vmatpush1.bf16.msra.mxu0 0
      %2851 = vmatprep.subr.bf16.mxu0 0
      %2852 = vmatpush1.bf16.msra.mxu0 0
      %2853 = vmatprep.subr.bf16.mxu0 0
      %2854 = vmatpush1.bf16.msra.mxu0 0
      %2855 = vmatprep.subr.bf16.mxu0 0
      %2856 = vmatpush1.bf16.msra.mxu0 0
      %2857 = vmatprep.subr.bf16.mxu0 0
      %2858 = vmatpush1.bf16.msra.mxu0 %v2839
      %2859 = vmatprep.subr.bf16.mxu0 0
      %2860 = vmatpush1.bf16.msra.mxu0 %v2838
      %2861 = vmatprep.subr.bf16.mxu0 0
      %2862 = vmatpush2.bf16.msra.mxu0 0
      %2863 = vmatprep.subr.bf16.mxu0 0
      %2864 = vmatpush2.bf16.msra.mxu0 0
      %2865 = vmatprep.subr.bf16.mxu0 0
      %2866 = vmatpush2.bf16.msra.mxu0 0
      %2867 = vmatprep.subr.bf16.mxu0 0
      %2868 = vmatpush2.bf16.msra.mxu0 0
      %2869 = vmatprep.subr.bf16.mxu0 0
      %2870 = vmatpush2.bf16.msra.mxu0 0
      %2871 = vmatprep.subr.bf16.mxu0 0
      %2872 = vmatpush2.bf16.msra.mxu0 0
      %2873 = vmatprep.subr.bf16.mxu0 0
      %2874 = vmatpush2.bf16.msra.mxu0 0
      %2875 = vmatprep.subr.bf16.mxu0 0
      %2876 = vmatpush2.bf16.msra.mxu0 0
      %2877 = vmatprep.mubr.bf16.mxu0 0
      %2878 = vmatmul.mubr.bf16.gmra.mxu0 %v1440
      %v2879 = vpop.f32.mrf.mxu0
      %v2880 = vadd.f32 0.0, %v2879
      %v2881 = vpop.f32.mrf.mxu0
      %v2882 = vpop.f32.mrf.mxu0
      %v2883 = vadd.f32 0.0, %v2882
      %v2884 = vpop.f32.mrf.mxu0
      %2885 = vmatprep.mubr.bf16.mxu0 0
      %2886 = vmatmul.mubr.bf16.gmra.mxu0 %v1443
      %v2887 = vpop.f32.mrf.mxu0
      %v2888 = vadd.f32 0.0, %v2887
      %v2889 = vpop.f32.mrf.mxu0
      %v2890 = vpop.f32.mrf.mxu0
      %v2891 = vadd.f32 0.0, %v2890
      %v2892 = vpop.f32.mrf.mxu0
      %2893 = vmatprep.mubr.bf16.mxu0 0
      %2894 = vmatmul.mubr.bf16.gmra.mxu0 %v1446
      %v2895 = vpop.f32.mrf.mxu0
      %v2896 = vadd.f32 0.0, %v2895
      %v2897 = vpop.f32.mrf.mxu0
      %v2898 = vpop.f32.mrf.mxu0
      %v2899 = vadd.f32 0.0, %v2898
      %v2900 = vpop.f32.mrf.mxu0
      %2901 = vmatprep.mubr.bf16.mxu0 0
      %2902 = vmatmul.mubr.bf16.gmra.mxu0 %v1449
      %v2903 = vpop.f32.mrf.mxu0
      %v2904 = vadd.f32 0.0, %v2903
      %v2905 = vpop.f32.mrf.mxu0
      %v2906 = vpop.f32.mrf.mxu0
      %v2907 = vadd.f32 0.0, %v2906
      %v2908 = vpop.f32.mrf.mxu0
      %2909 = vmatprep.mubr.bf16.mxu0 0
      %2910 = vmatmul.mubr.bf16.gmra.mxu0 %v1452
      %v2911 = vpop.f32.mrf.mxu0
      %v2912 = vadd.f32 0.0, %v2911
      %v2913 = vpop.f32.mrf.mxu0
      %v2914 = vpop.f32.mrf.mxu0
      %v2915 = vadd.f32 0.0, %v2914
      %v2916 = vpop.f32.mrf.mxu0
      %2917 = vmatprep.mubr.bf16.mxu0 0
      %2918 = vmatmul.mubr.bf16.gmra.mxu0 %v1455
      %v2919 = vpop.f32.mrf.mxu0
      %v2920 = vadd.f32 0.0, %v2919
      %v2921 = vpop.f32.mrf.mxu0
      %v2922 = vpop.f32.mrf.mxu0
      %v2923 = vadd.f32 0.0, %v2922
      %v2924 = vpop.f32.mrf.mxu0
      %2925 = vmatprep.mubr.bf16.mxu0 0
      %2926 = vmatmul.mubr.bf16.gmra.mxu0 %v1458
      %v2927 = vpop.f32.mrf.mxu0
      %v2928 = vadd.f32 0.0, %v2927
      %v2929 = vpop.f32.mrf.mxu0
      %v2930 = vpop.f32.mrf.mxu0
      %v2931 = vadd.f32 0.0, %v2930
      %v2932 = vpop.f32.mrf.mxu0
      %2933 = vmatprep.mubr.bf16.mxu0 0
      %2934 = vmatmul.mubr.bf16.gmra.mxu0 %v1461
      %v2935 = vpop.f32.mrf.mxu0
      %v2936 = vadd.f32 0.0, %v2935
      %v2937 = vpop.f32.mrf.mxu0
      %v2938 = vpop.f32.mrf.mxu0
      %v2939 = vadd.f32 0.0, %v2938
      %v2940 = vpop.f32.mrf.mxu0
      %2941 = vmatprep.mubr.bf16.mxu0 0
      %2942 = vmatmul.mubr.bf16.gmra.mxu0 %v1464
      %v2943 = vpop.f32.mrf.mxu0
      %v2944 = vadd.f32 0.0, %v2943
      %v2945 = vpop.f32.mrf.mxu0
      %v2946 = vpop.f32.mrf.mxu0
      %v2947 = vadd.f32 0.0, %v2946
      %v2948 = vpop.f32.mrf.mxu0
      %2949 = vmatprep.mubr.bf16.mxu0 0
      %2950 = vmatmul.mubr.bf16.gmra.mxu0 %v1467
      %v2951 = vpop.f32.mrf.mxu0
      %v2952 = vadd.f32 0.0, %v2951
      %v2953 = vpop.f32.mrf.mxu0
      %v2954 = vpop.f32.mrf.mxu0
      %v2955 = vadd.f32 0.0, %v2954
      %v2956 = vpop.f32.mrf.mxu0
      %2957 = vmatprep.mubr.bf16.mxu0 0
      %2958 = vmatmul.mubr.bf16.gmra.mxu0 %v1470
      %v2959 = vpop.f32.mrf.mxu0
      %v2960 = vadd.f32 0.0, %v2959
      %v2961 = vpop.f32.mrf.mxu0
      %v2962 = vpop.f32.mrf.mxu0
      %v2963 = vadd.f32 0.0, %v2962
      %v2964 = vpop.f32.mrf.mxu0
      %2965 = vmatprep.mubr.bf16.mxu0 0
      %2966 = vmatmul.mubr.bf16.gmra.mxu0 %v1473
      %v2967 = vpop.f32.mrf.mxu0
      %v2968 = vadd.f32 0.0, %v2967
      %v2969 = vpop.f32.mrf.mxu0
      %v2970 = vpop.f32.mrf.mxu0
      %v2971 = vadd.f32 0.0, %v2970
      %v2972 = vpop.f32.mrf.mxu0
      %2973 = vmatprep.mubr.bf16.mxu0 0
      %2974 = vmatmul.mubr.bf16.gmra.mxu0 %v1476
      %v2975 = vpop.f32.mrf.mxu0
      %v2976 = vadd.f32 0.0, %v2975
      %v2977 = vpop.f32.mrf.mxu0
      %v2978 = vpop.f32.mrf.mxu0
      %v2979 = vadd.f32 0.0, %v2978
      %v2980 = vpop.f32.mrf.mxu0
      %2981 = vmatprep.mubr.bf16.mxu0 0
      %2982 = vmatmul.mubr.bf16.gmra.mxu0 %v1479
      %v2983 = vpop.f32.mrf.mxu0
      %v2984 = vadd.f32 0.0, %v2983
      %v2985 = vpop.f32.mrf.mxu0
      %v2986 = vpop.f32.mrf.mxu0
      %v2987 = vadd.f32 0.0, %v2986
      %v2988 = vpop.f32.mrf.mxu0
      %2989 = vmatprep.mubr.bf16.mxu0 0
      %2990 = vmatmul.mubr.bf16.gmra.mxu0 %v2161
      %v2991 = vpop.f32.mrf.mxu0
      %v2992 = vadd.f32 0.0, %v2991
      %v2993 = vpop.f32.mrf.mxu0
      %v2994 = vpop.f32.mrf.mxu0
      %v2995 = vadd.f32 0.0, %v2994
      %v2996 = vpop.f32.mrf.mxu0
      %2997 = vmatprep.mubr.bf16.mxu0 0
      %2998 = vmatmul.mubr.bf16.gmra.mxu0 %v2843
      %v2999 = vpop.f32.mrf.mxu0
      %v3000 = vadd.f32 0.0, %v2999
      %v3001 = vpop.f32.mrf.mxu0
      %v3002 = vpop.f32.mrf.mxu0
      %v3003 = vadd.f32 0.0, %v3002
      %v3004 = vpop.f32.mrf.mxu0
      %3005 = vdwg.mxu0
      %v3006 = vadd.f32 %v2782, %v2880
      %v3007 = vadd.f32 %v2783, %v2883
      %v3008 = vadd.f32 %v2784, %v2888
      %v3009 = vadd.f32 %v2785, %v2891
      %v3010 = vadd.f32 %v2786, %v2896
      %v3011 = vadd.f32 %v2787, %v2899
      %v3012 = vadd.f32 %v2788, %v2904
      %v3013 = vadd.f32 %v2789, %v2907
      %v3014 = vadd.f32 %v2790, %v2912
      %v3015 = vadd.f32 %v2791, %v2915
      %v3016 = vadd.f32 %v2792, %v2920
      %v3017 = vadd.f32 %v2793, %v2923
      %v3018 = vadd.f32 %v2794, %v2928
      %v3019 = vadd.f32 %v2795, %v2931
      %v3020 = vadd.f32 %v2796, %v2936
      %v3021 = vadd.f32 %v2797, %v2939
      %v3022 = vadd.f32 %v2798, %v2944
      %v3023 = vadd.f32 %v2799, %v2947
      %v3024 = vadd.f32 %v2800, %v2952
      %v3025 = vadd.f32 %v2801, %v2955
      %v3026 = vadd.f32 %v2802, %v2960
      %v3027 = vadd.f32 %v2803, %v2963
      %v3028 = vadd.f32 %v2804, %v2968
      %v3029 = vadd.f32 %v2805, %v2971
      %v3030 = vadd.f32 %v2806, %v2976
      %v3031 = vadd.f32 %v2807, %v2979
      %v3032 = vadd.f32 %v2808, %v2984
      %v3033 = vadd.f32 %v2809, %v2987
      %v3034 = vadd.f32 %v2810, %v2992
      %v3035 = vadd.f32 %v2811, %v2995
      %v3036 = vadd.f32 %v2812, %v3000
      %v3037 = vadd.f32 %v2813, %v3003
      %v3038 = vpack.c.bf16 %v3007, %v3006
      %v3039 = vpack.c.bf16 %v3009, %v3008
      %v3040 = vpack.c.bf16 %v3011, %v3010
      %v3041 = vpack.c.bf16 %v3013, %v3012
      %v3042 = vpack.c.bf16 %v3015, %v3014
      %v3043 = vpack.c.bf16 %v3017, %v3016
      %v3044 = vpack.c.bf16 %v3019, %v3018
      %v3045 = vpack.c.bf16 %v3021, %v3020
      %v3046 = vpack.c.bf16 %v3023, %v3022
      %v3047 = vpack.c.bf16 %v3025, %v3024
      %v3048 = vpack.c.bf16 %v3027, %v3026
      %v3049 = vpack.c.bf16 %v3029, %v3028
      %v3050 = vpack.c.bf16 %v3031, %v3030
      %v3051 = vpack.c.bf16 %v3033, %v3032
      %v3052 = vpack.c.bf16 %v3035, %v3034
      %v3053 = vpack.c.bf16 %v3037, %v3036
      %v3070 = vunpack.c.l.b16 %v3038
      %v3071 = vunpack.c.h.b16 %v3038
      %v3072 = vunpack.c.l.b16 %v3039
      %v3073 = vunpack.c.h.b16 %v3039
      %v3074 = vunpack.c.l.b16 %v3040
      %v3075 = vunpack.c.h.b16 %v3040
      %v3076 = vunpack.c.l.b16 %v3041
      %v3077 = vunpack.c.h.b16 %v3041
      %v3078 = vunpack.c.l.b16 %v3042
      %v3079 = vunpack.c.h.b16 %v3042
      %v3080 = vunpack.c.l.b16 %v3043
      %v3081 = vunpack.c.h.b16 %v3043
      %v3082 = vunpack.c.l.b16 %v3044
      %v3083 = vunpack.c.h.b16 %v3044
      %v3084 = vunpack.c.l.b16 %v3045
      %v3085 = vunpack.c.h.b16 %v3045
      %v3086 = vunpack.c.l.b16 %v3046
      %v3087 = vunpack.c.h.b16 %v3046
      %v3088 = vunpack.c.l.b16 %v3047
      %v3089 = vunpack.c.h.b16 %v3047
      %v3090 = vunpack.c.l.b16 %v3048
      %v3091 = vunpack.c.h.b16 %v3048
      %v3092 = vunpack.c.l.b16 %v3049
      %v3093 = vunpack.c.h.b16 %v3049
      %v3094 = vunpack.c.l.b16 %v3050
      %v3095 = vunpack.c.h.b16 %v3050
      %v3096 = vunpack.c.l.b16 %v3051
      %v3097 = vunpack.c.h.b16 %v3051
      %v3098 = vunpack.c.l.b16 %v3052
      %v3099 = vunpack.c.h.b16 %v3052
      %v3100 = vunpack.c.l.b16 %v3053
      %v3101 = vunpack.c.h.b16 %v3053
      %v3102 = vpack.c.b16 %v3070, %v3070
      %v3103 = vpack.c.b16 %v3071, %v3071
      %v3104 = vpack.c.b16 %v3072, %v3072
      %v3105 = vpack.c.b16 %v3073, %v3073
      %v3106 = vpack.c.b16 %v3074, %v3074
      %v3107 = vpack.c.b16 %v3075, %v3075
      %v3108 = vpack.c.b16 %v3076, %v3076
      %v3109 = vpack.c.b16 %v3077, %v3077
      %v3110 = vpack.c.b16 %v3078, %v3078
      %v3111 = vpack.c.b16 %v3079, %v3079
      %v3112 = vpack.c.b16 %v3080, %v3080
      %v3113 = vpack.c.b16 %v3081, %v3081
      %v3114 = vpack.c.b16 %v3082, %v3082
      %v3115 = vpack.c.b16 %v3083, %v3083
      %v3116 = vpack.c.b16 %v3084, %v3084
      %v3117 = vpack.c.b16 %v3085, %v3085
      %v3118 = vpack.c.b16 %v3086, %v3086
      %v3119 = vpack.c.b16 %v3087, %v3087
      %v3120 = vpack.c.b16 %v3088, %v3088
      %v3121 = vpack.c.b16 %v3089, %v3089
      %v3122 = vpack.c.b16 %v3090, %v3090
      %v3123 = vpack.c.b16 %v3091, %v3091
      %v3124 = vpack.c.b16 %v3092, %v3092
      %v3125 = vpack.c.b16 %v3093, %v3093
      %v3126 = vpack.c.b16 %v3094, %v3094
      %v3127 = vpack.c.b16 %v3095, %v3095
      %v3128 = vpack.c.b16 %v3096, %v3096
      %v3129 = vpack.c.b16 %v3097, %v3097
      %v3130 = vpack.c.b16 %v3098, %v3098
      %v3131 = vpack.c.b16 %v3099, %v3099
      %v3132 = vpack.c.b16 %v3100, %v3100
      %v3133 = vpack.c.b16 %v3101, %v3101
      %vm3166 = vcmask 257024
      %3167 = vst.msk [vmem:[%s208] sm:$0xf] %vm3166, %v3102
      %3168 = vst.msk [vmem:[%s208 + $0x4] sm:$0xf] %vm3166, %v3103
      %3169 = vst.msk [vmem:[%s208 + $0x8] sm:$0xf] %vm3166, %v3104
      %3170 = vst.msk [vmem:[%s208 + $0xc] sm:$0xf] %vm3166, %v3105
      %3171 = vst.msk [vmem:[%s208 + $0x10] sm:$0xf] %vm3166, %v3106
      %3172 = vst.msk [vmem:[%s208 + $0x14] sm:$0xf] %vm3166, %v3107
      %3173 = vst.msk [vmem:[%s208 + $0x18] sm:$0xf] %vm3166, %v3108
      %3174 = vst.msk [vmem:[%s208 + $0x1c] sm:$0xf] %vm3166, %v3109
      %3175 = vst.msk [vmem:[%s208 + $0x20] sm:$0xf] %vm3166, %v3110
      %3176 = vst.msk [vmem:[%s208 + $0x24] sm:$0xf] %vm3166, %v3111
      %3177 = vst.msk [vmem:[%s208 + $0x28] sm:$0xf] %vm3166, %v3112
      %3178 = vst.msk [vmem:[%s208 + $0x2c] sm:$0xf] %vm3166, %v3113
      %3179 = vst.msk [vmem:[%s208 + $0x30] sm:$0xf] %vm3166, %v3114
      %3180 = vst.msk [vmem:[%s208 + $0x34] sm:$0xf] %vm3166, %v3115
      %3181 = vst.msk [vmem:[%s208 + $0x38] sm:$0xf] %vm3166, %v3116
      %3182 = vst.msk [vmem:[%s208 + $0x3c] sm:$0xf] %vm3166, %v3117
      %3183 = vst.msk [vmem:[%s208 + $0x40] sm:$0xf] %vm3166, %v3118
      %3184 = vst.msk [vmem:[%s208 + $0x44] sm:$0xf] %vm3166, %v3119
      %3185 = vst.msk [vmem:[%s208 + $0x48] sm:$0xf] %vm3166, %v3120
      %3186 = vst.msk [vmem:[%s208 + $0x4c] sm:$0xf] %vm3166, %v3121
      %3187 = vst.msk [vmem:[%s208 + $0x50] sm:$0xf] %vm3166, %v3122
      %3188 = vst.msk [vmem:[%s208 + $0x54] sm:$0xf] %vm3166, %v3123
      %3189 = vst.msk [vmem:[%s208 + $0x58] sm:$0xf] %vm3166, %v3124
      %3190 = vst.msk [vmem:[%s208 + $0x5c] sm:$0xf] %vm3166, %v3125
      %3191 = vst.msk [vmem:[%s208 + $0x60] sm:$0xf] %vm3166, %v3126
      %3192 = vst.msk [vmem:[%s208 + $0x64] sm:$0xf] %vm3166, %v3127
      %3193 = vst.msk [vmem:[%s208 + $0x68] sm:$0xf] %vm3166, %v3128
      %3194 = vst.msk [vmem:[%s208 + $0x6c] sm:$0xf] %vm3166, %v3129
      %3195 = vst.msk [vmem:[%s208 + $0x70] sm:$0xf] %vm3166, %v3130
      %3196 = vst.msk [vmem:[%s208 + $0x74] sm:$0xf] %vm3166, %v3131
      %3197 = vst.msk [vmem:[%s208 + $0x78] sm:$0xf] %vm3166, %v3132
      %3198 = vst.msk [vmem:[%s208 + $0x7c] sm:$0xf] %vm3166, %v3133
      %v3199 = vsel %vm726, %v3006, 0.0
      %v3200 = vsel %vm726, %v3007, 0.0
      %v3201 = vadd.f32 %v3199, %v3200
      %v3202 = vsel %vm726, %v3008, 0.0
      %v3203 = vadd.f32 %v3201, %v3202
      %v3204 = vsel %vm726, %v3009, 0.0
      %v3205 = vadd.f32 %v3203, %v3204
      %v3206 = vsel %vm726, %v3010, 0.0
      %v3207 = vadd.f32 %v3205, %v3206
      %v3208 = vsel %vm726, %v3011, 0.0
      %v3209 = vadd.f32 %v3207, %v3208
      %v3210 = vsel %vm726, %v3012, 0.0
      %v3211 = vadd.f32 %v3209, %v3210
      %v3212 = vsel %vm726, %v3013, 0.0
      %v3213 = vadd.f32 %v3211, %v3212
      %v3214 = vsel %vm726, %v3014, 0.0
      %v3215 = vadd.f32 %v3213, %v3214
      %v3216 = vsel %vm726, %v3015, 0.0
      %v3217 = vadd.f32 %v3215, %v3216
      %v3218 = vsel %vm726, %v3016, 0.0
      %v3219 = vadd.f32 %v3217, %v3218
      %v3220 = vsel %vm726, %v3017, 0.0
      %v3221 = vadd.f32 %v3219, %v3220
      %v3222 = vsel %vm726, %v3018, 0.0
      %v3223 = vadd.f32 %v3221, %v3222
      %v3224 = vsel %vm726, %v3019, 0.0
      %v3225 = vadd.f32 %v3223, %v3224
      %v3226 = vsel %vm726, %v3020, 0.0
      %v3227 = vadd.f32 %v3225, %v3226
      %v3228 = vsel %vm726, %v3021, 0.0
      %v3229 = vadd.f32 %v3227, %v3228
      %v3230 = vsel %vm726, %v3022, 0.0
      %v3231 = vadd.f32 %v3229, %v3230
      %v3232 = vsel %vm726, %v3023, 0.0
      %v3233 = vadd.f32 %v3231, %v3232
      %v3234 = vsel %vm726, %v3024, 0.0
      %v3235 = vadd.f32 %v3233, %v3234
      %v3236 = vsel %vm726, %v3025, 0.0
      %v3237 = vadd.f32 %v3235, %v3236
      %v3238 = vsel %vm726, %v3026, 0.0
      %v3239 = vadd.f32 %v3237, %v3238
      %v3240 = vsel %vm726, %v3027, 0.0
      %v3241 = vadd.f32 %v3239, %v3240
      %v3242 = vsel %vm726, %v3028, 0.0
      %v3243 = vadd.f32 %v3241, %v3242
      %v3244 = vsel %vm726, %v3029, 0.0
      %v3245 = vadd.f32 %v3243, %v3244
      %v3246 = vsel %vm726, %v3030, 0.0
      %v3247 = vadd.f32 %v3245, %v3246
      %v3248 = vsel %vm726, %v3031, 0.0
      %v3249 = vadd.f32 %v3247, %v3248
      %v3250 = vsel %vm726, %v3032, 0.0
      %v3251 = vadd.f32 %v3249, %v3250
      %v3252 = vsel %vm726, %v3033, 0.0
      %v3253 = vadd.f32 %v3251, %v3252
      %v3254 = vsel %vm726, %v3034, 0.0
      %v3255 = vadd.f32 %v3253, %v3254
      %v3256 = vsel %vm726, %v3035, 0.0
      %v3257 = vadd.f32 %v3255, %v3256
      %v3258 = vsel %vm726, %v3036, 0.0
      %v3259 = vadd.f32 %v3257, %v3258
      %v3260 = vsel %vm726, %v3037, 0.0
      %v3261 = vadd.f32 %v3259, %v3260
      %v3262 = vrot.slane %v3261, 4
      %v3263 = vadd.f32 %v3261, %v3262
      %v3264 = vrot.slane %v3263, 2
      %v3265 = vadd.f32 %v3263, %v3264
      %v3266 = vrot.slane %v3265, 1
      %v3267 = vadd.f32 %v3265, %v3266
      %vm3268 = vcmask 253952
      %3269 = vst.msk [vmem:[%s211] sm:$0x1] %vm3268, %v3267
      %v3270 = vmul.f32 %v3006, %v3006
      %v3271 = vmul.f32 %v3007, %v3007
      %v3272 = vmul.f32 %v3008, %v3008
      %v3273 = vmul.f32 %v3009, %v3009
      %v3274 = vmul.f32 %v3010, %v3010
      %v3275 = vmul.f32 %v3011, %v3011
      %v3276 = vmul.f32 %v3012, %v3012
      %v3277 = vmul.f32 %v3013, %v3013
      %v3278 = vmul.f32 %v3014, %v3014
      %v3279 = vmul.f32 %v3015, %v3015
      %v3280 = vmul.f32 %v3016, %v3016
      %v3281 = vmul.f32 %v3017, %v3017
      %v3282 = vmul.f32 %v3018, %v3018
      %v3283 = vmul.f32 %v3019, %v3019
      %v3284 = vmul.f32 %v3020, %v3020
      %v3285 = vmul.f32 %v3021, %v3021
      %v3286 = vmul.f32 %v3022, %v3022
      %v3287 = vmul.f32 %v3023, %v3023
      %v3288 = vmul.f32 %v3024, %v3024
      %v3289 = vmul.f32 %v3025, %v3025
      %v3290 = vmul.f32 %v3026, %v3026
      %v3291 = vmul.f32 %v3027, %v3027
      %v3292 = vmul.f32 %v3028, %v3028
      %v3293 = vmul.f32 %v3029, %v3029
      %v3294 = vmul.f32 %v3030, %v3030
      %v3295 = vmul.f32 %v3031, %v3031
      %v3296 = vmul.f32 %v3032, %v3032
      %v3297 = vmul.f32 %v3033, %v3033
      %v3298 = vmul.f32 %v3034, %v3034
      %v3299 = vmul.f32 %v3035, %v3035
      %v3300 = vmul.f32 %v3036, %v3036
      %v3301 = vmul.f32 %v3037, %v3037
      %v3302 = vsel %vm726, %v3270, 0.0
      %v3303 = vsel %vm726, %v3271, 0.0
      %v3304 = vadd.f32 %v3302, %v3303
      %v3305 = vsel %vm726, %v3272, 0.0
      %v3306 = vadd.f32 %v3304, %v3305
      %v3307 = vsel %vm726, %v3273, 0.0
      %v3308 = vadd.f32 %v3306, %v3307
      %v3309 = vsel %vm726, %v3274, 0.0
      %v3310 = vadd.f32 %v3308, %v3309
      %v3311 = vsel %vm726, %v3275, 0.0
      %v3312 = vadd.f32 %v3310, %v3311
      %v3313 = vsel %vm726, %v3276, 0.0
      %v3314 = vadd.f32 %v3312, %v3313
      %v3315 = vsel %vm726, %v3277, 0.0
      %v3316 = vadd.f32 %v3314, %v3315
      %v3317 = vsel %vm726, %v3278, 0.0
      %v3318 = vadd.f32 %v3316, %v3317
      %v3319 = vsel %vm726, %v3279, 0.0
      %v3320 = vadd.f32 %v3318, %v3319
      %v3321 = vsel %vm726, %v3280, 0.0
      %v3322 = vadd.f32 %v3320, %v3321
      %v3323 = vsel %vm726, %v3281, 0.0
      %v3324 = vadd.f32 %v3322, %v3323
      %v3325 = vsel %vm726, %v3282, 0.0
      %v3326 = vadd.f32 %v3324, %v3325
      %v3327 = vsel %vm726, %v3283, 0.0
      %v3328 = vadd.f32 %v3326, %v3327
      %v3329 = vsel %vm726, %v3284, 0.0
      %v3330 = vadd.f32 %v3328, %v3329
      %v3331 = vsel %vm726, %v3285, 0.0
      %v3332 = vadd.f32 %v3330, %v3331
      %v3333 = vsel %vm726, %v3286, 0.0
      %v3334 = vadd.f32 %v3332, %v3333
      %v3335 = vsel %vm726, %v3287, 0.0
      %v3336 = vadd.f32 %v3334, %v3335
      %v3337 = vsel %vm726, %v3288, 0.0
      %v3338 = vadd.f32 %v3336, %v3337
      %v3339 = vsel %vm726, %v3289, 0.0
      %v3340 = vadd.f32 %v3338, %v3339
      %v3341 = vsel %vm726, %v3290, 0.0
      %v3342 = vadd.f32 %v3340, %v3341
      %v3343 = vsel %vm726, %v3291, 0.0
      %v3344 = vadd.f32 %v3342, %v3343
      %v3345 = vsel %vm726, %v3292, 0.0
      %v3346 = vadd.f32 %v3344, %v3345
      %v3347 = vsel %vm726, %v3293, 0.0
      %v3348 = vadd.f32 %v3346, %v3347
      %v3349 = vsel %vm726, %v3294, 0.0
      %v3350 = vadd.f32 %v3348, %v3349
      %v3351 = vsel %vm726, %v3295, 0.0
      %v3352 = vadd.f32 %v3350, %v3351
      %v3353 = vsel %vm726, %v3296, 0.0
      %v3354 = vadd.f32 %v3352, %v3353
      %v3355 = vsel %vm726, %v3297, 0.0
      %v3356 = vadd.f32 %v3354, %v3355
      %v3357 = vsel %vm726, %v3298, 0.0
      %v3358 = vadd.f32 %v3356, %v3357
      %v3359 = vsel %vm726, %v3299, 0.0
      %v3360 = vadd.f32 %v3358, %v3359
      %v3361 = vsel %vm726, %v3300, 0.0
      %v3362 = vadd.f32 %v3360, %v3361
      %v3363 = vsel %vm726, %v3301, 0.0
      %v3364 = vadd.f32 %v3362, %v3363
      %v3365 = vrot.slane %v3364, 4
      %v3366 = vadd.f32 %v3364, %v3365
      %v3367 = vrot.slane %v3366, 2
      %v3368 = vadd.f32 %v3366, %v3367
      %v3369 = vrot.slane %v3368, 1
      %v3370 = vadd.f32 %v3368, %v3369
      %3371 = vst.msk [vmem:[%s214] sm:$0x1] %vm3268, %v3370
      %p3372 = scmp.lt.s32.totalorder %s16, 1
      %s3373 = scalar_select %p3372, %s16, 1
      %s3374 = smul.addr %s3373, 32
      %s3375 = smul.addr %s3374, 4
      %s3376 = scalar_lea.vmem %s2, %s3375
      %p3377 = scmp.lt.s32.totalorder %s16, 1
      %s3378 = scalar_select %p3377, %s16, 1
      %s3379 = scalar_lea.vmem %s3, %s3378
      %p3380 = scmp.lt.s32.totalorder %s16, 1
      %s3381 = scalar_select %p3380, %s16, 1
      %s3382 = scalar_lea.vmem %s4, %s3381
      // Predicated region
      $region29: #{bottleneck_se.5} parent=27 // pred_check
        %p3383 = pneg %p81
      $region30: #{bottleneck_se.5} parent=27 // pred_check_branch
        %3385 = sbr.rel (%p3383) target = $region32
      $region31: #{bottleneck_se.5} parent=27 // pred_region
        _
      $region32: #{bottleneck_se.5} parent=27 // pred_fallthru
        _
      // Predicated region
      $region33: #{bottleneck_se.5} parent=27 // pred_check
        %p3386 = pneg %p107
      $region34: #{bottleneck_se.5} parent=27 // pred_check_branch
        %3388 = sbr.rel (%p3386) target = $region36
      $region35: #{bottleneck_se.5} parent=27 // pred_region
        _
      $region36: #{bottleneck_se.5} parent=27 // pred_fallthru
        _
      // Predicated region
      $region37: #{bottleneck_se.5} parent=27 // pred_check
        %p3389 = pneg %p133
      $region38: #{bottleneck_se.5} parent=27 // pred_check_branch
        %3391 = sbr.rel (%p3389) target = $region40
      $region39: #{bottleneck_se.5} parent=27 // pred_region
        _
      $region40: #{bottleneck_se.5} parent=27 // pred_fallthru
        _
    $region28: #{bottleneck_se.5} parent=5 // pred_fallthru
      _
    %p3392 = scmp.le.s32.totalorder 2, %s11
    // Predicated region
    $region41: #{bottleneck_se.5} parent=5 // pred_check
      %p3393 = pneg %p3392
    $region42: #{bottleneck_se.5} parent=5 // pred_check_branch
      %3395 = sbr.rel (%p3393) target = $region44
    $region43: #{bottleneck_se.5} parent=5 // pred_region
      %s3396 = ssub.s32 %s11, 2
      // Predicated region
      $region45: #{bottleneck_se.5} parent=43 // pred_check
        %p3397 = pneg %p87
      $region46: #{bottleneck_se.5} parent=43 // pred_check_branch
        %3399 = sbr.rel (%p3397) target = $region48
      $region47: #{bottleneck_se.5} parent=43 // pred_region
        %p3400 = scmp.lt.s32.totalorder %s17, 1
        %s3401 = scalar_select %p3400, %s17, 1
        %s3402 = smul.addr %s3401, 32
        %s3403 = smul.addr %s3402, 4
        %s3404 = scalar_lea.vmem %s2, %s3403
      $region48: #{bottleneck_se.5} parent=43 // pred_fallthru
        _
      // Predicated region
      $region49: #{bottleneck_se.5} parent=43 // pred_check
        %p3405 = pneg %p113
      $region50: #{bottleneck_se.5} parent=43 // pred_check_branch
        %3407 = sbr.rel (%p3405) target = $region52
      $region51: #{bottleneck_se.5} parent=43 // pred_region
        %p3408 = scmp.lt.s32.totalorder %s17, 1
        %s3409 = scalar_select %p3408, %s17, 1
        %s3410 = scalar_lea.vmem %s3, %s3409
      $region52: #{bottleneck_se.5} parent=43 // pred_fallthru
        _
      // Predicated region
      $region53: #{bottleneck_se.5} parent=43 // pred_check
        %p3411 = pneg %p139
      $region54: #{bottleneck_se.5} parent=43 // pred_check_branch
        %3413 = sbr.rel (%p3411) target = $region56
      $region55: #{bottleneck_se.5} parent=43 // pred_region
        %p3414 = scmp.lt.s32.totalorder %s17, 1
        %s3415 = scalar_select %p3414, %s17, 1
        %s3416 = scalar_lea.vmem %s4, %s3415
      $region56: #{bottleneck_se.5} parent=43 // pred_fallthru
        _
    $region44: #{bottleneck_se.5} parent=5 // pred_fallthru
      _
  $region6: #{bottleneck_se.5} parent=0 // loop_footer
    %s15 = sadd.s32 1, %s11
  $region7: #{bottleneck_se.5} parent=0 // loop_footer_branch
    %10 = sbr.rel target = $region3
  $region8: #{bottleneck_se.5} parent=0 // loop_exit
    _

</llo_original>
